<compile_context>
chip_gen: v6e
topology: v6e:2x2x1
jax: 0.10.0
libtpu: 0.0.40
codegen_flags: <defaults>
</compile_context>

<pallas_src>
import functools

import jax
import jax.numpy as jnp
from jax import lax
from jax.experimental import pallas as pl
from jax.experimental.pallas import tpu as pltpu

LRELU_SLOPE = 0.2
BN_EPS = 1e-5
MXU_DTYPE = jnp.bfloat16            # matmul input dtype; accumulation is f32
VMEM_LIMIT = 32 * 1024 * 1024       # safe on v5e/v6e (128 MiB) and v7x (64 MiB)


# ----------------------------- fused Pallas kernel -----------------------------

def _disc_face_kernel(x_ref,
                      sel1_ref, rhs1_ref,
                      sel2_ref, rhs2_ref, q2_ref,
                      sel3_ref, rhs3_ref, q3_ref,
                      sel4_ref, rhs4_ref, q4_ref,
                      w5_ref, s5_ref,
                      o_ref, *, inv_m2, inv_m3, inv_m4):
    """Whole Discriminator_face forward, VMEM-resident.

    Activations are 2-D (N*H, W*C).  Each stride-2 conv is
    sum_kh SelH_kh @ X @ RightW_kh; BN stats use a row-sum plus a 0/1 channel
    fold matmul; layer 5 + sigmoid are a multiply/reduce epilogue.
    """

    def conv(x_bf16, sel_ref, rhs_ref):
        acc = None
        for kh in range(4):                               # static unrolled loop
            # Row selection (0/1 matrix) — exact, just re-reads bf16 values.
            rows = jnp.dot(sel_ref[kh], x_bf16,
                           preferred_element_type=jnp.float32)
            term = jnp.dot(rows.astype(MXU_DTYPE), rhs_ref[kh],
                           preferred_element_type=jnp.float32)
            acc = term if acc is None else acc + term
        return acc                                         # f32 (N*OH, OW*OC)

    def batchnorm(y, q_ref, inv_m):
        # Per-channel train-mode batch stats; channel c lives in every OC-th
        # lane, so fold the row-sums over OW with a 0/1 matmul (stays f32).
        s1 = jnp.sum(y, axis=0, keepdims=True)             # (1, OW*OC)
        s2 = jnp.sum(y * y, axis=0, keepdims=True)
        mean = jnp.dot(s1, q_ref[...], preferred_element_type=jnp.float32) * inv_m
        ex2 = jnp.dot(s2, q_ref[...], preferred_element_type=jnp.float32) * inv_m
        var = jnp.maximum(ex2 - mean * mean, 0.0)          # guard cancellation
        return (y - mean) * lax.rsqrt(var + BN_EPS)        # gamma=1, beta=0

    def lrelu(y):
        return jnp.where(y >= 0, y, LRELU_SLOPE * y)

    x = x_ref[...]                                         # bf16 (N*H0, W0*C0)
    y1 = lrelu(conv(x, sel1_ref, rhs1_ref))
    y2 = lrelu(batchnorm(conv(y1.astype(MXU_DTYPE), sel2_ref, rhs2_ref),
                         q2_ref, inv_m2))
    y3 = lrelu(batchnorm(conv(y2.astype(MXU_DTYPE), sel3_ref, rhs3_ref),
                         q3_ref, inv_m3))
    y4 = lrelu(batchnorm(conv(y3.astype(MXU_DTYPE), sel4_ref, rhs4_ref),
                         q4_ref, inv_m4))                  # f32 (N*4, 4*C4)

    # Layer 5: 4x4 valid conv (one scalar per sample) + Sigmoid.
    prod = y4 * w5_ref[...]                                # (N*4, 4*C4) f32
    rowsum = jnp.sum(prod, axis=1, keepdims=True)          # (N*4, 1)
    logits = jnp.dot(s5_ref[...], rowsum,
                     preferred_element_type=jnp.float32)   # (N, 1)
    o_ref[...] = 1.0 / (1.0 + jnp.exp(-logits))


# ----------------------------- weight prepacking -----------------------------

def _sel_h(batch, height, oh, kh, dtype):
    """Block-diagonal 0/1 row selector: padded row 2*oh+kh of each sample."""
    h_idx = jnp.arange(height)
    oh_idx = jnp.arange(oh)
    base = (h_idx[None, :] == (2 * oh_idx[:, None] + kh - 1)).astype(dtype)
    return jnp.kron(jnp.eye(batch, dtype=dtype), base)      # (N*OH, N*H)


def _rhs_w(w_hwio, width, ow, kh, dtype):
    """(W*C, OW*OC) matrix folding W-stride, zero padding and conv weights."""
    _, kw_sz, c, oc = w_hwio.shape
    w_idx = jnp.arange(width)
    ow_idx = jnp.arange(ow)
    kw_eff = w_idx[:, None] - 2 * ow_idx[None, :] + 1        # (W, OW)
    valid = ((kw_eff >= 0) & (kw_eff < kw_sz)).astype(w_hwio.dtype)
    kw_c = jnp.clip(kw_eff, 0, kw_sz - 1)
    blk = w_hwio[kh][kw_c] * valid[..., None, None]          # (W, OW, C, OC)
    return jnp.transpose(blk, (0, 2, 1, 3)).reshape(width * c, ow * oc).astype(dtype)


def _chan_fold(ow, oc):
    """(OW*OC, OW*OC) 0/1 matrix: 1 where columns share the same channel."""
    ch = jnp.tile(jnp.arange(oc), ow)
    return (ch[:, None] == ch[None, :]).astype(jnp.float32)


def pack_params(weights, *, batch, height, width):
    """Prepack all per-layer matrices once (outside the per-forward path)."""
    assert height % 16 == 0 and width % 16 == 0
    assert height // 16 == weights[4].shape[0] and width // 16 == weights[4].shape[1]
    pack = {"sel": [], "rhs": [], "q": []}
    h, w = height, width
    for layer in range(4):
        wl = weights[layer]                                  # (4, 4, Cin, Cout)
        oh, ow = h // 2, w // 2
        oc = wl.shape[3]
        pack["sel"].append(jnp.stack(
            [_sel_h(batch, h, oh, kh, MXU_DTYPE) for kh in range(4)]))
        pack["rhs"].append(jnp.stack(
            [_rhs_w(wl, w, ow, kh, MXU_DTYPE) for kh in range(4)]))
        if layer >= 1:                                       # BN on layers 2-4
            pack["q"].append(_chan_fold(ow, oc))
        h, w = oh, ow
    w5 = weights[4]                                          # (4, 4, C4, 1)
    kh5, kw5, c4, _ = w5.shape
    w5t = w5[..., 0].reshape(kh5, kw5 * c4).astype(jnp.float32)
    pack["w5"] = jnp.tile(w5t, (batch, 1))                   # (N*4, 4*C4)
    pack["s5"] = jnp.kron(jnp.eye(batch, dtype=jnp.float32),
                          jnp.ones((1, kh5), jnp.float32))   # (N, N*4)
    return pack


def init_params(key, nc=3, ndf=8):
    """Deterministic synthetic weights; layer l: (4, 4, C_in, C_out), no bias."""
    chans = [nc, ndf, ndf * 2, ndf * 4, ndf * 8, 1]
    weights = []
    for i in range(5):
        key, sub = jax.random.split(key)
        weights.append((0.02 * jax.random.normal(
            sub, (4, 4, chans[i], chans[i + 1]))).astype(jnp.float32))
    return weights


# ----------------------------- forward (one pallas_call) -----------------------------

def _full_spec(arr):
    nd = arr.ndim
    return pl.BlockSpec(arr.shape, lambda i, nd=nd: (0,) * nd)


def discriminator_face_forward(x_nchw, pack):
    """Forward of Discriminator_face. NCHW in, (N, 1, 1, 1) out."""
    n, c, h, w = x_nchw.shape
    # Only XLA glue: NCHW -> (N*H, W*C) layout + bf16 cast of the input.
    x2d = jnp.transpose(x_nchw, (0, 2, 3, 1)).reshape(n * h, w * c).astype(MXU_DTYPE)

    inv_m2 = 1.0 / (n * (h // 4) * (w // 4))
    inv_m3 = 1.0 / (n * (h // 8) * (w // 8))
    inv_m4 = 1.0 / (n * (h // 16) * (w // 16))

    args = (x2d,
            pack["sel"][0], pack["rhs"][0],
            pack["sel"][1], pack["rhs"][1], pack["q"][0],
            pack["sel"][2], pack["rhs"][2], pack["q"][1],
            pack["sel"][3], pack["rhs"][3], pack["q"][2],
            pack["w5"], pack["s5"])

    kernel = functools.partial(_disc_face_kernel,
                               inv_m2=inv_m2, inv_m3=inv_m3, inv_m4=inv_m4)

    out = pl.pallas_call(
        kernel,
        out_shape=jax.ShapeDtypeStruct((n, 1), jnp.float32),
        grid_spec=pltpu.PrefetchScalarGridSpec(
            num_scalar_prefetch=0,
            grid=(1,),
            in_specs=[_full_spec(a) for a in args],
            out_specs=pl.BlockSpec((n, 1), lambda i: (0, 0))),
        compiler_params=pltpu.CompilerParams(
            dimension_semantics=("arbitrary",),
            vmem_limit_bytes=VMEM_LIMIT),
    )(*args)
    return out.reshape(n, 1, 1, 1)


# ----------------------------- pure-XLA reference -----------------------------

def reference_forward(x_nchw, weights):
    """Pure-JAX (XLA conv) reference of the same module, for validation."""
    x = jnp.transpose(x_nchw, (0, 2, 3, 1)).astype(jnp.float32)
    cfgs = [(2, 1, False), (2, 1, True), (2, 1, True), (2, 1, True), (1, 0, False)]
    for idx, (wmat, (stride, pad, bn)) in enumerate(zip(weights, cfgs)):
        y = lax.conv_general_dilated(
            x, wmat, (stride, stride), [(pad, pad), (pad, pad)],
            dimension_numbers=("NHWC", "HWIO", "NHWC"))
        if idx < 4:
            if bn:
                mean = jnp.mean(y, axis=(0, 1, 2), keepdims=True)
                var = jnp.mean(jnp.square(y - mean), axis=(0, 1, 2), keepdims=True)
                y = (y - mean) * lax.rsqrt(var + BN_EPS)
            y = jnp.where(y >= 0, y, LRELU_SLOPE * y)
        else:
            y = jax.nn.sigmoid(y)
        x = y
    return jnp.transpose(x, (0, 3, 1, 2))


if __name__ == "__main__":
    key = jax.random.PRNGKey(0)
    k_x, k_w = jax.random.split(key)
    # Input must be 64x64 for the final 4x4 stride-1 valid conv to yield 1x1.
    x = jax.random.normal(k_x, (2, 3, 64, 64), dtype=jnp.float32)
    weights = init_params(k_w, nc=3, ndf=8)
    pack = pack_params(weights, batch=2, height=64, width=64)   # one-time prepack

    fwd = jax.jit(discriminator_face_forward)
    out = jax.block_until_ready(fwd(x, pack))
    assert out.shape == (2, 1, 1, 1)
    assert bool(jnp.all(jnp.isfinite(out)))
    assert bool(jnp.all((out >= 0.0) & (out <= 1.0)))   # sigmoid output range

    # bf16 MXU inputs (f32 accumulation) => loose tolerance vs. f32 XLA reference.
    ref = jax.block_until_ready(jax.jit(reference_forward)(x, weights))
    assert bool(jnp.allclose(out, ref, rtol=5e-2, atol=5e-2)), (out, ref)
    print("KERNEL_OK")
</pallas_src>

<mosaic_0001>
module attributes {stable_mosaic.version = 11 : i64} {
  func.func @_disc_face_kernel(%arg0: i32, %arg1: memref<128x192xbf16, #tpu.memory_space<vmem>>, %arg2: memref<4x64x128xbf16, #tpu.memory_space<vmem>>, %arg3: memref<4x192x256xbf16, #tpu.memory_space<vmem>>, %arg4: memref<4x32x64xbf16, #tpu.memory_space<vmem>>, %arg5: memref<4x256x256xbf16, #tpu.memory_space<vmem>>, %arg6: memref<256x256xf32, #tpu.memory_space<vmem>>, %arg7: memref<4x16x32xbf16, #tpu.memory_space<vmem>>, %arg8: memref<4x256x256xbf16, #tpu.memory_space<vmem>>, %arg9: memref<256x256xf32, #tpu.memory_space<vmem>>, %arg10: memref<4x8x16xbf16, #tpu.memory_space<vmem>>, %arg11: memref<4x256x256xbf16, #tpu.memory_space<vmem>>, %arg12: memref<256x256xf32, #tpu.memory_space<vmem>>, %arg13: memref<8x256xf32, #tpu.memory_space<vmem>>, %arg14: memref<2x8xf32, #tpu.memory_space<vmem>>, %arg15: memref<2x1xf32, #tpu.memory_space<vmem>>) attributes {dimension_semantics = [#tpu.dimension_semantics<arbitrary>], iteration_bounds = array<i64: 1>, scalar_prefetch = 0 : i64, scratch_operands = 0 : i64, tpu.core_type = #tpu.core_type<tc>, window_params = [{pipeline_mode = #tpu.pipeline_mode<synchronous>, transform_indices = @transform_0, window_bounds = array<i64: 128, 192>}, {pipeline_mode = #tpu.pipeline_mode<synchronous>, transform_indices = @transform_1, window_bounds = array<i64: 4, 64, 128>}, {pipeline_mode = #tpu.pipeline_mode<synchronous>, transform_indices = @transform_2, window_bounds = array<i64: 4, 192, 256>}, {pipeline_mode = #tpu.pipeline_mode<synchronous>, transform_indices = @transform_3, window_bounds = array<i64: 4, 32, 64>}, {pipeline_mode = #tpu.pipeline_mode<synchronous>, transform_indices = @transform_4, window_bounds = array<i64: 4, 256, 256>}, {pipeline_mode = #tpu.pipeline_mode<synchronous>, transform_indices = @transform_5, window_bounds = array<i64: 256, 256>}, {pipeline_mode = #tpu.pipeline_mode<synchronous>, transform_indices = @transform_6, window_bounds = array<i64: 4, 16, 32>}, {pipeline_mode = #tpu.pipeline_mode<synchronous>, transform_indices = @transform_7, window_bounds = array<i64: 4, 256, 256>}, {pipeline_mode = #tpu.pipeline_mode<synchronous>, transform_indices = @transform_8, window_bounds = array<i64: 256, 256>}, {pipeline_mode = #tpu.pipeline_mode<synchronous>, transform_indices = @transform_9, window_bounds = array<i64: 4, 8, 16>}, {pipeline_mode = #tpu.pipeline_mode<synchronous>, transform_indices = @transform_10, window_bounds = array<i64: 4, 256, 256>}, {pipeline_mode = #tpu.pipeline_mode<synchronous>, transform_indices = @transform_11, window_bounds = array<i64: 256, 256>}, {pipeline_mode = #tpu.pipeline_mode<synchronous>, transform_indices = @transform_12, window_bounds = array<i64: 8, 256>}, {pipeline_mode = #tpu.pipeline_mode<synchronous>, transform_indices = @transform_13, window_bounds = array<i64: 2, 8>}, {pipeline_mode = #tpu.pipeline_mode<synchronous>, transform_indices = @transform_14, window_bounds = array<i64: 2, 1>}]} {
    %c0 = arith.constant 0 : index
    %c0_0 = arith.constant 0 : index
    %0 = vector.load %arg1[%c0, %c0_0] : memref<128x192xbf16, #tpu.memory_space<vmem>>, vector<128x192xbf16>
    %c0_1 = arith.constant 0 : index
    %c0_2 = arith.constant 0 : index
    %c0_3 = arith.constant 0 : index
    %1 = vector.load %arg2[%c0_1, %c0_2, %c0_3] : memref<4x64x128xbf16, #tpu.memory_space<vmem>>, vector<1x64x128xbf16>
    %2 = vector.shape_cast %1 : vector<1x64x128xbf16> to vector<64x128xbf16>
    %cst = arith.constant dense<0.000000e+00> : vector<64x192xf32>
    %3 = tpu.matmul %2, %0, %cst {dimension_numbers = #tpu.dot_dimension_numbers<[1], [0], [0], [1], [0, 0, 1, 1], [], []>} : vector<64x128xbf16>, vector<128x192xbf16>, vector<64x192xf32> -> vector<64x192xf32>
    %4 = arith.truncf %3 : vector<64x192xf32> to vector<64x192xbf16>
    %c0_4 = arith.constant 0 : index
    %c0_5 = arith.constant 0 : index
    %c0_6 = arith.constant 0 : index
    %5 = vector.load %arg3[%c0_4, %c0_5, %c0_6] : memref<4x192x256xbf16, #tpu.memory_space<vmem>>, vector<1x192x256xbf16>
    %6 = vector.shape_cast %5 : vector<1x192x256xbf16> to vector<192x256xbf16>
    %cst_7 = arith.constant dense<0.000000e+00> : vector<64x256xf32>
    %7 = tpu.matmul %4, %6, %cst_7 {dimension_numbers = #tpu.dot_dimension_numbers<[1], [0], [0], [1], [0, 0, 1, 1], [], []>} : vector<64x192xbf16>, vector<192x256xbf16>, vector<64x256xf32> -> vector<64x256xf32>
    %c1 = arith.constant 1 : index
    %c0_8 = arith.constant 0 : index
    %c0_9 = arith.constant 0 : index
    %8 = vector.load %arg2[%c1, %c0_8, %c0_9] : memref<4x64x128xbf16, #tpu.memory_space<vmem>>, vector<1x64x128xbf16>
    %9 = vector.shape_cast %8 : vector<1x64x128xbf16> to vector<64x128xbf16>
    %cst_10 = arith.constant dense<0.000000e+00> : vector<64x192xf32>
    %10 = tpu.matmul %9, %0, %cst_10 {dimension_numbers = #tpu.dot_dimension_numbers<[1], [0], [0], [1], [0, 0, 1, 1], [], []>} : vector<64x128xbf16>, vector<128x192xbf16>, vector<64x192xf32> -> vector<64x192xf32>
    %11 = arith.truncf %10 : vector<64x192xf32> to vector<64x192xbf16>
    %c1_11 = arith.constant 1 : index
    %c0_12 = arith.constant 0 : index
    %c0_13 = arith.constant 0 : index
    %12 = vector.load %arg3[%c1_11, %c0_12, %c0_13] : memref<4x192x256xbf16, #tpu.memory_space<vmem>>, vector<1x192x256xbf16>
    %13 = vector.shape_cast %12 : vector<1x192x256xbf16> to vector<192x256xbf16>
    %cst_14 = arith.constant dense<0.000000e+00> : vector<64x256xf32>
    %14 = tpu.matmul %11, %13, %cst_14 {dimension_numbers = #tpu.dot_dimension_numbers<[1], [0], [0], [1], [0, 0, 1, 1], [], []>} : vector<64x192xbf16>, vector<192x256xbf16>, vector<64x256xf32> -> vector<64x256xf32>
    %15 = arith.addf %7, %14 : vector<64x256xf32>
    %c2 = arith.constant 2 : index
    %c0_15 = arith.constant 0 : index
    %c0_16 = arith.constant 0 : index
    %16 = vector.load %arg2[%c2, %c0_15, %c0_16] : memref<4x64x128xbf16, #tpu.memory_space<vmem>>, vector<1x64x128xbf16>
    %17 = vector.shape_cast %16 : vector<1x64x128xbf16> to vector<64x128xbf16>
    %cst_17 = arith.constant dense<0.000000e+00> : vector<64x192xf32>
    %18 = tpu.matmul %17, %0, %cst_17 {dimension_numbers = #tpu.dot_dimension_numbers<[1], [0], [0], [1], [0, 0, 1, 1], [], []>} : vector<64x128xbf16>, vector<128x192xbf16>, vector<64x192xf32> -> vector<64x192xf32>
    %19 = arith.truncf %18 : vector<64x192xf32> to vector<64x192xbf16>
    %c2_18 = arith.constant 2 : index
    %c0_19 = arith.constant 0 : index
    %c0_20 = arith.constant 0 : index
    %20 = vector.load %arg3[%c2_18, %c0_19, %c0_20] : memref<4x192x256xbf16, #tpu.memory_space<vmem>>, vector<1x192x256xbf16>
    %21 = vector.shape_cast %20 : vector<1x192x256xbf16> to vector<192x256xbf16>
    %cst_21 = arith.constant dense<0.000000e+00> : vector<64x256xf32>
    %22 = tpu.matmul %19, %21, %cst_21 {dimension_numbers = #tpu.dot_dimension_numbers<[1], [0], [0], [1], [0, 0, 1, 1], [], []>} : vector<64x192xbf16>, vector<192x256xbf16>, vector<64x256xf32> -> vector<64x256xf32>
    %23 = arith.addf %15, %22 : vector<64x256xf32>
    %c3 = arith.constant 3 : index
    %c0_22 = arith.constant 0 : index
    %c0_23 = arith.constant 0 : index
    %24 = vector.load %arg2[%c3, %c0_22, %c0_23] : memref<4x64x128xbf16, #tpu.memory_space<vmem>>, vector<1x64x128xbf16>
    %25 = vector.shape_cast %24 : vector<1x64x128xbf16> to vector<64x128xbf16>
    %cst_24 = arith.constant dense<0.000000e+00> : vector<64x192xf32>
    %26 = tpu.matmul %25, %0, %cst_24 {dimension_numbers = #tpu.dot_dimension_numbers<[1], [0], [0], [1], [0, 0, 1, 1], [], []>} : vector<64x128xbf16>, vector<128x192xbf16>, vector<64x192xf32> -> vector<64x192xf32>
    %27 = arith.truncf %26 : vector<64x192xf32> to vector<64x192xbf16>
    %c3_25 = arith.constant 3 : index
    %c0_26 = arith.constant 0 : index
    %c0_27 = arith.constant 0 : index
    %28 = vector.load %arg3[%c3_25, %c0_26, %c0_27] : memref<4x192x256xbf16, #tpu.memory_space<vmem>>, vector<1x192x256xbf16>
    %29 = vector.shape_cast %28 : vector<1x192x256xbf16> to vector<192x256xbf16>
    %cst_28 = arith.constant dense<0.000000e+00> : vector<64x256xf32>
    %30 = tpu.matmul %27, %29, %cst_28 {dimension_numbers = #tpu.dot_dimension_numbers<[1], [0], [0], [1], [0, 0, 1, 1], [], []>} : vector<64x192xbf16>, vector<192x256xbf16>, vector<64x256xf32> -> vector<64x256xf32>
    %31 = arith.addf %23, %30 : vector<64x256xf32>
    %cst_29 = arith.constant 0.000000e+00 : f32
    %32 = vector.broadcast %cst_29 : f32 to vector<64x256xf32>
    %33 = arith.cmpf oge, %31, %32 : vector<64x256xf32>
    %cst_30 = arith.constant 2.000000e-01 : f32
    %34 = vector.broadcast %cst_30 : f32 to vector<64x256xf32>
    %35 = arith.mulf %34, %31 : vector<64x256xf32>
    %36 = arith.select %33, %31, %35 : vector<64x256xi1>, vector<64x256xf32>
    %37 = arith.truncf %36 : vector<64x256xf32> to vector<64x256xbf16>
    %c0_31 = arith.constant 0 : index
    %c0_32 = arith.constant 0 : index
    %c0_33 = arith.constant 0 : index
    %38 = vector.load %arg4[%c0_31, %c0_32, %c0_33] : memref<4x32x64xbf16, #tpu.memory_space<vmem>>, vector<1x32x64xbf16>
    %39 = vector.shape_cast %38 : vector<1x32x64xbf16> to vector<32x64xbf16>
    %cst_34 = arith.constant dense<0.000000e+00> : vector<32x256xf32>
    %40 = tpu.matmul %39, %37, %cst_34 {dimension_numbers = #tpu.dot_dimension_numbers<[1], [0], [0], [1], [0, 0, 1, 1], [], []>} : vector<32x64xbf16>, vector<64x256xbf16>, vector<32x256xf32> -> vector<32x256xf32>
    %41 = arith.truncf %40 : vector<32x256xf32> to vector<32x256xbf16>
    %c0_35 = arith.constant 0 : index
    %c0_36 = arith.constant 0 : index
    %c0_37 = arith.constant 0 : index
    %42 = vector.load %arg5[%c0_35, %c0_36, %c0_37] : memref<4x256x256xbf16, #tpu.memory_space<vmem>>, vector<1x256x256xbf16>
    %43 = vector.shape_cast %42 : vector<1x256x256xbf16> to vector<256x256xbf16>
    %cst_38 = arith.constant dense<0.000000e+00> : vector<32x256xf32>
    %44 = tpu.matmul %41, %43, %cst_38 {dimension_numbers = #tpu.dot_dimension_numbers<[1], [0], [0], [1], [0, 0, 1, 1], [], []>} : vector<32x256xbf16>, vector<256x256xbf16>, vector<32x256xf32> -> vector<32x256xf32>
    %c1_39 = arith.constant 1 : index
    %c0_40 = arith.constant 0 : index
    %c0_41 = arith.constant 0 : index
    %45 = vector.load %arg4[%c1_39, %c0_40, %c0_41] : memref<4x32x64xbf16, #tpu.memory_space<vmem>>, vector<1x32x64xbf16>
    %46 = vector.shape_cast %45 : vector<1x32x64xbf16> to vector<32x64xbf16>
    %cst_42 = arith.constant dense<0.000000e+00> : vector<32x256xf32>
    %47 = tpu.matmul %46, %37, %cst_42 {dimension_numbers = #tpu.dot_dimension_numbers<[1], [0], [0], [1], [0, 0, 1, 1], [], []>} : vector<32x64xbf16>, vector<64x256xbf16>, vector<32x256xf32> -> vector<32x256xf32>
    %48 = arith.truncf %47 : vector<32x256xf32> to vector<32x256xbf16>
    %c1_43 = arith.constant 1 : index
    %c0_44 = arith.constant 0 : index
    %c0_45 = arith.constant 0 : index
    %49 = vector.load %arg5[%c1_43, %c0_44, %c0_45] : memref<4x256x256xbf16, #tpu.memory_space<vmem>>, vector<1x256x256xbf16>
    %50 = vector.shape_cast %49 : vector<1x256x256xbf16> to vector<256x256xbf16>
    %cst_46 = arith.constant dense<0.000000e+00> : vector<32x256xf32>
    %51 = tpu.matmul %48, %50, %cst_46 {dimension_numbers = #tpu.dot_dimension_numbers<[1], [0], [0], [1], [0, 0, 1, 1], [], []>} : vector<32x256xbf16>, vector<256x256xbf16>, vector<32x256xf32> -> vector<32x256xf32>
    %52 = arith.addf %44, %51 : vector<32x256xf32>
    %c2_47 = arith.constant 2 : index
    %c0_48 = arith.constant 0 : index
    %c0_49 = arith.constant 0 : index
    %53 = vector.load %arg4[%c2_47, %c0_48, %c0_49] : memref<4x32x64xbf16, #tpu.memory_space<vmem>>, vector<1x32x64xbf16>
    %54 = vector.shape_cast %53 : vector<1x32x64xbf16> to vector<32x64xbf16>
    %cst_50 = arith.constant dense<0.000000e+00> : vector<32x256xf32>
    %55 = tpu.matmul %54, %37, %cst_50 {dimension_numbers = #tpu.dot_dimension_numbers<[1], [0], [0], [1], [0, 0, 1, 1], [], []>} : vector<32x64xbf16>, vector<64x256xbf16>, vector<32x256xf32> -> vector<32x256xf32>
    %56 = arith.truncf %55 : vector<32x256xf32> to vector<32x256xbf16>
    %c2_51 = arith.constant 2 : index
    %c0_52 = arith.constant 0 : index
    %c0_53 = arith.constant 0 : index
    %57 = vector.load %arg5[%c2_51, %c0_52, %c0_53] : memref<4x256x256xbf16, #tpu.memory_space<vmem>>, vector<1x256x256xbf16>
    %58 = vector.shape_cast %57 : vector<1x256x256xbf16> to vector<256x256xbf16>
    %cst_54 = arith.constant dense<0.000000e+00> : vector<32x256xf32>
    %59 = tpu.matmul %56, %58, %cst_54 {dimension_numbers = #tpu.dot_dimension_numbers<[1], [0], [0], [1], [0, 0, 1, 1], [], []>} : vector<32x256xbf16>, vector<256x256xbf16>, vector<32x256xf32> -> vector<32x256xf32>
    %60 = arith.addf %52, %59 : vector<32x256xf32>
    %c3_55 = arith.constant 3 : index
    %c0_56 = arith.constant 0 : index
    %c0_57 = arith.constant 0 : index
    %61 = vector.load %arg4[%c3_55, %c0_56, %c0_57] : memref<4x32x64xbf16, #tpu.memory_space<vmem>>, vector<1x32x64xbf16>
    %62 = vector.shape_cast %61 : vector<1x32x64xbf16> to vector<32x64xbf16>
    %cst_58 = arith.constant dense<0.000000e+00> : vector<32x256xf32>
    %63 = tpu.matmul %62, %37, %cst_58 {dimension_numbers = #tpu.dot_dimension_numbers<[1], [0], [0], [1], [0, 0, 1, 1], [], []>} : vector<32x64xbf16>, vector<64x256xbf16>, vector<32x256xf32> -> vector<32x256xf32>
    %64 = arith.truncf %63 : vector<32x256xf32> to vector<32x256xbf16>
    %c3_59 = arith.constant 3 : index
    %c0_60 = arith.constant 0 : index
    %c0_61 = arith.constant 0 : index
    %65 = vector.load %arg5[%c3_59, %c0_60, %c0_61] : memref<4x256x256xbf16, #tpu.memory_space<vmem>>, vector<1x256x256xbf16>
    %66 = vector.shape_cast %65 : vector<1x256x256xbf16> to vector<256x256xbf16>
    %cst_62 = arith.constant dense<0.000000e+00> : vector<32x256xf32>
    %67 = tpu.matmul %64, %66, %cst_62 {dimension_numbers = #tpu.dot_dimension_numbers<[1], [0], [0], [1], [0, 0, 1, 1], [], []>} : vector<32x256xbf16>, vector<256x256xbf16>, vector<32x256xf32> -> vector<32x256xf32>
    %68 = arith.addf %60, %67 : vector<32x256xf32>
    %cst_63 = arith.constant dense<0.000000e+00> : vector<256xf32>
    %69 = vector.multi_reduction <add>, %68, %cst_63 [0] : vector<32x256xf32> to vector<256xf32>
    %70 = vector.shape_cast %69 : vector<256xf32> to vector<1x256xf32>
    %71 = arith.mulf %68, %68 : vector<32x256xf32>
    %cst_64 = arith.constant dense<0.000000e+00> : vector<256xf32>
    %72 = vector.multi_reduction <add>, %71, %cst_64 [0] : vector<32x256xf32> to vector<256xf32>
    %73 = vector.shape_cast %72 : vector<256xf32> to vector<1x256xf32>
    %c0_65 = arith.constant 0 : index
    %c0_66 = arith.constant 0 : index
    %74 = vector.load %arg6[%c0_65, %c0_66] : memref<256x256xf32, #tpu.memory_space<vmem>>, vector<256x256xf32>
    %cst_67 = arith.constant dense<0.000000e+00> : vector<1x256xf32>
    %75 = tpu.matmul %70, %74, %cst_67 {dimension_numbers = #tpu.dot_dimension_numbers<[1], [0], [0], [1], [0, 0, 1, 1], [], []>} : vector<1x256xf32>, vector<256x256xf32>, vector<1x256xf32> -> vector<1x256xf32>
    %cst_68 = arith.constant 0.001953125 : f32
    %76 = vector.broadcast %cst_68 : f32 to vector<1x256xf32>
    %77 = arith.mulf %75, %76 : vector<1x256xf32>
    %c0_69 = arith.constant 0 : index
    %c0_70 = arith.constant 0 : index
    %78 = vector.load %arg6[%c0_69, %c0_70] : memref<256x256xf32, #tpu.memory_space<vmem>>, vector<256x256xf32>
    %cst_71 = arith.constant dense<0.000000e+00> : vector<1x256xf32>
    %79 = tpu.matmul %73, %78, %cst_71 {dimension_numbers = #tpu.dot_dimension_numbers<[1], [0], [0], [1], [0, 0, 1, 1], [], []>} : vector<1x256xf32>, vector<256x256xf32>, vector<1x256xf32> -> vector<1x256xf32>
    %cst_72 = arith.constant 0.001953125 : f32
    %80 = vector.broadcast %cst_72 : f32 to vector<1x256xf32>
    %81 = arith.mulf %79, %80 : vector<1x256xf32>
    %82 = arith.mulf %77, %77 : vector<1x256xf32>
    %83 = arith.subf %81, %82 : vector<1x256xf32>
    %cst_73 = arith.constant 0.000000e+00 : f32
    %84 = vector.broadcast %cst_73 : f32 to vector<1x256xf32>
    %85 = arith.maximumf %83, %84 : vector<1x256xf32>
    %86 = vector.broadcast %77 : vector<1x256xf32> to vector<32x256xf32>
    %87 = arith.subf %68, %86 : vector<32x256xf32>
    %cst_74 = arith.constant 9.99999974E-6 : f32
    %88 = vector.broadcast %cst_74 : f32 to vector<1x256xf32>
    %89 = arith.addf %85, %88 : vector<1x256xf32>
    %90 = math.rsqrt %89 : vector<1x256xf32>
    %91 = vector.broadcast %90 : vector<1x256xf32> to vector<32x256xf32>
    %92 = arith.mulf %87, %91 : vector<32x256xf32>
    %cst_75 = arith.constant 0.000000e+00 : f32
    %93 = vector.broadcast %cst_75 : f32 to vector<32x256xf32>
    %94 = arith.cmpf oge, %92, %93 : vector<32x256xf32>
    %cst_76 = arith.constant 2.000000e-01 : f32
    %95 = vector.broadcast %cst_76 : f32 to vector<32x256xf32>
    %96 = arith.mulf %95, %92 : vector<32x256xf32>
    %97 = arith.select %94, %92, %96 : vector<32x256xi1>, vector<32x256xf32>
    %98 = arith.truncf %97 : vector<32x256xf32> to vector<32x256xbf16>
    %c0_77 = arith.constant 0 : index
    %c0_78 = arith.constant 0 : index
    %c0_79 = arith.constant 0 : index
    %99 = vector.load %arg7[%c0_77, %c0_78, %c0_79] : memref<4x16x32xbf16, #tpu.memory_space<vmem>>, vector<1x16x32xbf16>
    %100 = vector.shape_cast %99 : vector<1x16x32xbf16> to vector<16x32xbf16>
    %cst_80 = arith.constant dense<0.000000e+00> : vector<16x256xf32>
    %101 = tpu.matmul %100, %98, %cst_80 {dimension_numbers = #tpu.dot_dimension_numbers<[1], [0], [0], [1], [0, 0, 1, 1], [], []>} : vector<16x32xbf16>, vector<32x256xbf16>, vector<16x256xf32> -> vector<16x256xf32>
    %102 = arith.truncf %101 : vector<16x256xf32> to vector<16x256xbf16>
    %c0_81 = arith.constant 0 : index
    %c0_82 = arith.constant 0 : index
    %c0_83 = arith.constant 0 : index
    %103 = vector.load %arg8[%c0_81, %c0_82, %c0_83] : memref<4x256x256xbf16, #tpu.memory_space<vmem>>, vector<1x256x256xbf16>
    %104 = vector.shape_cast %103 : vector<1x256x256xbf16> to vector<256x256xbf16>
    %cst_84 = arith.constant dense<0.000000e+00> : vector<16x256xf32>
    %105 = tpu.matmul %102, %104, %cst_84 {dimension_numbers = #tpu.dot_dimension_numbers<[1], [0], [0], [1], [0, 0, 1, 1], [], []>} : vector<16x256xbf16>, vector<256x256xbf16>, vector<16x256xf32> -> vector<16x256xf32>
    %c1_85 = arith.constant 1 : index
    %c0_86 = arith.constant 0 : index
    %c0_87 = arith.constant 0 : index
    %106 = vector.load %arg7[%c1_85, %c0_86, %c0_87] : memref<4x16x32xbf16, #tpu.memory_space<vmem>>, vector<1x16x32xbf16>
    %107 = vector.shape_cast %106 : vector<1x16x32xbf16> to vector<16x32xbf16>
    %cst_88 = arith.constant dense<0.000000e+00> : vector<16x256xf32>
    %108 = tpu.matmul %107, %98, %cst_88 {dimension_numbers = #tpu.dot_dimension_numbers<[1], [0], [0], [1], [0, 0, 1, 1], [], []>} : vector<16x32xbf16>, vector<32x256xbf16>, vector<16x256xf32> -> vector<16x256xf32>
    %109 = arith.truncf %108 : vector<16x256xf32> to vector<16x256xbf16>
    %c1_89 = arith.constant 1 : index
    %c0_90 = arith.constant 0 : index
    %c0_91 = arith.constant 0 : index
    %110 = vector.load %arg8[%c1_89, %c0_90, %c0_91] : memref<4x256x256xbf16, #tpu.memory_space<vmem>>, vector<1x256x256xbf16>
    %111 = vector.shape_cast %110 : vector<1x256x256xbf16> to vector<256x256xbf16>
    %cst_92 = arith.constant dense<0.000000e+00> : vector<16x256xf32>
    %112 = tpu.matmul %109, %111, %cst_92 {dimension_numbers = #tpu.dot_dimension_numbers<[1], [0], [0], [1], [0, 0, 1, 1], [], []>} : vector<16x256xbf16>, vector<256x256xbf16>, vector<16x256xf32> -> vector<16x256xf32>
    %113 = arith.addf %105, %112 : vector<16x256xf32>
    %c2_93 = arith.constant 2 : index
    %c0_94 = arith.constant 0 : index
    %c0_95 = arith.constant 0 : index
    %114 = vector.load %arg7[%c2_93, %c0_94, %c0_95] : memref<4x16x32xbf16, #tpu.memory_space<vmem>>, vector<1x16x32xbf16>
    %115 = vector.shape_cast %114 : vector<1x16x32xbf16> to vector<16x32xbf16>
    %cst_96 = arith.constant dense<0.000000e+00> : vector<16x256xf32>
    %116 = tpu.matmul %115, %98, %cst_96 {dimension_numbers = #tpu.dot_dimension_numbers<[1], [0], [0], [1], [0, 0, 1, 1], [], []>} : vector<16x32xbf16>, vector<32x256xbf16>, vector<16x256xf32> -> vector<16x256xf32>
    %117 = arith.truncf %116 : vector<16x256xf32> to vector<16x256xbf16>
    %c2_97 = arith.constant 2 : index
    %c0_98 = arith.constant 0 : index
    %c0_99 = arith.constant 0 : index
    %118 = vector.load %arg8[%c2_97, %c0_98, %c0_99] : memref<4x256x256xbf16, #tpu.memory_space<vmem>>, vector<1x256x256xbf16>
    %119 = vector.shape_cast %118 : vector<1x256x256xbf16> to vector<256x256xbf16>
    %cst_100 = arith.constant dense<0.000000e+00> : vector<16x256xf32>
    %120 = tpu.matmul %117, %119, %cst_100 {dimension_numbers = #tpu.dot_dimension_numbers<[1], [0], [0], [1], [0, 0, 1, 1], [], []>} : vector<16x256xbf16>, vector<256x256xbf16>, vector<16x256xf32> -> vector<16x256xf32>
    %121 = arith.addf %113, %120 : vector<16x256xf32>
    %c3_101 = arith.constant 3 : index
    %c0_102 = arith.constant 0 : index
    %c0_103 = arith.constant 0 : index
    %122 = vector.load %arg7[%c3_101, %c0_102, %c0_103] : memref<4x16x32xbf16, #tpu.memory_space<vmem>>, vector<1x16x32xbf16>
    %123 = vector.shape_cast %122 : vector<1x16x32xbf16> to vector<16x32xbf16>
    %cst_104 = arith.constant dense<0.000000e+00> : vector<16x256xf32>
    %124 = tpu.matmul %123, %98, %cst_104 {dimension_numbers = #tpu.dot_dimension_numbers<[1], [0], [0], [1], [0, 0, 1, 1], [], []>} : vector<16x32xbf16>, vector<32x256xbf16>, vector<16x256xf32> -> vector<16x256xf32>
    %125 = arith.truncf %124 : vector<16x256xf32> to vector<16x256xbf16>
    %c3_105 = arith.constant 3 : index
    %c0_106 = arith.constant 0 : index
    %c0_107 = arith.constant 0 : index
    %126 = vector.load %arg8[%c3_105, %c0_106, %c0_107] : memref<4x256x256xbf16, #tpu.memory_space<vmem>>, vector<1x256x256xbf16>
    %127 = vector.shape_cast %126 : vector<1x256x256xbf16> to vector<256x256xbf16>
    %cst_108 = arith.constant dense<0.000000e+00> : vector<16x256xf32>
    %128 = tpu.matmul %125, %127, %cst_108 {dimension_numbers = #tpu.dot_dimension_numbers<[1], [0], [0], [1], [0, 0, 1, 1], [], []>} : vector<16x256xbf16>, vector<256x256xbf16>, vector<16x256xf32> -> vector<16x256xf32>
    %129 = arith.addf %121, %128 : vector<16x256xf32>
    %cst_109 = arith.constant dense<0.000000e+00> : vector<256xf32>
    %130 = vector.multi_reduction <add>, %129, %cst_109 [0] : vector<16x256xf32> to vector<256xf32>
    %131 = vector.shape_cast %130 : vector<256xf32> to vector<1x256xf32>
    %132 = arith.mulf %129, %129 : vector<16x256xf32>
    %cst_110 = arith.constant dense<0.000000e+00> : vector<256xf32>
    %133 = vector.multi_reduction <add>, %132, %cst_110 [0] : vector<16x256xf32> to vector<256xf32>
    %134 = vector.shape_cast %133 : vector<256xf32> to vector<1x256xf32>
    %c0_111 = arith.constant 0 : index
    %c0_112 = arith.constant 0 : index
    %135 = vector.load %arg9[%c0_111, %c0_112] : memref<256x256xf32, #tpu.memory_space<vmem>>, vector<256x256xf32>
    %cst_113 = arith.constant dense<0.000000e+00> : vector<1x256xf32>
    %136 = tpu.matmul %131, %135, %cst_113 {dimension_numbers = #tpu.dot_dimension_numbers<[1], [0], [0], [1], [0, 0, 1, 1], [], []>} : vector<1x256xf32>, vector<256x256xf32>, vector<1x256xf32> -> vector<1x256xf32>
    %cst_114 = arith.constant 7.812500e-03 : f32
    %137 = vector.broadcast %cst_114 : f32 to vector<1x256xf32>
    %138 = arith.mulf %136, %137 : vector<1x256xf32>
    %c0_115 = arith.constant 0 : index
    %c0_116 = arith.constant 0 : index
    %139 = vector.load %arg9[%c0_115, %c0_116] : memref<256x256xf32, #tpu.memory_space<vmem>>, vector<256x256xf32>
    %cst_117 = arith.constant dense<0.000000e+00> : vector<1x256xf32>
    %140 = tpu.matmul %134, %139, %cst_117 {dimension_numbers = #tpu.dot_dimension_numbers<[1], [0], [0], [1], [0, 0, 1, 1], [], []>} : vector<1x256xf32>, vector<256x256xf32>, vector<1x256xf32> -> vector<1x256xf32>
    %cst_118 = arith.constant 7.812500e-03 : f32
    %141 = vector.broadcast %cst_118 : f32 to vector<1x256xf32>
    %142 = arith.mulf %140, %141 : vector<1x256xf32>
    %143 = arith.mulf %138, %138 : vector<1x256xf32>
    %144 = arith.subf %142, %143 : vector<1x256xf32>
    %cst_119 = arith.constant 0.000000e+00 : f32
    %145 = vector.broadcast %cst_119 : f32 to vector<1x256xf32>
    %146 = arith.maximumf %144, %145 : vector<1x256xf32>
    %147 = vector.broadcast %138 : vector<1x256xf32> to vector<16x256xf32>
    %148 = arith.subf %129, %147 : vector<16x256xf32>
    %cst_120 = arith.constant 9.99999974E-6 : f32
    %149 = vector.broadcast %cst_120 : f32 to vector<1x256xf32>
    %150 = arith.addf %146, %149 : vector<1x256xf32>
    %151 = math.rsqrt %150 : vector<1x256xf32>
    %152 = vector.broadcast %151 : vector<1x256xf32> to vector<16x256xf32>
    %153 = arith.mulf %148, %152 : vector<16x256xf32>
    %cst_121 = arith.constant 0.000000e+00 : f32
    %154 = vector.broadcast %cst_121 : f32 to vector<16x256xf32>
    %155 = arith.cmpf oge, %153, %154 : vector<16x256xf32>
    %cst_122 = arith.constant 2.000000e-01 : f32
    %156 = vector.broadcast %cst_122 : f32 to vector<16x256xf32>
    %157 = arith.mulf %156, %153 : vector<16x256xf32>
    %158 = arith.select %155, %153, %157 : vector<16x256xi1>, vector<16x256xf32>
    %159 = arith.truncf %158 : vector<16x256xf32> to vector<16x256xbf16>
    %c0_123 = arith.constant 0 : index
    %c0_124 = arith.constant 0 : index
    %c0_125 = arith.constant 0 : index
    %160 = vector.load %arg10[%c0_123, %c0_124, %c0_125] : memref<4x8x16xbf16, #tpu.memory_space<vmem>>, vector<1x8x16xbf16>
    %161 = vector.shape_cast %160 : vector<1x8x16xbf16> to vector<8x16xbf16>
    %cst_126 = arith.constant dense<0.000000e+00> : vector<8x256xf32>
    %162 = tpu.matmul %161, %159, %cst_126 {dimension_numbers = #tpu.dot_dimension_numbers<[1], [0], [0], [1], [0, 0, 1, 1], [], []>} : vector<8x16xbf16>, vector<16x256xbf16>, vector<8x256xf32> -> vector<8x256xf32>
    %163 = arith.truncf %162 : vector<8x256xf32> to vector<8x256xbf16>
    %c0_127 = arith.constant 0 : index
    %c0_128 = arith.constant 0 : index
    %c0_129 = arith.constant 0 : index
    %164 = vector.load %arg11[%c0_127, %c0_128, %c0_129] : memref<4x256x256xbf16, #tpu.memory_space<vmem>>, vector<1x256x256xbf16>
    %165 = vector.shape_cast %164 : vector<1x256x256xbf16> to vector<256x256xbf16>
    %cst_130 = arith.constant dense<0.000000e+00> : vector<8x256xf32>
    %166 = tpu.matmul %163, %165, %cst_130 {dimension_numbers = #tpu.dot_dimension_numbers<[1], [0], [0], [1], [0, 0, 1, 1], [], []>} : vector<8x256xbf16>, vector<256x256xbf16>, vector<8x256xf32> -> vector<8x256xf32>
    %c1_131 = arith.constant 1 : index
    %c0_132 = arith.constant 0 : index
    %c0_133 = arith.constant 0 : index
    %167 = vector.load %arg10[%c1_131, %c0_132, %c0_133] : memref<4x8x16xbf16, #tpu.memory_space<vmem>>, vector<1x8x16xbf16>
    %168 = vector.shape_cast %167 : vector<1x8x16xbf16> to vector<8x16xbf16>
    %cst_134 = arith.constant dense<0.000000e+00> : vector<8x256xf32>
    %169 = tpu.matmul %168, %159, %cst_134 {dimension_numbers = #tpu.dot_dimension_numbers<[1], [0], [0], [1], [0, 0, 1, 1], [], []>} : vector<8x16xbf16>, vector<16x256xbf16>, vector<8x256xf32> -> vector<8x256xf32>
    %170 = arith.truncf %169 : vector<8x256xf32> to vector<8x256xbf16>
    %c1_135 = arith.constant 1 : index
    %c0_136 = arith.constant 0 : index
    %c0_137 = arith.constant 0 : index
    %171 = vector.load %arg11[%c1_135, %c0_136, %c0_137] : memref<4x256x256xbf16, #tpu.memory_space<vmem>>, vector<1x256x256xbf16>
    %172 = vector.shape_cast %171 : vector<1x256x256xbf16> to vector<256x256xbf16>
    %cst_138 = arith.constant dense<0.000000e+00> : vector<8x256xf32>
    %173 = tpu.matmul %170, %172, %cst_138 {dimension_numbers = #tpu.dot_dimension_numbers<[1], [0], [0], [1], [0, 0, 1, 1], [], []>} : vector<8x256xbf16>, vector<256x256xbf16>, vector<8x256xf32> -> vector<8x256xf32>
    %174 = arith.addf %166, %173 : vector<8x256xf32>
    %c2_139 = arith.constant 2 : index
    %c0_140 = arith.constant 0 : index
    %c0_141 = arith.constant 0 : index
    %175 = vector.load %arg10[%c2_139, %c0_140, %c0_141] : memref<4x8x16xbf16, #tpu.memory_space<vmem>>, vector<1x8x16xbf16>
    %176 = vector.shape_cast %175 : vector<1x8x16xbf16> to vector<8x16xbf16>
    %cst_142 = arith.constant dense<0.000000e+00> : vector<8x256xf32>
    %177 = tpu.matmul %176, %159, %cst_142 {dimension_numbers = #tpu.dot_dimension_numbers<[1], [0], [0], [1], [0, 0, 1, 1], [], []>} : vector<8x16xbf16>, vector<16x256xbf16>, vector<8x256xf32> -> vector<8x256xf32>
    %178 = arith.truncf %177 : vector<8x256xf32> to vector<8x256xbf16>
    %c2_143 = arith.constant 2 : index
    %c0_144 = arith.constant 0 : index
    %c0_145 = arith.constant 0 : index
    %179 = vector.load %arg11[%c2_143, %c0_144, %c0_145] : memref<4x256x256xbf16, #tpu.memory_space<vmem>>, vector<1x256x256xbf16>
    %180 = vector.shape_cast %179 : vector<1x256x256xbf16> to vector<256x256xbf16>
    %cst_146 = arith.constant dense<0.000000e+00> : vector<8x256xf32>
    %181 = tpu.matmul %178, %180, %cst_146 {dimension_numbers = #tpu.dot_dimension_numbers<[1], [0], [0], [1], [0, 0, 1, 1], [], []>} : vector<8x256xbf16>, vector<256x256xbf16>, vector<8x256xf32> -> vector<8x256xf32>
    %182 = arith.addf %174, %181 : vector<8x256xf32>
    %c3_147 = arith.constant 3 : index
    %c0_148 = arith.constant 0 : index
    %c0_149 = arith.constant 0 : index
    %183 = vector.load %arg10[%c3_147, %c0_148, %c0_149] : memref<4x8x16xbf16, #tpu.memory_space<vmem>>, vector<1x8x16xbf16>
    %184 = vector.shape_cast %183 : vector<1x8x16xbf16> to vector<8x16xbf16>
    %cst_150 = arith.constant dense<0.000000e+00> : vector<8x256xf32>
    %185 = tpu.matmul %184, %159, %cst_150 {dimension_numbers = #tpu.dot_dimension_numbers<[1], [0], [0], [1], [0, 0, 1, 1], [], []>} : vector<8x16xbf16>, vector<16x256xbf16>, vector<8x256xf32> -> vector<8x256xf32>
    %186 = arith.truncf %185 : vector<8x256xf32> to vector<8x256xbf16>
    %c3_151 = arith.constant 3 : index
    %c0_152 = arith.constant 0 : index
    %c0_153 = arith.constant 0 : index
    %187 = vector.load %arg11[%c3_151, %c0_152, %c0_153] : memref<4x256x256xbf16, #tpu.memory_space<vmem>>, vector<1x256x256xbf16>
    %188 = vector.shape_cast %187 : vector<1x256x256xbf16> to vector<256x256xbf16>
    %cst_154 = arith.constant dense<0.000000e+00> : vector<8x256xf32>
    %189 = tpu.matmul %186, %188, %cst_154 {dimension_numbers = #tpu.dot_dimension_numbers<[1], [0], [0], [1], [0, 0, 1, 1], [], []>} : vector<8x256xbf16>, vector<256x256xbf16>, vector<8x256xf32> -> vector<8x256xf32>
    %190 = arith.addf %182, %189 : vector<8x256xf32>
    %cst_155 = arith.constant dense<0.000000e+00> : vector<256xf32>
    %191 = vector.multi_reduction <add>, %190, %cst_155 [0] : vector<8x256xf32> to vector<256xf32>
    %192 = vector.shape_cast %191 : vector<256xf32> to vector<1x256xf32>
    %193 = arith.mulf %190, %190 : vector<8x256xf32>
    %cst_156 = arith.constant dense<0.000000e+00> : vector<256xf32>
    %194 = vector.multi_reduction <add>, %193, %cst_156 [0] : vector<8x256xf32> to vector<256xf32>
    %195 = vector.shape_cast %194 : vector<256xf32> to vector<1x256xf32>
    %c0_157 = arith.constant 0 : index
    %c0_158 = arith.constant 0 : index
    %196 = vector.load %arg12[%c0_157, %c0_158] : memref<256x256xf32, #tpu.memory_space<vmem>>, vector<256x256xf32>
    %cst_159 = arith.constant dense<0.000000e+00> : vector<1x256xf32>
    %197 = tpu.matmul %192, %196, %cst_159 {dimension_numbers = #tpu.dot_dimension_numbers<[1], [0], [0], [1], [0, 0, 1, 1], [], []>} : vector<1x256xf32>, vector<256x256xf32>, vector<1x256xf32> -> vector<1x256xf32>
    %cst_160 = arith.constant 3.125000e-02 : f32
    %198 = vector.broadcast %cst_160 : f32 to vector<1x256xf32>
    %199 = arith.mulf %197, %198 : vector<1x256xf32>
    %c0_161 = arith.constant 0 : index
    %c0_162 = arith.constant 0 : index
    %200 = vector.load %arg12[%c0_161, %c0_162] : memref<256x256xf32, #tpu.memory_space<vmem>>, vector<256x256xf32>
    %cst_163 = arith.constant dense<0.000000e+00> : vector<1x256xf32>
    %201 = tpu.matmul %195, %200, %cst_163 {dimension_numbers = #tpu.dot_dimension_numbers<[1], [0], [0], [1], [0, 0, 1, 1], [], []>} : vector<1x256xf32>, vector<256x256xf32>, vector<1x256xf32> -> vector<1x256xf32>
    %cst_164 = arith.constant 3.125000e-02 : f32
    %202 = vector.broadcast %cst_164 : f32 to vector<1x256xf32>
    %203 = arith.mulf %201, %202 : vector<1x256xf32>
    %204 = arith.mulf %199, %199 : vector<1x256xf32>
    %205 = arith.subf %203, %204 : vector<1x256xf32>
    %cst_165 = arith.constant 0.000000e+00 : f32
    %206 = vector.broadcast %cst_165 : f32 to vector<1x256xf32>
    %207 = arith.maximumf %205, %206 : vector<1x256xf32>
    %208 = vector.broadcast %199 : vector<1x256xf32> to vector<8x256xf32>
    %209 = arith.subf %190, %208 : vector<8x256xf32>
    %cst_166 = arith.constant 9.99999974E-6 : f32
    %210 = vector.broadcast %cst_166 : f32 to vector<1x256xf32>
    %211 = arith.addf %207, %210 : vector<1x256xf32>
    %212 = math.rsqrt %211 : vector<1x256xf32>
    %213 = vector.broadcast %212 : vector<1x256xf32> to vector<8x256xf32>
    %214 = arith.mulf %209, %213 : vector<8x256xf32>
    %cst_167 = arith.constant 0.000000e+00 : f32
    %215 = vector.broadcast %cst_167 : f32 to vector<8x256xf32>
    %216 = arith.cmpf oge, %214, %215 : vector<8x256xf32>
    %cst_168 = arith.constant 2.000000e-01 : f32
    %217 = vector.broadcast %cst_168 : f32 to vector<8x256xf32>
    %218 = arith.mulf %217, %214 : vector<8x256xf32>
    %219 = arith.select %216, %214, %218 : vector<8x256xi1>, vector<8x256xf32>
    %c0_169 = arith.constant 0 : index
    %c0_170 = arith.constant 0 : index
    %220 = vector.load %arg13[%c0_169, %c0_170] : memref<8x256xf32, #tpu.memory_space<vmem>>, vector<8x256xf32>
    %221 = arith.mulf %219, %220 : vector<8x256xf32>
    %cst_171 = arith.constant dense<0.000000e+00> : vector<8xf32>
    %222 = vector.multi_reduction <add>, %221, %cst_171 [1] : vector<8x256xf32> to vector<8xf32>
    %223 = vector.shape_cast %222 : vector<8xf32> to vector<8x1xf32>
    %c0_172 = arith.constant 0 : index
    %c0_173 = arith.constant 0 : index
    %224 = vector.load %arg14[%c0_172, %c0_173] : memref<2x8xf32, #tpu.memory_space<vmem>>, vector<2x8xf32>
    %cst_174 = arith.constant dense<0.000000e+00> : vector<2x1xf32>
    %225 = tpu.matmul %224, %223, %cst_174 {dimension_numbers = #tpu.dot_dimension_numbers<[1], [0], [0], [1], [0, 0, 1, 1], [], []>} : vector<2x8xf32>, vector<8x1xf32>, vector<2x1xf32> -> vector<2x1xf32>
    %cst_175 = arith.constant 0.000000e+00 : f32
    %226 = vector.broadcast %cst_175 : f32 to vector<2x1xf32>
    %227 = arith.subf %226, %225 : vector<2x1xf32>
    %228 = math.exp %227 : vector<2x1xf32>
    %cst_176 = arith.constant 1.000000e+00 : f32
    %229 = vector.broadcast %cst_176 : f32 to vector<2x1xf32>
    %230 = arith.addf %229, %228 : vector<2x1xf32>
    %cst_177 = arith.constant 1.000000e+00 : f32
    %231 = vector.broadcast %cst_177 : f32 to vector<2x1xf32>
    %232 = arith.divf %231, %230 : vector<2x1xf32>
    %c0_178 = arith.constant 0 : index
    %c0_179 = arith.constant 0 : index
    %233 = vector.load %arg15[%c0_178, %c0_179] : memref<2x1xf32, #tpu.memory_space<vmem>>, vector<2x1xf32>
    tpu.vector_store %arg15[%c0_178, %c0_179], %232 {strides = array<i32>} : memref<2x1xf32, #tpu.memory_space<vmem>>, vector<2x1xf32>,
    return
  }
  func.func @transform_0(%arg0: i32) -> (i32, i32) {
    %c0_i32 = arith.constant 0 : i32
    %c0_i32_0 = arith.constant 0 : i32
    %c0_i32_1 = arith.constant 0 : i32
    return %c0_i32, %c0_i32_0 : i32, i32
  }
  func.func @transform_1(%arg0: i32) -> (i32, i32, i32) {
    %c0_i32 = arith.constant 0 : i32
    %c0_i32_0 = arith.constant 0 : i32
    %c0_i32_1 = arith.constant 0 : i32
    %c0_i32_2 = arith.constant 0 : i32
    return %c0_i32, %c0_i32_0, %c0_i32_1 : i32, i32, i32
  }
  func.func @transform_2(%arg0: i32) -> (i32, i32, i32) {
    %c0_i32 = arith.constant 0 : i32
    %c0_i32_0 = arith.constant 0 : i32
    %c0_i32_1 = arith.constant 0 : i32
    %c0_i32_2 = arith.constant 0 : i32
    return %c0_i32, %c0_i32_0, %c0_i32_1 : i32, i32, i32
  }
  func.func @transform_3(%arg0: i32) -> (i32, i32, i32) {
    %c0_i32 = arith.constant 0 : i32
    %c0_i32_0 = arith.constant 0 : i32
    %c0_i32_1 = arith.constant 0 : i32
    %c0_i32_2 = arith.constant 0 : i32
    return %c0_i32, %c0_i32_0, %c0_i32_1 : i32, i32, i32
  }
  func.func @transform_4(%arg0: i32) -> (i32, i32, i32) {
    %c0_i32 = arith.constant 0 : i32
    %c0_i32_0 = arith.constant 0 : i32
    %c0_i32_1 = arith.constant 0 : i32
    %c0_i32_2 = arith.constant 0 : i32
    return %c0_i32, %c0_i32_0, %c0_i32_1 : i32, i32, i32
  }
  func.func @transform_5(%arg0: i32) -> (i32, i32) {
    %c0_i32 = arith.constant 0 : i32
    %c0_i32_0 = arith.constant 0 : i32
    %c0_i32_1 = arith.constant 0 : i32
    return %c0_i32, %c0_i32_0 : i32, i32
  }
  func.func @transform_6(%arg0: i32) -> (i32, i32, i32) {
    %c0_i32 = arith.constant 0 : i32
    %c0_i32_0 = arith.constant 0 : i32
    %c0_i32_1 = arith.constant 0 : i32
    %c0_i32_2 = arith.constant 0 : i32
    return %c0_i32, %c0_i32_0, %c0_i32_1 : i32, i32, i32
  }
  func.func @transform_7(%arg0: i32) -> (i32, i32, i32) {
    %c0_i32 = arith.constant 0 : i32
    %c0_i32_0 = arith.constant 0 : i32
    %c0_i32_1 = arith.constant 0 : i32
    %c0_i32_2 = arith.constant 0 : i32
    return %c0_i32, %c0_i32_0, %c0_i32_1 : i32, i32, i32
  }
  func.func @transform_8(%arg0: i32) -> (i32, i32) {
    %c0_i32 = arith.constant 0 : i32
    %c0_i32_0 = arith.constant 0 : i32
    %c0_i32_1 = arith.constant 0 : i32
    return %c0_i32, %c0_i32_0 : i32, i32
  }
  func.func @transform_9(%arg0: i32) -> (i32, i32, i32) {
    %c0_i32 = arith.constant 0 : i32
    %c0_i32_0 = arith.constant 0 : i32
    %c0_i32_1 = arith.constant 0 : i32
    %c0_i32_2 = arith.constant 0 : i32
    return %c0_i32, %c0_i32_0, %c0_i32_1 : i32, i32, i32
  }
  func.func @transform_10(%arg0: i32) -> (i32, i32, i32) {
    %c0_i32 = arith.constant 0 : i32
    %c0_i32_0 = arith.constant 0 : i32
    %c0_i32_1 = arith.constant 0 : i32
    %c0_i32_2 = arith.constant 0 : i32
    return %c0_i32, %c0_i32_0, %c0_i32_1 : i32, i32, i32
  }
  func.func @transform_11(%arg0: i32) -> (i32, i32) {
    %c0_i32 = arith.constant 0 : i32
    %c0_i32_0 = arith.constant 0 : i32
    %c0_i32_1 = arith.constant 0 : i32
    return %c0_i32, %c0_i32_0 : i32, i32
  }
  func.func @transform_12(%arg0: i32) -> (i32, i32) {
    %c0_i32 = arith.constant 0 : i32
    %c0_i32_0 = arith.constant 0 : i32
    %c0_i32_1 = arith.constant 0 : i32
    return %c0_i32, %c0_i32_0 : i32, i32
  }
  func.func @transform_13(%arg0: i32) -> (i32, i32) {
    %c0_i32 = arith.constant 0 : i32
    %c0_i32_0 = arith.constant 0 : i32
    %c0_i32_1 = arith.constant 0 : i32
    return %c0_i32, %c0_i32_0 : i32, i32
  }
  func.func @transform_14(%arg0: i32) -> (i32, i32) {
    %c0_i32 = arith.constant 0 : i32
    %c0_i32_0 = arith.constant 0 : i32
    %c0_i32_1 = arith.constant 0 : i32
    return %c0_i32, %c0_i32_0 : i32, i32
  }
}

</mosaic_0001>

<llo_original>
// kernel: discriminator_face_forward.1
$region0: #{discriminator_face_forward.1}
  #allocation0 [shape = 'u32[]', space=smem, size = 0x4, offset = 0x4, fixed_abs, tag = 'smem constant byte address 0x4 - core index']
  #allocation1 [shape = 'u32[144,128]{1,0:T(1,128)}', space=vmem, size = 0x12000, scoped, tag = 'internal scratch']
  %s0 = inlined_call_operand.vmem [shape: bf16[128,192], index: 0, kind: input, shape index: {}]
  %s1 = inlined_call_operand.vmem [shape: bf16[4,64,128], index: 1, kind: input, shape index: {}]
  %s2 = inlined_call_operand.hbm [shape: bf16[4,192,256], index: 2, kind: input, shape index: {}]
  %s3 = inlined_call_operand.vmem [shape: bf16[4,32,64], index: 3, kind: input, shape index: {}]
  %s4 = inlined_call_operand.vmem [shape: bf16[4,256,256], index: 4, kind: input, shape index: {}]
  %s5 = inlined_call_operand.hbm [shape: f32[256,256], index: 5, kind: input, shape index: {}]
  %s6 = inlined_call_operand.vmem [shape: bf16[4,16,32], index: 6, kind: input, shape index: {}]
  %s7 = inlined_call_operand.hbm [shape: bf16[4,256,256], index: 7, kind: input, shape index: {}]
  %s8 = inlined_call_operand.hbm [shape: f32[256,256], index: 8, kind: input, shape index: {}]
  %s9 = inlined_call_operand.vmem [shape: bf16[4,8,16], index: 9, kind: input, shape index: {}]
  %s10 = inlined_call_operand.hbm [shape: bf16[4,256,256], index: 10, kind: input, shape index: {}]
  %s11 = inlined_call_operand.hbm [shape: f32[256,256], index: 11, kind: input, shape index: {}]
  %s12 = inlined_call_operand.vmem [shape: f32[8,256], index: 12, kind: input, shape index: {}]
  %s13 = inlined_call_operand.vmem [shape: f32[2,8], index: 13, kind: input, shape index: {}]
  %s14 = inlined_call_operand.vmem [shape: f32[2,1], index: 14, kind: output, shape index: {}]
  %s15 = sld [smem:[#allocation0]]
  $region90: #{discriminator_face_forward.1} parent=0
    _
  %s17 = ssub.s32 1, %s15
  %s18 = scalar_select 0, %s17, %s15
  $region1: #{discriminator_face_forward.1} parent=0
    #allocation2 [shape = 'u8[393216]{0}', space=vmem, size = 0x60000, scoped, tag = 'input window, operand 2, single buffered']
    #allocation3 [shape = 's32[1]{0}', space=sflag, size = 0x4, scoped, tag = 'scoped memory for discriminator_face_forward.1']
    #allocation4 [shape = 'u8[262144]{0}', space=vmem, size = 0x40000, scoped, tag = 'input window, operand 5, single buffered']
    #allocation5 [shape = 's32[1]{0}', space=sflag, size = 0x4, scoped, tag = 'scoped memory for discriminator_face_forward.1']
    #allocation6 [shape = 'u8[524288]{0}', space=vmem, size = 0x80000, scoped, tag = 'input window, operand 7, single buffered']
    #allocation7 [shape = 'u8[262144]{0}', space=vmem, size = 0x40000, scoped, tag = 'input window, operand 8, single buffered']
    #allocation8 [shape = 's32[1]{0}', space=sflag, size = 0x4, scoped, tag = 'scoped memory for discriminator_face_forward.1']
    #allocation9 [shape = 'u8[524288]{0}', space=vmem, size = 0x80000, scoped, tag = 'input window, operand 10, single buffered']
    #allocation10 [shape = 'u8[262144]{0}', space=vmem, size = 0x40000, scoped, tag = 'input window, operand 11, single buffered']
    #allocation11 [shape = 's32[1]{0}', space=sflag, size = 0x4, scoped, tag = 'scoped memory for discriminator_face_forward.1']
    %19 = vsyncpa [#allocation3], 0
    %20 = vsyncpa [#allocation5], 0
    %21 = vsyncpa [#allocation8], 0
    %22 = vsyncpa [#allocation11], 0
    // Predicated region
    $region2: #{discriminator_face_forward.1} parent=1 // pred_check
      _
    $region3: #{discriminator_face_forward.1} parent=1 // pred_check_branch
      %24 = sbr.rel (0) target = $region5
    $region4: #{discriminator_face_forward.1} parent=1 // pred_region
      _
    $region5: #{discriminator_face_forward.1} parent=1 // pred_fallthru
      _
    // Predicated region
    $region6: #{discriminator_face_forward.1} parent=1 // pred_check
      _
    $region7: #{discriminator_face_forward.1} parent=1 // pred_check_branch
      %26 = sbr.rel (0) target = $region9
    $region8: #{discriminator_face_forward.1} parent=1 // pred_region
      _
    $region9: #{discriminator_face_forward.1} parent=1 // pred_fallthru
      _
    // Predicated region
    $region10: #{discriminator_face_forward.1} parent=1 // pred_check
      _
    $region11: #{discriminator_face_forward.1} parent=1 // pred_check_branch
      %28 = sbr.rel (0) target = $region13
    $region12: #{discriminator_face_forward.1} parent=1 // pred_region
      %s30 = ssub.s32 12288, 12288
      %31 = vsyncadd [#allocation3], %s30
      %s32 = sshll.u32 [#allocation2], 4
      %s33 = int_to_ptr.vmem [resolvable:$true] %s32
      %38 = dma.hbm_to_vmem [thread:$0]  %s2, 12288, %s33, [#allocation3], 128, 128, 8
    $region13: #{discriminator_face_forward.1} parent=1 // pred_fallthru
      _
    // Predicated region
    $region14: #{discriminator_face_forward.1} parent=1 // pred_check
      _
    $region15: #{discriminator_face_forward.1} parent=1 // pred_check_branch
      %40 = sbr.rel (0) target = $region17
    $region16: #{discriminator_face_forward.1} parent=1 // pred_region
      _
    $region17: #{discriminator_face_forward.1} parent=1 // pred_fallthru
      _
    // Predicated region
    $region18: #{discriminator_face_forward.1} parent=1 // pred_check
      _
    $region19: #{discriminator_face_forward.1} parent=1 // pred_check_branch
      %42 = sbr.rel (0) target = $region21
    $region20: #{discriminator_face_forward.1} parent=1 // pred_region
      _
    $region21: #{discriminator_face_forward.1} parent=1 // pred_fallthru
      _
    // Predicated region
    $region22: #{discriminator_face_forward.1} parent=1 // pred_check
      _
    $region23: #{discriminator_face_forward.1} parent=1 // pred_check_branch
      %44 = sbr.rel (0) target = $region25
    $region24: #{discriminator_face_forward.1} parent=1 // pred_region
      %s46 = ssub.s32 8192, 8192
      %47 = vsyncadd [#allocation5], %s46
      %s48 = sshll.u32 [#allocation4], 4
      %s49 = int_to_ptr.vmem [resolvable:$true] %s48
      %54 = dma.hbm_to_vmem [thread:$0]  %s5, 8192, %s49, [#allocation5], 256, 256, 16
    $region25: #{discriminator_face_forward.1} parent=1 // pred_fallthru
      _
    // Predicated region
    $region26: #{discriminator_face_forward.1} parent=1 // pred_check
      _
    $region27: #{discriminator_face_forward.1} parent=1 // pred_check_branch
      %56 = sbr.rel (0) target = $region29
    $region28: #{discriminator_face_forward.1} parent=1 // pred_region
      _
    $region29: #{discriminator_face_forward.1} parent=1 // pred_fallthru
      _
    // Predicated region
    $region30: #{discriminator_face_forward.1} parent=1 // pred_check
      _
    $region31: #{discriminator_face_forward.1} parent=1 // pred_check_branch
      %58 = sbr.rel (0) target = $region33
    $region32: #{discriminator_face_forward.1} parent=1 // pred_region
      %s60 = ssub.s32 16384, 16384
      %61 = vsyncadd [#allocation5], %s60
      %s62 = sshll.u32 [#allocation6], 4
      %s63 = int_to_ptr.vmem [resolvable:$true] %s62
      %68 = dma.hbm_to_vmem [thread:$0]  %s7, 16384, %s63, [#allocation5], 128, 128, 8
    $region33: #{discriminator_face_forward.1} parent=1 // pred_fallthru
      _
    // Predicated region
    $region34: #{discriminator_face_forward.1} parent=1 // pred_check
      _
    $region35: #{discriminator_face_forward.1} parent=1 // pred_check_branch
      %70 = sbr.rel (0) target = $region37
    $region36: #{discriminator_face_forward.1} parent=1 // pred_region
      %s72 = ssub.s32 8192, 8192
      %73 = vsyncadd [#allocation8], %s72
      %s74 = sshll.u32 [#allocation7], 4
      %s75 = int_to_ptr.vmem [resolvable:$true] %s74
      %80 = dma.hbm_to_vmem [thread:$0]  %s8, 8192, %s75, [#allocation8], 256, 256, 16
    $region37: #{discriminator_face_forward.1} parent=1 // pred_fallthru
      _
    // Predicated region
    $region38: #{discriminator_face_forward.1} parent=1 // pred_check
      _
    $region39: #{discriminator_face_forward.1} parent=1 // pred_check_branch
      %82 = sbr.rel (0) target = $region41
    $region40: #{discriminator_face_forward.1} parent=1 // pred_region
      _
    $region41: #{discriminator_face_forward.1} parent=1 // pred_fallthru
      _
    // Predicated region
    $region42: #{discriminator_face_forward.1} parent=1 // pred_check
      _
    $region43: #{discriminator_face_forward.1} parent=1 // pred_check_branch
      %84 = sbr.rel (0) target = $region45
    $region44: #{discriminator_face_forward.1} parent=1 // pred_region
      %s86 = ssub.s32 16384, 16384
      %87 = vsyncadd [#allocation8], %s86
      %s88 = sshll.u32 [#allocation9], 4
      %s89 = int_to_ptr.vmem [resolvable:$true] %s88
      %94 = dma.hbm_to_vmem [thread:$0]  %s10, 16384, %s89, [#allocation8], 128, 128, 8
    $region45: #{discriminator_face_forward.1} parent=1 // pred_fallthru
      _
    // Predicated region
    $region46: #{discriminator_face_forward.1} parent=1 // pred_check
      _
    $region47: #{discriminator_face_forward.1} parent=1 // pred_check_branch
      %96 = sbr.rel (0) target = $region49
    $region48: #{discriminator_face_forward.1} parent=1 // pred_region
      %s98 = ssub.s32 8192, 8192
      %99 = vsyncadd [#allocation11], %s98
      %s100 = sshll.u32 [#allocation10], 4
      %s101 = int_to_ptr.vmem [resolvable:$true] %s100
      %106 = dma.hbm_to_vmem [thread:$0]  %s11, 8192, %s101, [#allocation11], 256, 256, 16
    $region49: #{discriminator_face_forward.1} parent=1 // pred_fallthru
      _
    // Predicated region
    $region50: #{discriminator_face_forward.1} parent=1 // pred_check
      _
    $region51: #{discriminator_face_forward.1} parent=1 // pred_check_branch
      %108 = sbr.rel (0) target = $region53
    $region52: #{discriminator_face_forward.1} parent=1 // pred_region
      _
    $region53: #{discriminator_face_forward.1} parent=1 // pred_fallthru
      _
    // Predicated region
    $region54: #{discriminator_face_forward.1} parent=1 // pred_check
      _
    $region55: #{discriminator_face_forward.1} parent=1 // pred_check_branch
      %110 = sbr.rel (0) target = $region57
    $region56: #{discriminator_face_forward.1} parent=1 // pred_region
      _
    $region57: #{discriminator_face_forward.1} parent=1 // pred_fallthru
      _
    // Predicated region
    $region58: #{discriminator_face_forward.1} parent=1 // pred_check
      _
    $region59: #{discriminator_face_forward.1} parent=1 // pred_check_branch
      %112 = sbr.rel (0) target = $region61
    $region60: #{discriminator_face_forward.1} parent=1 // pred_region
      %113 = dma.done [#allocation3], 12288
    $region61: #{discriminator_face_forward.1} parent=1 // pred_fallthru
      _
    // Predicated region
    $region62: #{discriminator_face_forward.1} parent=1 // pred_check
      _
    $region63: #{discriminator_face_forward.1} parent=1 // pred_check_branch
      %115 = sbr.rel (0) target = $region65
    $region64: #{discriminator_face_forward.1} parent=1 // pred_region
      %116 = dma.done [#allocation5], 8192
    $region65: #{discriminator_face_forward.1} parent=1 // pred_fallthru
      _
    // Predicated region
    $region66: #{discriminator_face_forward.1} parent=1 // pred_check
      _
    $region67: #{discriminator_face_forward.1} parent=1 // pred_check_branch
      %118 = sbr.rel (0) target = $region69
    $region68: #{discriminator_face_forward.1} parent=1 // pred_region
      %119 = dma.done [#allocation5], 16384
    $region69: #{discriminator_face_forward.1} parent=1 // pred_fallthru
      _
    // Predicated region
    $region70: #{discriminator_face_forward.1} parent=1 // pred_check
      _
    $region71: #{discriminator_face_forward.1} parent=1 // pred_check_branch
      %121 = sbr.rel (0) target = $region73
    $region72: #{discriminator_face_forward.1} parent=1 // pred_region
      %122 = dma.done [#allocation8], 8192
    $region73: #{discriminator_face_forward.1} parent=1 // pred_fallthru
      _
    // Predicated region
    $region74: #{discriminator_face_forward.1} parent=1 // pred_check
      _
    $region75: #{discriminator_face_forward.1} parent=1 // pred_check_branch
      %124 = sbr.rel (0) target = $region77
    $region76: #{discriminator_face_forward.1} parent=1 // pred_region
      %125 = dma.done [#allocation8], 16384
    $region77: #{discriminator_face_forward.1} parent=1 // pred_fallthru
      _
    // Predicated region
    $region78: #{discriminator_face_forward.1} parent=1 // pred_check
      _
    $region79: #{discriminator_face_forward.1} parent=1 // pred_check_branch
      %127 = sbr.rel (0) target = $region81
    $region80: #{discriminator_face_forward.1} parent=1 // pred_region
      %128 = dma.done [#allocation11], 8192
    $region81: #{discriminator_face_forward.1} parent=1 // pred_fallthru
      _
    %v130 = vld [vmem:[%s0] sm:$0xff]
    %v131 = vld [vmem:[%s0 + $0x8] sm:$0xff]
    %v132 = vld [vmem:[%s0 + $0x10] sm:$0xff]
    %v133 = vld [vmem:[%s0 + $0x18] sm:$0xff]
    %v134 = vld [vmem:[%s0 + $0x20] sm:$0xff]
    %v135 = vld [vmem:[%s0 + $0x28] sm:$0xff]
    %v136 = vld [vmem:[%s0 + $0x30] sm:$0xff]
    %v137 = vld [vmem:[%s0 + $0x38] sm:$0xff]
    %v138 = vld [vmem:[%s0 + $0x40] sm:$0xff]
    %v139 = vld [vmem:[%s0 + $0x48] sm:$0xff]
    %v140 = vld [vmem:[%s0 + $0x50] sm:$0xff]
    %v141 = vld [vmem:[%s0 + $0x58] sm:$0xff]
    %v142 = vld [vmem:[%s0 + $0x60] sm:$0xff]
    %v143 = vld [vmem:[%s0 + $0x68] sm:$0xff]
    %v144 = vld [vmem:[%s0 + $0x70] sm:$0xff]
    %v145 = vld [vmem:[%s0 + $0x78] sm:$0xff]
    %v146 = vld [vmem:[%s1] sm:$0xf]
    %v147 = vld [vmem:[%s1 + $0x4] sm:$0xf]
    %v148 = vld [vmem:[%s1 + $0x8] sm:$0xf]
    %v149 = vld [vmem:[%s1 + $0xc] sm:$0xf]
    %v150 = vld [vmem:[%s1 + $0x10] sm:$0xf]
    %v151 = vld [vmem:[%s1 + $0x14] sm:$0xf]
    %v152 = vld [vmem:[%s1 + $0x18] sm:$0xf]
    %v153 = vld [vmem:[%s1 + $0x1c] sm:$0xf]
    %v162 = vunpack.c.l.b16 %v146
    %v163 = vunpack.c.l.b16 %v147
    %v164 = vunpack.c.l.b16 %v148
    %v165 = vunpack.c.l.b16 %v149
    %v166 = vunpack.c.l.b16 %v150
    %v167 = vunpack.c.l.b16 %v151
    %v168 = vunpack.c.l.b16 %v152
    %v169 = vunpack.c.l.b16 %v153
    %v170 = vpack.c.b16 %v163, %v162
    %v171 = vpack.c.b16 %v165, %v164
    %v172 = vpack.c.b16 %v167, %v166
    %v173 = vpack.c.b16 %v169, %v168
    %v194 = vunpack.c.l.b16 %v130
    %v195 = vunpack.c.h.b16 %v130
    %v196 = vunpack.c.l.b16 %v131
    %v197 = vunpack.c.h.b16 %v131
    %v198 = vunpack.c.l.b16 %v132
    %v199 = vunpack.c.h.b16 %v132
    %v200 = vunpack.c.l.b16 %v133
    %v201 = vunpack.c.h.b16 %v133
    %v202 = vunpack.c.l.b16 %v134
    %v203 = vunpack.c.h.b16 %v134
    %v204 = vunpack.c.l.b16 %v135
    %v205 = vunpack.c.h.b16 %v135
    %v206 = vunpack.c.l.b16 %v136
    %v207 = vunpack.c.h.b16 %v136
    %v208 = vunpack.c.l.b16 %v137
    %v209 = vunpack.c.h.b16 %v137
    %v210 = vunpack.c.l.b16 %v138
    %v211 = vunpack.c.h.b16 %v138
    %v212 = vunpack.c.l.b16 %v139
    %v213 = vunpack.c.h.b16 %v139
    %v214 = vunpack.c.l.b16 %v140
    %v215 = vunpack.c.h.b16 %v140
    %v216 = vunpack.c.l.b16 %v141
    %v217 = vunpack.c.h.b16 %v141
    %v218 = vunpack.c.l.b16 %v142
    %v219 = vunpack.c.h.b16 %v142
    %v220 = vunpack.c.l.b16 %v143
    %v221 = vunpack.c.h.b16 %v143
    %v222 = vunpack.c.l.b16 %v144
    %v223 = vunpack.c.h.b16 %v144
    %v224 = vunpack.c.l.b16 %v145
    %v225 = vunpack.c.h.b16 %v145
    %v226 = vpack.c.b16 %v196, %v194
    %v227 = vpack.c.b16 %v197, %v195
    %v228 = vpack.c.b16 %v200, %v198
    %v229 = vpack.c.b16 %v201, %v199
    %v230 = vpack.c.b16 %v204, %v202
    %v231 = vpack.c.b16 %v205, %v203
    %v232 = vpack.c.b16 %v208, %v206
    %v233 = vpack.c.b16 %v209, %v207
    %v234 = vpack.c.b16 %v212, %v210
    %v235 = vpack.c.b16 %v213, %v211
    %v236 = vpack.c.b16 %v216, %v214
    %v237 = vpack.c.b16 %v217, %v215
    %v238 = vpack.c.b16 %v220, %v218
    %v239 = vpack.c.b16 %v221, %v219
    %v240 = vpack.c.b16 %v224, %v222
    %v241 = vpack.c.b16 %v225, %v223
    %258 = vmatprep.subr.bf16.mxu0 %v241
    %259 = vmatpush1.bf16.msra.mxu0 %v240
    %260 = vmatprep.subr.bf16.mxu0 %v239
    %261 = vmatpush1.bf16.msra.mxu0 %v238
    %262 = vmatprep.subr.bf16.mxu0 %v237
    %263 = vmatpush1.bf16.msra.mxu0 %v236
    %264 = vmatprep.subr.bf16.mxu0 %v235
    %265 = vmatpush1.bf16.msra.mxu0 %v234
    %266 = vmatprep.subr.bf16.mxu0 %v233
    %267 = vmatpush1.bf16.msra.mxu0 %v232
    %268 = vmatprep.subr.bf16.mxu0 %v231
    %269 = vmatpush1.bf16.msra.mxu0 %v230
    %270 = vmatprep.subr.bf16.mxu0 %v229
    %271 = vmatpush1.bf16.msra.mxu0 %v228
    %272 = vmatprep.subr.bf16.mxu0 %v227
    %273 = vmatpush1.bf16.msra.mxu0 %v226
    %274 = vmatprep.subr.bf16.mxu0 0
    %275 = vmatpush2.bf16.msra.mxu0 0
    %276 = vmatprep.subr.bf16.mxu0 0
    %277 = vmatpush2.bf16.msra.mxu0 0
    %278 = vmatprep.subr.bf16.mxu0 0
    %279 = vmatpush2.bf16.msra.mxu0 0
    %280 = vmatprep.subr.bf16.mxu0 0
    %281 = vmatpush2.bf16.msra.mxu0 0
    %282 = vmatprep.subr.bf16.mxu0 0
    %283 = vmatpush2.bf16.msra.mxu0 0
    %284 = vmatprep.subr.bf16.mxu0 0
    %285 = vmatpush2.bf16.msra.mxu0 0
    %286 = vmatprep.subr.bf16.mxu0 0
    %287 = vmatpush2.bf16.msra.mxu0 0
    %288 = vmatprep.subr.bf16.mxu0 0
    %289 = vmatpush2.bf16.msra.mxu0 0
    %290 = vmatprep.mubr.bf16.mxu0 0
    %291 = vmatmul.mubr.bf16.gmra.mxu0 %v170
    %v292 = vpop.f32.mrf.mxu0
    %v293 = vadd.f32 0.0, %v292
    %v294 = vpop.f32.mrf.mxu0
    %v295 = vadd.f32 0.0, %v294
    %v296 = vpop.f32.mrf.mxu0
    %v297 = vadd.f32 0.0, %v296
    %v298 = vpop.f32.mrf.mxu0
    %v299 = vadd.f32 0.0, %v298
    %300 = vmatprep.mubr.bf16.mxu0 0
    %301 = vmatmul.mubr.bf16.gmra.mxu0 %v171
    %v302 = vpop.f32.mrf.mxu0
    %v303 = vadd.f32 0.0, %v302
    %v304 = vpop.f32.mrf.mxu0
    %v305 = vadd.f32 0.0, %v304
    %v306 = vpop.f32.mrf.mxu0
    %v307 = vadd.f32 0.0, %v306
    %v308 = vpop.f32.mrf.mxu0
    %v309 = vadd.f32 0.0, %v308
    %310 = vmatprep.mubr.bf16.mxu0 0
    %311 = vmatmul.mubr.bf16.gmra.mxu0 %v172
    %v312 = vpop.f32.mrf.mxu0
    %v313 = vadd.f32 0.0, %v312
    %v314 = vpop.f32.mrf.mxu0
    %v315 = vadd.f32 0.0, %v314
    %v316 = vpop.f32.mrf.mxu0
    %v317 = vadd.f32 0.0, %v316
    %v318 = vpop.f32.mrf.mxu0
    %v319 = vadd.f32 0.0, %v318
    %320 = vmatprep.mubr.bf16.mxu0 0
    %321 = vmatmul.mubr.bf16.gmra.mxu0 %v173
    %v322 = vpop.f32.mrf.mxu0
    %v323 = vadd.f32 0.0, %v322
    %v324 = vpop.f32.mrf.mxu0
    %v325 = vadd.f32 0.0, %v324
    %v326 = vpop.f32.mrf.mxu0
    %v327 = vadd.f32 0.0, %v326
    %v328 = vpop.f32.mrf.mxu0
    %v329 = vadd.f32 0.0, %v328
    %330 = vdwg.mxu0
    %v331 = vpack.c.bf16 %v297, %v293
    %v332 = vpack.c.bf16 %v299, %v295
    %v333 = vpack.c.bf16 %v307, %v303
    %v334 = vpack.c.bf16 %v309, %v305
    %v335 = vpack.c.bf16 %v317, %v313
    %v336 = vpack.c.bf16 %v319, %v315
    %v337 = vpack.c.bf16 %v327, %v323
    %v338 = vpack.c.bf16 %v329, %v325
    %v339 = vld [vmem:[#allocation2] sm:$0xff]
    %v340 = vld [vmem:[#allocation2 + $0x8] sm:$0xff]
    %v341 = vld [vmem:[#allocation2 + $0x10] sm:$0xff]
    %v342 = vld [vmem:[#allocation2 + $0x18] sm:$0xff]
    %v343 = vld [vmem:[#allocation2 + $0x20] sm:$0xff]
    %v344 = vld [vmem:[#allocation2 + $0x28] sm:$0xff]
    %v345 = vld [vmem:[#allocation2 + $0x30] sm:$0xff]
    %v346 = vld [vmem:[#allocation2 + $0x38] sm:$0xff]
    %v347 = vld [vmem:[#allocation2 + $0x40] sm:$0xff]
    %v348 = vld [vmem:[#allocation2 + $0x48] sm:$0xff]
    %v349 = vld [vmem:[#allocation2 + $0x50] sm:$0xff]
    %v350 = vld [vmem:[#allocation2 + $0x58] sm:$0xff]
    %v351 = vld [vmem:[#allocation2 + $0x60] sm:$0xff]
    %v352 = vld [vmem:[#allocation2 + $0x68] sm:$0xff]
    %v353 = vld [vmem:[#allocation2 + $0x70] sm:$0xff]
    %v354 = vld [vmem:[#allocation2 + $0x78] sm:$0xff]
    %v355 = vld [vmem:[#allocation2 + $0x80] sm:$0xff]
    %v356 = vld [vmem:[#allocation2 + $0x88] sm:$0xff]
    %v357 = vld [vmem:[#allocation2 + $0x90] sm:$0xff]
    %v358 = vld [vmem:[#allocation2 + $0x98] sm:$0xff]
    %v359 = vld [vmem:[#allocation2 + $0xa0] sm:$0xff]
    %v360 = vld [vmem:[#allocation2 + $0xa8] sm:$0xff]
    %v361 = vld [vmem:[#allocation2 + $0xb0] sm:$0xff]
    %v362 = vld [vmem:[#allocation2 + $0xb8] sm:$0xff]
    %s363 = scalar_lea.vmem %s1, 32
    %v364 = vld [vmem:[%s363] sm:$0xf]
    %v365 = vld [vmem:[%s363 + $0x4] sm:$0xf]
    %v366 = vld [vmem:[%s363 + $0x8] sm:$0xf]
    %v367 = vld [vmem:[%s363 + $0xc] sm:$0xf]
    %v368 = vld [vmem:[%s363 + $0x10] sm:$0xf]
    %v369 = vld [vmem:[%s363 + $0x14] sm:$0xf]
    %v370 = vld [vmem:[%s363 + $0x18] sm:$0xf]
    %v371 = vld [vmem:[%s363 + $0x1c] sm:$0xf]
    %v380 = vunpack.c.l.b16 %v364
    %v381 = vunpack.c.l.b16 %v365
    %v382 = vunpack.c.l.b16 %v366
    %v383 = vunpack.c.l.b16 %v367
    %v384 = vunpack.c.l.b16 %v368
    %v385 = vunpack.c.l.b16 %v369
    %v386 = vunpack.c.l.b16 %v370
    %v387 = vunpack.c.l.b16 %v371
    %v388 = vpack.c.b16 %v381, %v380
    %v389 = vpack.c.b16 %v383, %v382
    %v390 = vpack.c.b16 %v385, %v384
    %v391 = vpack.c.b16 %v387, %v386
    %396 = vmatprep.subr.bf16.mxu0 %v241
    %397 = vmatpush1.bf16.msra.mxu0 %v240
    %398 = vmatprep.subr.bf16.mxu0 %v239
    %399 = vmatpush1.bf16.msra.mxu0 %v238
    %400 = vmatprep.subr.bf16.mxu0 %v237
    %401 = vmatpush1.bf16.msra.mxu0 %v236
    %402 = vmatprep.subr.bf16.mxu0 %v235
    %403 = vmatpush1.bf16.msra.mxu0 %v234
    %404 = vmatprep.subr.bf16.mxu0 %v233
    %405 = vmatpush1.bf16.msra.mxu0 %v232
    %406 = vmatprep.subr.bf16.mxu0 %v231
    %407 = vmatpush1.bf16.msra.mxu0 %v230
    %408 = vmatprep.subr.bf16.mxu0 %v229
    %409 = vmatpush1.bf16.msra.mxu0 %v228
    %410 = vmatprep.subr.bf16.mxu0 %v227
    %411 = vmatpush1.bf16.msra.mxu0 %v226
    %412 = vmatprep.subr.bf16.mxu0 0
    %413 = vmatpush2.bf16.msra.mxu0 0
    %414 = vmatprep.subr.bf16.mxu0 0
    %415 = vmatpush2.bf16.msra.mxu0 0
    %416 = vmatprep.subr.bf16.mxu0 0
    %417 = vmatpush2.bf16.msra.mxu0 0
    %418 = vmatprep.subr.bf16.mxu0 0
    %419 = vmatpush2.bf16.msra.mxu0 0
    %420 = vmatprep.subr.bf16.mxu0 0
    %421 = vmatpush2.bf16.msra.mxu0 0
    %422 = vmatprep.subr.bf16.mxu0 0
    %423 = vmatpush2.bf16.msra.mxu0 0
    %424 = vmatprep.subr.bf16.mxu0 0
    %425 = vmatpush2.bf16.msra.mxu0 0
    %426 = vmatprep.subr.bf16.mxu0 0
    %427 = vmatpush2.bf16.msra.mxu0 0
    %428 = vmatprep.mubr.bf16.mxu0 0
    %429 = vmatmul.mubr.bf16.gmra.mxu0 %v388
    %v430 = vpop.f32.mrf.mxu0
    %v431 = vadd.f32 0.0, %v430
    %v432 = vpop.f32.mrf.mxu0
    %v433 = vadd.f32 0.0, %v432
    %v434 = vpop.f32.mrf.mxu0
    %v435 = vadd.f32 0.0, %v434
    %v436 = vpop.f32.mrf.mxu0
    %v437 = vadd.f32 0.0, %v436
    %438 = vmatprep.mubr.bf16.mxu0 0
    %439 = vmatmul.mubr.bf16.gmra.mxu0 %v389
    %v440 = vpop.f32.mrf.mxu0
    %v441 = vadd.f32 0.0, %v440
    %v442 = vpop.f32.mrf.mxu0
    %v443 = vadd.f32 0.0, %v442
    %v444 = vpop.f32.mrf.mxu0
    %v445 = vadd.f32 0.0, %v444
    %v446 = vpop.f32.mrf.mxu0
    %v447 = vadd.f32 0.0, %v446
    %448 = vmatprep.mubr.bf16.mxu0 0
    %449 = vmatmul.mubr.bf16.gmra.mxu0 %v390
    %v450 = vpop.f32.mrf.mxu0
    %v451 = vadd.f32 0.0, %v450
    %v452 = vpop.f32.mrf.mxu0
    %v453 = vadd.f32 0.0, %v452
    %v454 = vpop.f32.mrf.mxu0
    %v455 = vadd.f32 0.0, %v454
    %v456 = vpop.f32.mrf.mxu0
    %v457 = vadd.f32 0.0, %v456
    %458 = vmatprep.mubr.bf16.mxu0 0
    %459 = vmatmul.mubr.bf16.gmra.mxu0 %v391
    %v460 = vpop.f32.mrf.mxu0
    %v461 = vadd.f32 0.0, %v460
    %v462 = vpop.f32.mrf.mxu0
    %v463 = vadd.f32 0.0, %v462
    %v464 = vpop.f32.mrf.mxu0
    %v465 = vadd.f32 0.0, %v464
    %v466 = vpop.f32.mrf.mxu0
    %v467 = vadd.f32 0.0, %v466
    %468 = vdwg.mxu0
    %v469 = vpack.c.bf16 %v435, %v431
    %v470 = vpack.c.bf16 %v437, %v433
    %v471 = vpack.c.bf16 %v445, %v441
    %v472 = vpack.c.bf16 %v447, %v443
    %v473 = vpack.c.bf16 %v455, %v451
    %v474 = vpack.c.bf16 %v457, %v453
    %v475 = vpack.c.bf16 %v465, %v461
    %v476 = vpack.c.bf16 %v467, %v463
    %s477 = scalar_lea.vmem [#allocation2], 192
    %v478 = vld [vmem:[%s477] sm:$0xff]
    %v479 = vld [vmem:[%s477 + $0x8] sm:$0xff]
    %v480 = vld [vmem:[%s477 + $0x10] sm:$0xff]
    %v481 = vld [vmem:[%s477 + $0x18] sm:$0xff]
    %v482 = vld [vmem:[%s477 + $0x20] sm:$0xff]
    %v483 = vld [vmem:[%s477 + $0x28] sm:$0xff]
    %v484 = vld [vmem:[%s477 + $0x30] sm:$0xff]
    %v485 = vld [vmem:[%s477 + $0x38] sm:$0xff]
    %v486 = vld [vmem:[%s477 + $0x40] sm:$0xff]
    %v487 = vld [vmem:[%s477 + $0x48] sm:$0xff]
    %v488 = vld [vmem:[%s477 + $0x50] sm:$0xff]
    %v489 = vld [vmem:[%s477 + $0x58] sm:$0xff]
    %v490 = vld [vmem:[%s477 + $0x60] sm:$0xff]
    %v491 = vld [vmem:[%s477 + $0x68] sm:$0xff]
    %v492 = vld [vmem:[%s477 + $0x70] sm:$0xff]
    %v493 = vld [vmem:[%s477 + $0x78] sm:$0xff]
    %v494 = vld [vmem:[%s477 + $0x80] sm:$0xff]
    %v495 = vld [vmem:[%s477 + $0x88] sm:$0xff]
    %v496 = vld [vmem:[%s477 + $0x90] sm:$0xff]
    %v497 = vld [vmem:[%s477 + $0x98] sm:$0xff]
    %v498 = vld [vmem:[%s477 + $0xa0] sm:$0xff]
    %v499 = vld [vmem:[%s477 + $0xa8] sm:$0xff]
    %v500 = vld [vmem:[%s477 + $0xb0] sm:$0xff]
    %v501 = vld [vmem:[%s477 + $0xb8] sm:$0xff]
    %v526 = vunpack.c.l.b16 %v478
    %v527 = vunpack.c.h.b16 %v478
    %v528 = vunpack.c.l.b16 %v479
    %v529 = vunpack.c.h.b16 %v479
    %v530 = vunpack.c.l.b16 %v480
    %v531 = vunpack.c.h.b16 %v480
    %v532 = vunpack.c.l.b16 %v481
    %v533 = vunpack.c.h.b16 %v481
    %v534 = vunpack.c.l.b16 %v482
    %v535 = vunpack.c.h.b16 %v482
    %v536 = vunpack.c.l.b16 %v483
    %v537 = vunpack.c.h.b16 %v483
    %v538 = vunpack.c.l.b16 %v484
    %v539 = vunpack.c.h.b16 %v484
    %v540 = vunpack.c.l.b16 %v485
    %v541 = vunpack.c.h.b16 %v485
    %v542 = vunpack.c.l.b16 %v486
    %v543 = vunpack.c.h.b16 %v486
    %v544 = vunpack.c.l.b16 %v487
    %v545 = vunpack.c.h.b16 %v487
    %v546 = vunpack.c.l.b16 %v488
    %v547 = vunpack.c.h.b16 %v488
    %v548 = vunpack.c.l.b16 %v489
    %v549 = vunpack.c.h.b16 %v489
    %v550 = vunpack.c.l.b16 %v490
    %v551 = vunpack.c.h.b16 %v490
    %v552 = vunpack.c.l.b16 %v491
    %v553 = vunpack.c.h.b16 %v491
    %v554 = vunpack.c.l.b16 %v492
    %v555 = vunpack.c.h.b16 %v492
    %v556 = vunpack.c.l.b16 %v493
    %v557 = vunpack.c.h.b16 %v493
    %v558 = vunpack.c.l.b16 %v494
    %v559 = vunpack.c.h.b16 %v494
    %v560 = vunpack.c.l.b16 %v495
    %v561 = vunpack.c.h.b16 %v495
    %v562 = vunpack.c.l.b16 %v496
    %v563 = vunpack.c.h.b16 %v496
    %v564 = vunpack.c.l.b16 %v497
    %v565 = vunpack.c.h.b16 %v497
    %v566 = vunpack.c.l.b16 %v498
    %v567 = vunpack.c.h.b16 %v498
    %v568 = vunpack.c.l.b16 %v499
    %v569 = vunpack.c.h.b16 %v499
    %v570 = vunpack.c.l.b16 %v500
    %v571 = vunpack.c.h.b16 %v500
    %v572 = vunpack.c.l.b16 %v501
    %v573 = vunpack.c.h.b16 %v501
    %v574 = vpack.c.b16 %v528, %v526
    %v575 = vpack.c.b16 %v529, %v527
    %v576 = vpack.c.b16 %v532, %v530
    %v577 = vpack.c.b16 %v533, %v531
    %v578 = vpack.c.b16 %v536, %v534
    %v579 = vpack.c.b16 %v537, %v535
    %v580 = vpack.c.b16 %v540, %v538
    %v581 = vpack.c.b16 %v541, %v539
    %v582 = vpack.c.b16 %v544, %v542
    %v583 = vpack.c.b16 %v545, %v543
    %v584 = vpack.c.b16 %v548, %v546
    %v585 = vpack.c.b16 %v549, %v547
    %v586 = vpack.c.b16 %v552, %v550
    %v587 = vpack.c.b16 %v553, %v551
    %v588 = vpack.c.b16 %v556, %v554
    %v589 = vpack.c.b16 %v557, %v555
    %v590 = vpack.c.b16 %v560, %v558
    %v591 = vpack.c.b16 %v561, %v559
    %v592 = vpack.c.b16 %v564, %v562
    %v593 = vpack.c.b16 %v565, %v563
    %v594 = vpack.c.b16 %v568, %v566
    %v595 = vpack.c.b16 %v569, %v567
    %v596 = vpack.c.b16 %v572, %v570
    %v597 = vpack.c.b16 %v573, %v571
    %vm622 = vcmask 523264
    %v624 = vsel %vm622, %v470, 0
    %v627 = vsel %vm622, %v472, 0
    %v630 = vsel %vm622, %v474, 0
    %v633 = vsel %vm622, %v476, 0
    %635 = vmatprep.subr.bf16.mxu0 %v589
    %636 = vmatpush1.bf16.msra.mxu0 %v588
    %637 = vmatprep.subr.bf16.mxu0 %v587
    %638 = vmatpush1.bf16.msra.mxu0 %v586
    %639 = vmatprep.subr.bf16.mxu0 %v585
    %640 = vmatpush1.bf16.msra.mxu0 %v584
    %641 = vmatprep.subr.bf16.mxu0 %v583
    %642 = vmatpush1.bf16.msra.mxu0 %v582
    %643 = vmatprep.subr.bf16.mxu0 %v581
    %644 = vmatpush1.bf16.msra.mxu0 %v580
    %645 = vmatprep.subr.bf16.mxu0 %v579
    %646 = vmatpush1.bf16.msra.mxu0 %v578
    %647 = vmatprep.subr.bf16.mxu0 %v577
    %648 = vmatpush1.bf16.msra.mxu0 %v576
    %649 = vmatprep.subr.bf16.mxu0 %v575
    %650 = vmatpush1.bf16.msra.mxu0 %v574
    %651 = vmatprep.subr.bf16.mxu0 0
    %652 = vmatpush2.bf16.msra.mxu0 0
    %653 = vmatprep.subr.bf16.mxu0 0
    %654 = vmatpush2.bf16.msra.mxu0 0
    %655 = vmatprep.subr.bf16.mxu0 0
    %656 = vmatpush2.bf16.msra.mxu0 0
    %657 = vmatprep.subr.bf16.mxu0 0
    %658 = vmatpush2.bf16.msra.mxu0 0
    %659 = vmatprep.subr.bf16.mxu0 %v597
    %660 = vmatpush2.bf16.msra.mxu0 %v596
    %661 = vmatprep.subr.bf16.mxu0 %v595
    %662 = vmatpush2.bf16.msra.mxu0 %v594
    %663 = vmatprep.subr.bf16.mxu0 %v593
    %664 = vmatpush2.bf16.msra.mxu0 %v592
    %665 = vmatprep.subr.bf16.mxu0 %v591
    %666 = vmatpush2.bf16.msra.mxu0 %v590
    %667 = vmatprep.mubr.bf16.mxu0 %v624
    %668 = vmatmul.mubr.bf16.gmra.mxu0 %v469
    %v669 = vpop.f32.mrf.mxu0
    %v670 = vadd.f32 0.0, %v669
    %v671 = vpop.f32.mrf.mxu0
    %v672 = vadd.f32 0.0, %v671
    %v673 = vpop.f32.mrf.mxu0
    %v674 = vadd.f32 0.0, %v673
    %v675 = vpop.f32.mrf.mxu0
    %v676 = vadd.f32 0.0, %v675
    %677 = vmatprep.mubr.bf16.mxu0 %v627
    %678 = vmatmul.mubr.bf16.gmra.mxu0 %v471
    %v679 = vpop.f32.mrf.mxu0
    %v680 = vadd.f32 0.0, %v679
    %v681 = vpop.f32.mrf.mxu0
    %v682 = vadd.f32 0.0, %v681
    %v683 = vpop.f32.mrf.mxu0
    %v684 = vadd.f32 0.0, %v683
    %v685 = vpop.f32.mrf.mxu0
    %v686 = vadd.f32 0.0, %v685
    %687 = vmatprep.mubr.bf16.mxu0 %v630
    %688 = vmatmul.mubr.bf16.gmra.mxu0 %v473
    %v689 = vpop.f32.mrf.mxu0
    %v690 = vadd.f32 0.0, %v689
    %v691 = vpop.f32.mrf.mxu0
    %v692 = vadd.f32 0.0, %v691
    %v693 = vpop.f32.mrf.mxu0
    %v694 = vadd.f32 0.0, %v693
    %v695 = vpop.f32.mrf.mxu0
    %v696 = vadd.f32 0.0, %v695
    %697 = vmatprep.mubr.bf16.mxu0 %v633
    %698 = vmatmul.mubr.bf16.gmra.mxu0 %v475
    %v699 = vpop.f32.mrf.mxu0
    %v700 = vadd.f32 0.0, %v699
    %v701 = vpop.f32.mrf.mxu0
    %v702 = vadd.f32 0.0, %v701
    %v703 = vpop.f32.mrf.mxu0
    %v704 = vadd.f32 0.0, %v703
    %v705 = vpop.f32.mrf.mxu0
    %v706 = vadd.f32 0.0, %v705
    %707 = vdwg.mxu0
    %v732 = vunpack.c.l.b16 %v339
    %v733 = vunpack.c.h.b16 %v339
    %v734 = vunpack.c.l.b16 %v340
    %v735 = vunpack.c.h.b16 %v340
    %v736 = vunpack.c.l.b16 %v341
    %v737 = vunpack.c.h.b16 %v341
    %v738 = vunpack.c.l.b16 %v342
    %v739 = vunpack.c.h.b16 %v342
    %v740 = vunpack.c.l.b16 %v343
    %v741 = vunpack.c.h.b16 %v343
    %v742 = vunpack.c.l.b16 %v344
    %v743 = vunpack.c.h.b16 %v344
    %v744 = vunpack.c.l.b16 %v345
    %v745 = vunpack.c.h.b16 %v345
    %v746 = vunpack.c.l.b16 %v346
    %v747 = vunpack.c.h.b16 %v346
    %v748 = vunpack.c.l.b16 %v347
    %v749 = vunpack.c.h.b16 %v347
    %v750 = vunpack.c.l.b16 %v348
    %v751 = vunpack.c.h.b16 %v348
    %v752 = vunpack.c.l.b16 %v349
    %v753 = vunpack.c.h.b16 %v349
    %v754 = vunpack.c.l.b16 %v350
    %v755 = vunpack.c.h.b16 %v350
    %v756 = vunpack.c.l.b16 %v351
    %v757 = vunpack.c.h.b16 %v351
    %v758 = vunpack.c.l.b16 %v352
    %v759 = vunpack.c.h.b16 %v352
    %v760 = vunpack.c.l.b16 %v353
    %v761 = vunpack.c.h.b16 %v353
    %v762 = vunpack.c.l.b16 %v354
    %v763 = vunpack.c.h.b16 %v354
    %v764 = vunpack.c.l.b16 %v355
    %v765 = vunpack.c.h.b16 %v355
    %v766 = vunpack.c.l.b16 %v356
    %v767 = vunpack.c.h.b16 %v356
    %v768 = vunpack.c.l.b16 %v357
    %v769 = vunpack.c.h.b16 %v357
    %v770 = vunpack.c.l.b16 %v358
    %v771 = vunpack.c.h.b16 %v358
    %v772 = vunpack.c.l.b16 %v359
    %v773 = vunpack.c.h.b16 %v359
    %v774 = vunpack.c.l.b16 %v360
    %v775 = vunpack.c.h.b16 %v360
    %v776 = vunpack.c.l.b16 %v361
    %v777 = vunpack.c.h.b16 %v361
    %v778 = vunpack.c.l.b16 %v362
    %v779 = vunpack.c.h.b16 %v362
    %v780 = vpack.c.b16 %v734, %v732
    %v781 = vpack.c.b16 %v735, %v733
    %v782 = vpack.c.b16 %v738, %v736
    %v783 = vpack.c.b16 %v739, %v737
    %v784 = vpack.c.b16 %v742, %v740
    %v785 = vpack.c.b16 %v743, %v741
    %v786 = vpack.c.b16 %v746, %v744
    %v787 = vpack.c.b16 %v747, %v745
    %v788 = vpack.c.b16 %v750, %v748
    %v789 = vpack.c.b16 %v751, %v749
    %v790 = vpack.c.b16 %v754, %v752
    %v791 = vpack.c.b16 %v755, %v753
    %v792 = vpack.c.b16 %v758, %v756
    %v793 = vpack.c.b16 %v759, %v757
    %v794 = vpack.c.b16 %v762, %v760
    %v795 = vpack.c.b16 %v763, %v761
    %v796 = vpack.c.b16 %v766, %v764
    %v797 = vpack.c.b16 %v767, %v765
    %v798 = vpack.c.b16 %v770, %v768
    %v799 = vpack.c.b16 %v771, %v769
    %v800 = vpack.c.b16 %v774, %v772
    %v801 = vpack.c.b16 %v775, %v773
    %v802 = vpack.c.b16 %v778, %v776
    %v803 = vpack.c.b16 %v779, %v777
    %v829 = vsel %vm622, %v332, 0
    %v832 = vsel %vm622, %v334, 0
    %v835 = vsel %vm622, %v336, 0
    %v838 = vsel %vm622, %v338, 0
    %840 = vmatprep.subr.bf16.mxu0 %v795
    %841 = vmatpush1.bf16.msra.mxu0 %v794
    %842 = vmatprep.subr.bf16.mxu0 %v793
    %843 = vmatpush1.bf16.msra.mxu0 %v792
    %844 = vmatprep.subr.bf16.mxu0 %v791
    %845 = vmatpush1.bf16.msra.mxu0 %v790
    %846 = vmatprep.subr.bf16.mxu0 %v789
    %847 = vmatpush1.bf16.msra.mxu0 %v788
    %848 = vmatprep.subr.bf16.mxu0 %v787
    %849 = vmatpush1.bf16.msra.mxu0 %v786
    %850 = vmatprep.subr.bf16.mxu0 %v785
    %851 = vmatpush1.bf16.msra.mxu0 %v784
    %852 = vmatprep.subr.bf16.mxu0 %v783
    %853 = vmatpush1.bf16.msra.mxu0 %v782
    %854 = vmatprep.subr.bf16.mxu0 %v781
    %855 = vmatpush1.bf16.msra.mxu0 %v780
    %856 = vmatprep.subr.bf16.mxu0 0
    %857 = vmatpush2.bf16.msra.mxu0 0
    %858 = vmatprep.subr.bf16.mxu0 0
    %859 = vmatpush2.bf16.msra.mxu0 0
    %860 = vmatprep.subr.bf16.mxu0 0
    %861 = vmatpush2.bf16.msra.mxu0 0
    %862 = vmatprep.subr.bf16.mxu0 0
    %863 = vmatpush2.bf16.msra.mxu0 0
    %864 = vmatprep.subr.bf16.mxu0 %v803
    %865 = vmatpush2.bf16.msra.mxu0 %v802
    %866 = vmatprep.subr.bf16.mxu0 %v801
    %867 = vmatpush2.bf16.msra.mxu0 %v800
    %868 = vmatprep.subr.bf16.mxu0 %v799
    %869 = vmatpush2.bf16.msra.mxu0 %v798
    %870 = vmatprep.subr.bf16.mxu0 %v797
    %871 = vmatpush2.bf16.msra.mxu0 %v796
    %872 = vmatprep.mubr.bf16.mxu0 %v829
    %873 = vmatmul.mubr.bf16.gmra.mxu0 %v331
    %v874 = vpop.f32.mrf.mxu0
    %v875 = vadd.f32 %v670, %v874
    %v876 = vpop.f32.mrf.mxu0
    %v877 = vadd.f32 %v672, %v876
    %v878 = vpop.f32.mrf.mxu0
    %v879 = vadd.f32 %v674, %v878
    %v880 = vpop.f32.mrf.mxu0
    %v881 = vadd.f32 %v676, %v880
    %882 = vmatprep.mubr.bf16.mxu0 %v832
    %883 = vmatmul.mubr.bf16.gmra.mxu0 %v333
    %v884 = vpop.f32.mrf.mxu0
    %v885 = vadd.f32 %v680, %v884
    %v886 = vpop.f32.mrf.mxu0
    %v887 = vadd.f32 %v682, %v886
    %v888 = vpop.f32.mrf.mxu0
    %v889 = vadd.f32 %v684, %v888
    %v890 = vpop.f32.mrf.mxu0
    %v891 = vadd.f32 %v686, %v890
    %892 = vmatprep.mubr.bf16.mxu0 %v835
    %893 = vmatmul.mubr.bf16.gmra.mxu0 %v335
    %v894 = vpop.f32.mrf.mxu0
    %v895 = vadd.f32 %v690, %v894
    %v896 = vpop.f32.mrf.mxu0
    %v897 = vadd.f32 %v692, %v896
    %v898 = vpop.f32.mrf.mxu0
    %v899 = vadd.f32 %v694, %v898
    %v900 = vpop.f32.mrf.mxu0
    %v901 = vadd.f32 %v696, %v900
    %902 = vmatprep.mubr.bf16.mxu0 %v838
    %903 = vmatmul.mubr.bf16.gmra.mxu0 %v337
    %v904 = vpop.f32.mrf.mxu0
    %v905 = vadd.f32 %v700, %v904
    %v906 = vpop.f32.mrf.mxu0
    %v907 = vadd.f32 %v702, %v906
    %v908 = vpop.f32.mrf.mxu0
    %v909 = vadd.f32 %v704, %v908
    %v910 = vpop.f32.mrf.mxu0
    %v911 = vadd.f32 %v706, %v910
    %912 = vdwg.mxu0
    %s913 = scalar_lea.vmem %s1, 64
    %v914 = vld [vmem:[%s913] sm:$0xf]
    %v915 = vld [vmem:[%s913 + $0x4] sm:$0xf]
    %v916 = vld [vmem:[%s913 + $0x8] sm:$0xf]
    %v917 = vld [vmem:[%s913 + $0xc] sm:$0xf]
    %v918 = vld [vmem:[%s913 + $0x10] sm:$0xf]
    %v919 = vld [vmem:[%s913 + $0x14] sm:$0xf]
    %v920 = vld [vmem:[%s913 + $0x18] sm:$0xf]
    %v921 = vld [vmem:[%s913 + $0x1c] sm:$0xf]
    %v930 = vunpack.c.l.b16 %v914
    %v931 = vunpack.c.l.b16 %v915
    %v932 = vunpack.c.l.b16 %v916
    %v933 = vunpack.c.l.b16 %v917
    %v934 = vunpack.c.l.b16 %v918
    %v935 = vunpack.c.l.b16 %v919
    %v936 = vunpack.c.l.b16 %v920
    %v937 = vunpack.c.l.b16 %v921
    %v938 = vpack.c.b16 %v931, %v930
    %v939 = vpack.c.b16 %v933, %v932
    %v940 = vpack.c.b16 %v935, %v934
    %v941 = vpack.c.b16 %v937, %v936
    %946 = vmatprep.subr.bf16.mxu0 %v241
    %947 = vmatpush1.bf16.msra.mxu0 %v240
    %948 = vmatprep.subr.bf16.mxu0 %v239
    %949 = vmatpush1.bf16.msra.mxu0 %v238
    %950 = vmatprep.subr.bf16.mxu0 %v237
    %951 = vmatpush1.bf16.msra.mxu0 %v236
    %952 = vmatprep.subr.bf16.mxu0 %v235
    %953 = vmatpush1.bf16.msra.mxu0 %v234
    %954 = vmatprep.subr.bf16.mxu0 %v233
    %955 = vmatpush1.bf16.msra.mxu0 %v232
    %956 = vmatprep.subr.bf16.mxu0 %v231
    %957 = vmatpush1.bf16.msra.mxu0 %v230
    %958 = vmatprep.subr.bf16.mxu0 %v229
    %959 = vmatpush1.bf16.msra.mxu0 %v228
    %960 = vmatprep.subr.bf16.mxu0 %v227
    %961 = vmatpush1.bf16.msra.mxu0 %v226
    %962 = vmatprep.subr.bf16.mxu0 0
    %963 = vmatpush2.bf16.msra.mxu0 0
    %964 = vmatprep.subr.bf16.mxu0 0
    %965 = vmatpush2.bf16.msra.mxu0 0
    %966 = vmatprep.subr.bf16.mxu0 0
    %967 = vmatpush2.bf16.msra.mxu0 0
    %968 = vmatprep.subr.bf16.mxu0 0
    %969 = vmatpush2.bf16.msra.mxu0 0
    %970 = vmatprep.subr.bf16.mxu0 0
    %971 = vmatpush2.bf16.msra.mxu0 0
    %972 = vmatprep.subr.bf16.mxu0 0
    %973 = vmatpush2.bf16.msra.mxu0 0
    %974 = vmatprep.subr.bf16.mxu0 0
    %975 = vmatpush2.bf16.msra.mxu0 0
    %976 = vmatprep.subr.bf16.mxu0 0
    %977 = vmatpush2.bf16.msra.mxu0 0
    %978 = vmatprep.mubr.bf16.mxu0 0
    %979 = vmatmul.mubr.bf16.gmra.mxu0 %v938
    %v980 = vpop.f32.mrf.mxu0
    %v981 = vadd.f32 0.0, %v980
    %v982 = vpop.f32.mrf.mxu0
    %v983 = vadd.f32 0.0, %v982
    %v984 = vpop.f32.mrf.mxu0
    %v985 = vadd.f32 0.0, %v984
    %v986 = vpop.f32.mrf.mxu0
    %v987 = vadd.f32 0.0, %v986
    %988 = vmatprep.mubr.bf16.mxu0 0
    %989 = vmatmul.mubr.bf16.gmra.mxu0 %v939
    %v990 = vpop.f32.mrf.mxu0
    %v991 = vadd.f32 0.0, %v990
    %v992 = vpop.f32.mrf.mxu0
    %v993 = vadd.f32 0.0, %v992
    %v994 = vpop.f32.mrf.mxu0
    %v995 = vadd.f32 0.0, %v994
    %v996 = vpop.f32.mrf.mxu0
    %v997 = vadd.f32 0.0, %v996
    %998 = vmatprep.mubr.bf16.mxu0 0
    %999 = vmatmul.mubr.bf16.gmra.mxu0 %v940
    %v1000 = vpop.f32.mrf.mxu0
    %v1001 = vadd.f32 0.0, %v1000
    %v1002 = vpop.f32.mrf.mxu0
    %v1003 = vadd.f32 0.0, %v1002
    %v1004 = vpop.f32.mrf.mxu0
    %v1005 = vadd.f32 0.0, %v1004
    %v1006 = vpop.f32.mrf.mxu0
    %v1007 = vadd.f32 0.0, %v1006
    %1008 = vmatprep.mubr.bf16.mxu0 0
    %1009 = vmatmul.mubr.bf16.gmra.mxu0 %v941
    %v1010 = vpop.f32.mrf.mxu0
    %v1011 = vadd.f32 0.0, %v1010
    %v1012 = vpop.f32.mrf.mxu0
    %v1013 = vadd.f32 0.0, %v1012
    %v1014 = vpop.f32.mrf.mxu0
    %v1015 = vadd.f32 0.0, %v1014
    %v1016 = vpop.f32.mrf.mxu0
    %v1017 = vadd.f32 0.0, %v1016
    %1018 = vdwg.mxu0
    %v1019 = vpack.c.bf16 %v985, %v981
    %v1020 = vpack.c.bf16 %v987, %v983
    %v1021 = vpack.c.bf16 %v995, %v991
    %v1022 = vpack.c.bf16 %v997, %v993
    %v1023 = vpack.c.bf16 %v1005, %v1001
    %v1024 = vpack.c.bf16 %v1007, %v1003
    %v1025 = vpack.c.bf16 %v1015, %v1011
    %v1026 = vpack.c.bf16 %v1017, %v1013
    %s1027 = scalar_lea.vmem [#allocation2], 384
    %v1028 = vld [vmem:[%s1027] sm:$0xff]
    %v1029 = vld [vmem:[%s1027 + $0x8] sm:$0xff]
    %v1030 = vld [vmem:[%s1027 + $0x10] sm:$0xff]
    %v1031 = vld [vmem:[%s1027 + $0x18] sm:$0xff]
    %v1032 = vld [vmem:[%s1027 + $0x20] sm:$0xff]
    %v1033 = vld [vmem:[%s1027 + $0x28] sm:$0xff]
    %v1034 = vld [vmem:[%s1027 + $0x30] sm:$0xff]
    %v1035 = vld [vmem:[%s1027 + $0x38] sm:$0xff]
    %v1036 = vld [vmem:[%s1027 + $0x40] sm:$0xff]
    %v1037 = vld [vmem:[%s1027 + $0x48] sm:$0xff]
    %v1038 = vld [vmem:[%s1027 + $0x50] sm:$0xff]
    %v1039 = vld [vmem:[%s1027 + $0x58] sm:$0xff]
    %v1040 = vld [vmem:[%s1027 + $0x60] sm:$0xff]
    %v1041 = vld [vmem:[%s1027 + $0x68] sm:$0xff]
    %v1042 = vld [vmem:[%s1027 + $0x70] sm:$0xff]
    %v1043 = vld [vmem:[%s1027 + $0x78] sm:$0xff]
    %v1044 = vld [vmem:[%s1027 + $0x80] sm:$0xff]
    %v1045 = vld [vmem:[%s1027 + $0x88] sm:$0xff]
    %v1046 = vld [vmem:[%s1027 + $0x90] sm:$0xff]
    %v1047 = vld [vmem:[%s1027 + $0x98] sm:$0xff]
    %v1048 = vld [vmem:[%s1027 + $0xa0] sm:$0xff]
    %v1049 = vld [vmem:[%s1027 + $0xa8] sm:$0xff]
    %v1050 = vld [vmem:[%s1027 + $0xb0] sm:$0xff]
    %v1051 = vld [vmem:[%s1027 + $0xb8] sm:$0xff]
    %v1076 = vunpack.c.l.b16 %v1028
    %v1077 = vunpack.c.h.b16 %v1028
    %v1078 = vunpack.c.l.b16 %v1029
    %v1079 = vunpack.c.h.b16 %v1029
    %v1080 = vunpack.c.l.b16 %v1030
    %v1081 = vunpack.c.h.b16 %v1030
    %v1082 = vunpack.c.l.b16 %v1031
    %v1083 = vunpack.c.h.b16 %v1031
    %v1084 = vunpack.c.l.b16 %v1032
    %v1085 = vunpack.c.h.b16 %v1032
    %v1086 = vunpack.c.l.b16 %v1033
    %v1087 = vunpack.c.h.b16 %v1033
    %v1088 = vunpack.c.l.b16 %v1034
    %v1089 = vunpack.c.h.b16 %v1034
    %v1090 = vunpack.c.l.b16 %v1035
    %v1091 = vunpack.c.h.b16 %v1035
    %v1092 = vunpack.c.l.b16 %v1036
    %v1093 = vunpack.c.h.b16 %v1036
    %v1094 = vunpack.c.l.b16 %v1037
    %v1095 = vunpack.c.h.b16 %v1037
    %v1096 = vunpack.c.l.b16 %v1038
    %v1097 = vunpack.c.h.b16 %v1038
    %v1098 = vunpack.c.l.b16 %v1039
    %v1099 = vunpack.c.h.b16 %v1039
    %v1100 = vunpack.c.l.b16 %v1040
    %v1101 = vunpack.c.h.b16 %v1040
    %v1102 = vunpack.c.l.b16 %v1041
    %v1103 = vunpack.c.h.b16 %v1041
    %v1104 = vunpack.c.l.b16 %v1042
    %v1105 = vunpack.c.h.b16 %v1042
    %v1106 = vunpack.c.l.b16 %v1043
    %v1107 = vunpack.c.h.b16 %v1043
    %v1108 = vunpack.c.l.b16 %v1044
    %v1109 = vunpack.c.h.b16 %v1044
    %v1110 = vunpack.c.l.b16 %v1045
    %v1111 = vunpack.c.h.b16 %v1045
    %v1112 = vunpack.c.l.b16 %v1046
    %v1113 = vunpack.c.h.b16 %v1046
    %v1114 = vunpack.c.l.b16 %v1047
    %v1115 = vunpack.c.h.b16 %v1047
    %v1116 = vunpack.c.l.b16 %v1048
    %v1117 = vunpack.c.h.b16 %v1048
    %v1118 = vunpack.c.l.b16 %v1049
    %v1119 = vunpack.c.h.b16 %v1049
    %v1120 = vunpack.c.l.b16 %v1050
    %v1121 = vunpack.c.h.b16 %v1050
    %v1122 = vunpack.c.l.b16 %v1051
    %v1123 = vunpack.c.h.b16 %v1051
    %v1124 = vpack.c.b16 %v1078, %v1076
    %v1125 = vpack.c.b16 %v1079, %v1077
    %v1126 = vpack.c.b16 %v1082, %v1080
    %v1127 = vpack.c.b16 %v1083, %v1081
    %v1128 = vpack.c.b16 %v1086, %v1084
    %v1129 = vpack.c.b16 %v1087, %v1085
    %v1130 = vpack.c.b16 %v1090, %v1088
    %v1131 = vpack.c.b16 %v1091, %v1089
    %v1132 = vpack.c.b16 %v1094, %v1092
    %v1133 = vpack.c.b16 %v1095, %v1093
    %v1134 = vpack.c.b16 %v1098, %v1096
    %v1135 = vpack.c.b16 %v1099, %v1097
    %v1136 = vpack.c.b16 %v1102, %v1100
    %v1137 = vpack.c.b16 %v1103, %v1101
    %v1138 = vpack.c.b16 %v1106, %v1104
    %v1139 = vpack.c.b16 %v1107, %v1105
    %v1140 = vpack.c.b16 %v1110, %v1108
    %v1141 = vpack.c.b16 %v1111, %v1109
    %v1142 = vpack.c.b16 %v1114, %v1112
    %v1143 = vpack.c.b16 %v1115, %v1113
    %v1144 = vpack.c.b16 %v1118, %v1116
    %v1145 = vpack.c.b16 %v1119, %v1117
    %v1146 = vpack.c.b16 %v1122, %v1120
    %v1147 = vpack.c.b16 %v1123, %v1121
    %v1173 = vsel %vm622, %v1020, 0
    %v1176 = vsel %vm622, %v1022, 0
    %v1179 = vsel %vm622, %v1024, 0
    %v1182 = vsel %vm622, %v1026, 0
    %1184 = vmatprep.subr.bf16.mxu0 %v1139
    %1185 = vmatpush1.bf16.msra.mxu0 %v1138
    %1186 = vmatprep.subr.bf16.mxu0 %v1137
    %1187 = vmatpush1.bf16.msra.mxu0 %v1136
    %1188 = vmatprep.subr.bf16.mxu0 %v1135
    %1189 = vmatpush1.bf16.msra.mxu0 %v1134
    %1190 = vmatprep.subr.bf16.mxu0 %v1133
    %1191 = vmatpush1.bf16.msra.mxu0 %v1132
    %1192 = vmatprep.subr.bf16.mxu0 %v1131
    %1193 = vmatpush1.bf16.msra.mxu0 %v1130
    %1194 = vmatprep.subr.bf16.mxu0 %v1129
    %1195 = vmatpush1.bf16.msra.mxu0 %v1128
    %1196 = vmatprep.subr.bf16.mxu0 %v1127
    %1197 = vmatpush1.bf16.msra.mxu0 %v1126
    %1198 = vmatprep.subr.bf16.mxu0 %v1125
    %1199 = vmatpush1.bf16.msra.mxu0 %v1124
    %1200 = vmatprep.subr.bf16.mxu0 0
    %1201 = vmatpush2.bf16.msra.mxu0 0
    %1202 = vmatprep.subr.bf16.mxu0 0
    %1203 = vmatpush2.bf16.msra.mxu0 0
    %1204 = vmatprep.subr.bf16.mxu0 0
    %1205 = vmatpush2.bf16.msra.mxu0 0
    %1206 = vmatprep.subr.bf16.mxu0 0
    %1207 = vmatpush2.bf16.msra.mxu0 0
    %1208 = vmatprep.subr.bf16.mxu0 %v1147
    %1209 = vmatpush2.bf16.msra.mxu0 %v1146
    %1210 = vmatprep.subr.bf16.mxu0 %v1145
    %1211 = vmatpush2.bf16.msra.mxu0 %v1144
    %1212 = vmatprep.subr.bf16.mxu0 %v1143
    %1213 = vmatpush2.bf16.msra.mxu0 %v1142
    %1214 = vmatprep.subr.bf16.mxu0 %v1141
    %1215 = vmatpush2.bf16.msra.mxu0 %v1140
    %1216 = vmatprep.mubr.bf16.mxu0 %v1173
    %1217 = vmatmul.mubr.bf16.gmra.mxu0 %v1019
    %v1218 = vpop.f32.mrf.mxu0
    %v1219 = vadd.f32 0.0, %v1218
    %v1220 = vpop.f32.mrf.mxu0
    %v1221 = vadd.f32 0.0, %v1220
    %v1222 = vpop.f32.mrf.mxu0
    %v1223 = vadd.f32 0.0, %v1222
    %v1224 = vpop.f32.mrf.mxu0
    %v1225 = vadd.f32 0.0, %v1224
    %1226 = vmatprep.mubr.bf16.mxu0 %v1176
    %1227 = vmatmul.mubr.bf16.gmra.mxu0 %v1021
    %v1228 = vpop.f32.mrf.mxu0
    %v1229 = vadd.f32 0.0, %v1228
    %v1230 = vpop.f32.mrf.mxu0
    %v1231 = vadd.f32 0.0, %v1230
    %v1232 = vpop.f32.mrf.mxu0
    %v1233 = vadd.f32 0.0, %v1232
    %v1234 = vpop.f32.mrf.mxu0
    %v1235 = vadd.f32 0.0, %v1234
    %1236 = vmatprep.mubr.bf16.mxu0 %v1179
    %1237 = vmatmul.mubr.bf16.gmra.mxu0 %v1023
    %v1238 = vpop.f32.mrf.mxu0
    %v1239 = vadd.f32 0.0, %v1238
    %v1240 = vpop.f32.mrf.mxu0
    %v1241 = vadd.f32 0.0, %v1240
    %v1242 = vpop.f32.mrf.mxu0
    %v1243 = vadd.f32 0.0, %v1242
    %v1244 = vpop.f32.mrf.mxu0
    %v1245 = vadd.f32 0.0, %v1244
    %1246 = vmatprep.mubr.bf16.mxu0 %v1182
    %1247 = vmatmul.mubr.bf16.gmra.mxu0 %v1025
    %v1248 = vpop.f32.mrf.mxu0
    %v1249 = vadd.f32 0.0, %v1248
    %v1250 = vpop.f32.mrf.mxu0
    %v1251 = vadd.f32 0.0, %v1250
    %v1252 = vpop.f32.mrf.mxu0
    %v1253 = vadd.f32 0.0, %v1252
    %v1254 = vpop.f32.mrf.mxu0
    %v1255 = vadd.f32 0.0, %v1254
    %1256 = vdwg.mxu0
    %v1257 = vadd.f32 %v875, %v1219
    %v1258 = vadd.f32 %v877, %v1221
    %v1259 = vadd.f32 %v879, %v1223
    %v1260 = vadd.f32 %v881, %v1225
    %v1261 = vadd.f32 %v885, %v1229
    %v1262 = vadd.f32 %v887, %v1231
    %v1263 = vadd.f32 %v889, %v1233
    %v1264 = vadd.f32 %v891, %v1235
    %v1265 = vadd.f32 %v895, %v1239
    %v1266 = vadd.f32 %v897, %v1241
    %v1267 = vadd.f32 %v899, %v1243
    %v1268 = vadd.f32 %v901, %v1245
    %v1269 = vadd.f32 %v905, %v1249
    %v1270 = vadd.f32 %v907, %v1251
    %v1271 = vadd.f32 %v909, %v1253
    %v1272 = vadd.f32 %v911, %v1255
    %s1273 = scalar_lea.vmem %s1, 96
    %v1274 = vld [vmem:[%s1273] sm:$0xf]
    %v1275 = vld [vmem:[%s1273 + $0x4] sm:$0xf]
    %v1276 = vld [vmem:[%s1273 + $0x8] sm:$0xf]
    %v1277 = vld [vmem:[%s1273 + $0xc] sm:$0xf]
    %v1278 = vld [vmem:[%s1273 + $0x10] sm:$0xf]
    %v1279 = vld [vmem:[%s1273 + $0x14] sm:$0xf]
    %v1280 = vld [vmem:[%s1273 + $0x18] sm:$0xf]
    %v1281 = vld [vmem:[%s1273 + $0x1c] sm:$0xf]
    %v1290 = vunpack.c.l.b16 %v1274
    %v1291 = vunpack.c.l.b16 %v1275
    %v1292 = vunpack.c.l.b16 %v1276
    %v1293 = vunpack.c.l.b16 %v1277
    %v1294 = vunpack.c.l.b16 %v1278
    %v1295 = vunpack.c.l.b16 %v1279
    %v1296 = vunpack.c.l.b16 %v1280
    %v1297 = vunpack.c.l.b16 %v1281
    %v1298 = vpack.c.b16 %v1291, %v1290
    %v1299 = vpack.c.b16 %v1293, %v1292
    %v1300 = vpack.c.b16 %v1295, %v1294
    %v1301 = vpack.c.b16 %v1297, %v1296
    %1306 = vmatprep.subr.bf16.mxu0 %v241
    %1307 = vmatpush1.bf16.msra.mxu0 %v240
    %1308 = vmatprep.subr.bf16.mxu0 %v239
    %1309 = vmatpush1.bf16.msra.mxu0 %v238
    %1310 = vmatprep.subr.bf16.mxu0 %v237
    %1311 = vmatpush1.bf16.msra.mxu0 %v236
    %1312 = vmatprep.subr.bf16.mxu0 %v235
    %1313 = vmatpush1.bf16.msra.mxu0 %v234
    %1314 = vmatprep.subr.bf16.mxu0 %v233
    %1315 = vmatpush1.bf16.msra.mxu0 %v232
    %1316 = vmatprep.subr.bf16.mxu0 %v231
    %1317 = vmatpush1.bf16.msra.mxu0 %v230
    %1318 = vmatprep.subr.bf16.mxu0 %v229
    %1319 = vmatpush1.bf16.msra.mxu0 %v228
    %1320 = vmatprep.subr.bf16.mxu0 %v227
    %1321 = vmatpush1.bf16.msra.mxu0 %v226
    %1322 = vmatprep.subr.bf16.mxu0 0
    %1323 = vmatpush2.bf16.msra.mxu0 0
    %1324 = vmatprep.subr.bf16.mxu0 0
    %1325 = vmatpush2.bf16.msra.mxu0 0
    %1326 = vmatprep.subr.bf16.mxu0 0
    %1327 = vmatpush2.bf16.msra.mxu0 0
    %1328 = vmatprep.subr.bf16.mxu0 0
    %1329 = vmatpush2.bf16.msra.mxu0 0
    %1330 = vmatprep.subr.bf16.mxu0 0
    %1331 = vmatpush2.bf16.msra.mxu0 0
    %1332 = vmatprep.subr.bf16.mxu0 0
    %1333 = vmatpush2.bf16.msra.mxu0 0
    %1334 = vmatprep.subr.bf16.mxu0 0
    %1335 = vmatpush2.bf16.msra.mxu0 0
    %1336 = vmatprep.subr.bf16.mxu0 0
    %1337 = vmatpush2.bf16.msra.mxu0 0
    %1338 = vmatprep.mubr.bf16.mxu0 0
    %1339 = vmatmul.mubr.bf16.gmra.mxu0 %v1298
    %v1340 = vpop.f32.mrf.mxu0
    %v1341 = vadd.f32 0.0, %v1340
    %v1342 = vpop.f32.mrf.mxu0
    %v1343 = vadd.f32 0.0, %v1342
    %v1344 = vpop.f32.mrf.mxu0
    %v1345 = vadd.f32 0.0, %v1344
    %v1346 = vpop.f32.mrf.mxu0
    %v1347 = vadd.f32 0.0, %v1346
    %1348 = vmatprep.mubr.bf16.mxu0 0
    %1349 = vmatmul.mubr.bf16.gmra.mxu0 %v1299
    %v1350 = vpop.f32.mrf.mxu0
    %v1351 = vadd.f32 0.0, %v1350
    %v1352 = vpop.f32.mrf.mxu0
    %v1353 = vadd.f32 0.0, %v1352
    %v1354 = vpop.f32.mrf.mxu0
    %v1355 = vadd.f32 0.0, %v1354
    %v1356 = vpop.f32.mrf.mxu0
    %v1357 = vadd.f32 0.0, %v1356
    %1358 = vmatprep.mubr.bf16.mxu0 0
    %1359 = vmatmul.mubr.bf16.gmra.mxu0 %v1300
    %v1360 = vpop.f32.mrf.mxu0
    %v1361 = vadd.f32 0.0, %v1360
    %v1362 = vpop.f32.mrf.mxu0
    %v1363 = vadd.f32 0.0, %v1362
    %v1364 = vpop.f32.mrf.mxu0
    %v1365 = vadd.f32 0.0, %v1364
    %v1366 = vpop.f32.mrf.mxu0
    %v1367 = vadd.f32 0.0, %v1366
    %1368 = vmatprep.mubr.bf16.mxu0 0
    %1369 = vmatmul.mubr.bf16.gmra.mxu0 %v1301
    %v1370 = vpop.f32.mrf.mxu0
    %v1371 = vadd.f32 0.0, %v1370
    %v1372 = vpop.f32.mrf.mxu0
    %v1373 = vadd.f32 0.0, %v1372
    %v1374 = vpop.f32.mrf.mxu0
    %v1375 = vadd.f32 0.0, %v1374
    %v1376 = vpop.f32.mrf.mxu0
    %v1377 = vadd.f32 0.0, %v1376
    %1378 = vdwg.mxu0
    %v1379 = vpack.c.bf16 %v1345, %v1341
    %v1380 = vpack.c.bf16 %v1347, %v1343
    %v1381 = vpack.c.bf16 %v1355, %v1351
    %v1382 = vpack.c.bf16 %v1357, %v1353
    %v1383 = vpack.c.bf16 %v1365, %v1361
    %v1384 = vpack.c.bf16 %v1367, %v1363
    %v1385 = vpack.c.bf16 %v1375, %v1371
    %v1386 = vpack.c.bf16 %v1377, %v1373
    %s1387 = scalar_lea.vmem [#allocation2], 576
    %v1388 = vld [vmem:[%s1387] sm:$0xff]
    %v1389 = vld [vmem:[%s1387 + $0x8] sm:$0xff]
    %v1390 = vld [vmem:[%s1387 + $0x10] sm:$0xff]
    %v1391 = vld [vmem:[%s1387 + $0x18] sm:$0xff]
    %v1392 = vld [vmem:[%s1387 + $0x20] sm:$0xff]
    %v1393 = vld [vmem:[%s1387 + $0x28] sm:$0xff]
    %v1394 = vld [vmem:[%s1387 + $0x30] sm:$0xff]
    %v1395 = vld [vmem:[%s1387 + $0x38] sm:$0xff]
    %v1396 = vld [vmem:[%s1387 + $0x40] sm:$0xff]
    %v1397 = vld [vmem:[%s1387 + $0x48] sm:$0xff]
    %v1398 = vld [vmem:[%s1387 + $0x50] sm:$0xff]
    %v1399 = vld [vmem:[%s1387 + $0x58] sm:$0xff]
    %v1400 = vld [vmem:[%s1387 + $0x60] sm:$0xff]
    %v1401 = vld [vmem:[%s1387 + $0x68] sm:$0xff]
    %v1402 = vld [vmem:[%s1387 + $0x70] sm:$0xff]
    %v1403 = vld [vmem:[%s1387 + $0x78] sm:$0xff]
    %v1404 = vld [vmem:[%s1387 + $0x80] sm:$0xff]
    %v1405 = vld [vmem:[%s1387 + $0x88] sm:$0xff]
    %v1406 = vld [vmem:[%s1387 + $0x90] sm:$0xff]
    %v1407 = vld [vmem:[%s1387 + $0x98] sm:$0xff]
    %v1408 = vld [vmem:[%s1387 + $0xa0] sm:$0xff]
    %v1409 = vld [vmem:[%s1387 + $0xa8] sm:$0xff]
    %v1410 = vld [vmem:[%s1387 + $0xb0] sm:$0xff]
    %v1411 = vld [vmem:[%s1387 + $0xb8] sm:$0xff]
    %v1436 = vunpack.c.l.b16 %v1388
    %v1437 = vunpack.c.h.b16 %v1388
    %v1438 = vunpack.c.l.b16 %v1389
    %v1439 = vunpack.c.h.b16 %v1389
    %v1440 = vunpack.c.l.b16 %v1390
    %v1441 = vunpack.c.h.b16 %v1390
    %v1442 = vunpack.c.l.b16 %v1391
    %v1443 = vunpack.c.h.b16 %v1391
    %v1444 = vunpack.c.l.b16 %v1392
    %v1445 = vunpack.c.h.b16 %v1392
    %v1446 = vunpack.c.l.b16 %v1393
    %v1447 = vunpack.c.h.b16 %v1393
    %v1448 = vunpack.c.l.b16 %v1394
    %v1449 = vunpack.c.h.b16 %v1394
    %v1450 = vunpack.c.l.b16 %v1395
    %v1451 = vunpack.c.h.b16 %v1395
    %v1452 = vunpack.c.l.b16 %v1396
    %v1453 = vunpack.c.h.b16 %v1396
    %v1454 = vunpack.c.l.b16 %v1397
    %v1455 = vunpack.c.h.b16 %v1397
    %v1456 = vunpack.c.l.b16 %v1398
    %v1457 = vunpack.c.h.b16 %v1398
    %v1458 = vunpack.c.l.b16 %v1399
    %v1459 = vunpack.c.h.b16 %v1399
    %v1460 = vunpack.c.l.b16 %v1400
    %v1461 = vunpack.c.h.b16 %v1400
    %v1462 = vunpack.c.l.b16 %v1401
    %v1463 = vunpack.c.h.b16 %v1401
    %v1464 = vunpack.c.l.b16 %v1402
    %v1465 = vunpack.c.h.b16 %v1402
    %v1466 = vunpack.c.l.b16 %v1403
    %v1467 = vunpack.c.h.b16 %v1403
    %v1468 = vunpack.c.l.b16 %v1404
    %v1469 = vunpack.c.h.b16 %v1404
    %v1470 = vunpack.c.l.b16 %v1405
    %v1471 = vunpack.c.h.b16 %v1405
    %v1472 = vunpack.c.l.b16 %v1406
    %v1473 = vunpack.c.h.b16 %v1406
    %v1474 = vunpack.c.l.b16 %v1407
    %v1475 = vunpack.c.h.b16 %v1407
    %v1476 = vunpack.c.l.b16 %v1408
    %v1477 = vunpack.c.h.b16 %v1408
    %v1478 = vunpack.c.l.b16 %v1409
    %v1479 = vunpack.c.h.b16 %v1409
    %v1480 = vunpack.c.l.b16 %v1410
    %v1481 = vunpack.c.h.b16 %v1410
    %v1482 = vunpack.c.l.b16 %v1411
    %v1483 = vunpack.c.h.b16 %v1411
    %v1484 = vpack.c.b16 %v1438, %v1436
    %v1485 = vpack.c.b16 %v1439, %v1437
    %v1486 = vpack.c.b16 %v1442, %v1440
    %v1487 = vpack.c.b16 %v1443, %v1441
    %v1488 = vpack.c.b16 %v1446, %v1444
    %v1489 = vpack.c.b16 %v1447, %v1445
    %v1490 = vpack.c.b16 %v1450, %v1448
    %v1491 = vpack.c.b16 %v1451, %v1449
    %v1492 = vpack.c.b16 %v1454, %v1452
    %v1493 = vpack.c.b16 %v1455, %v1453
    %v1494 = vpack.c.b16 %v1458, %v1456
    %v1495 = vpack.c.b16 %v1459, %v1457
    %v1496 = vpack.c.b16 %v1462, %v1460
    %v1497 = vpack.c.b16 %v1463, %v1461
    %v1498 = vpack.c.b16 %v1466, %v1464
    %v1499 = vpack.c.b16 %v1467, %v1465
    %v1500 = vpack.c.b16 %v1470, %v1468
    %v1501 = vpack.c.b16 %v1471, %v1469
    %v1502 = vpack.c.b16 %v1474, %v1472
    %v1503 = vpack.c.b16 %v1475, %v1473
    %v1504 = vpack.c.b16 %v1478, %v1476
    %v1505 = vpack.c.b16 %v1479, %v1477
    %v1506 = vpack.c.b16 %v1482, %v1480
    %v1507 = vpack.c.b16 %v1483, %v1481
    %v1533 = vsel %vm622, %v1380, 0
    %v1536 = vsel %vm622, %v1382, 0
    %v1539 = vsel %vm622, %v1384, 0
    %v1542 = vsel %vm622, %v1386, 0
    %1544 = vmatprep.subr.bf16.mxu0 %v1499
    %1545 = vmatpush1.bf16.msra.mxu0 %v1498
    %1546 = vmatprep.subr.bf16.mxu0 %v1497
    %1547 = vmatpush1.bf16.msra.mxu0 %v1496
    %1548 = vmatprep.subr.bf16.mxu0 %v1495
    %1549 = vmatpush1.bf16.msra.mxu0 %v1494
    %1550 = vmatprep.subr.bf16.mxu0 %v1493
    %1551 = vmatpush1.bf16.msra.mxu0 %v1492
    %1552 = vmatprep.subr.bf16.mxu0 %v1491
    %1553 = vmatpush1.bf16.msra.mxu0 %v1490
    %1554 = vmatprep.subr.bf16.mxu0 %v1489
    %1555 = vmatpush1.bf16.msra.mxu0 %v1488
    %1556 = vmatprep.subr.bf16.mxu0 %v1487
    %1557 = vmatpush1.bf16.msra.mxu0 %v1486
    %1558 = vmatprep.subr.bf16.mxu0 %v1485
    %1559 = vmatpush1.bf16.msra.mxu0 %v1484
    %1560 = vmatprep.subr.bf16.mxu0 0
    %1561 = vmatpush2.bf16.msra.mxu0 0
    %1562 = vmatprep.subr.bf16.mxu0 0
    %1563 = vmatpush2.bf16.msra.mxu0 0
    %1564 = vmatprep.subr.bf16.mxu0 0
    %1565 = vmatpush2.bf16.msra.mxu0 0
    %1566 = vmatprep.subr.bf16.mxu0 0
    %1567 = vmatpush2.bf16.msra.mxu0 0
    %1568 = vmatprep.subr.bf16.mxu0 %v1507
    %1569 = vmatpush2.bf16.msra.mxu0 %v1506
    %1570 = vmatprep.subr.bf16.mxu0 %v1505
    %1571 = vmatpush2.bf16.msra.mxu0 %v1504
    %1572 = vmatprep.subr.bf16.mxu0 %v1503
    %1573 = vmatpush2.bf16.msra.mxu0 %v1502
    %1574 = vmatprep.subr.bf16.mxu0 %v1501
    %1575 = vmatpush2.bf16.msra.mxu0 %v1500
    %1576 = vmatprep.mubr.bf16.mxu0 %v1533
    %1577 = vmatmul.mubr.bf16.gmra.mxu0 %v1379
    %v1578 = vpop.f32.mrf.mxu0
    %v1579 = vadd.f32 0.0, %v1578
    %v1580 = vpop.f32.mrf.mxu0
    %v1581 = vadd.f32 0.0, %v1580
    %v1582 = vpop.f32.mrf.mxu0
    %v1583 = vadd.f32 0.0, %v1582
    %v1584 = vpop.f32.mrf.mxu0
    %v1585 = vadd.f32 0.0, %v1584
    %1586 = vmatprep.mubr.bf16.mxu0 %v1536
    %1587 = vmatmul.mubr.bf16.gmra.mxu0 %v1381
    %v1588 = vpop.f32.mrf.mxu0
    %v1589 = vadd.f32 0.0, %v1588
    %v1590 = vpop.f32.mrf.mxu0
    %v1591 = vadd.f32 0.0, %v1590
    %v1592 = vpop.f32.mrf.mxu0
    %v1593 = vadd.f32 0.0, %v1592
    %v1594 = vpop.f32.mrf.mxu0
    %v1595 = vadd.f32 0.0, %v1594
    %1596 = vmatprep.mubr.bf16.mxu0 %v1539
    %1597 = vmatmul.mubr.bf16.gmra.mxu0 %v1383
    %v1598 = vpop.f32.mrf.mxu0
    %v1599 = vadd.f32 0.0, %v1598
    %v1600 = vpop.f32.mrf.mxu0
    %v1601 = vadd.f32 0.0, %v1600
    %v1602 = vpop.f32.mrf.mxu0
    %v1603 = vadd.f32 0.0, %v1602
    %v1604 = vpop.f32.mrf.mxu0
    %v1605 = vadd.f32 0.0, %v1604
    %1606 = vmatprep.mubr.bf16.mxu0 %v1542
    %1607 = vmatmul.mubr.bf16.gmra.mxu0 %v1385
    %v1608 = vpop.f32.mrf.mxu0
    %v1609 = vadd.f32 0.0, %v1608
    %v1610 = vpop.f32.mrf.mxu0
    %v1611 = vadd.f32 0.0, %v1610
    %v1612 = vpop.f32.mrf.mxu0
    %v1613 = vadd.f32 0.0, %v1612
    %v1614 = vpop.f32.mrf.mxu0
    %v1615 = vadd.f32 0.0, %v1614
    %1616 = vdwg.mxu0
    %v1617 = vadd.f32 %v1257, %v1579
    %v1618 = vadd.f32 %v1258, %v1581
    %v1619 = vadd.f32 %v1259, %v1583
    %v1620 = vadd.f32 %v1260, %v1585
    %v1621 = vadd.f32 %v1261, %v1589
    %v1622 = vadd.f32 %v1262, %v1591
    %v1623 = vadd.f32 %v1263, %v1593
    %v1624 = vadd.f32 %v1264, %v1595
    %v1625 = vadd.f32 %v1265, %v1599
    %v1626 = vadd.f32 %v1266, %v1601
    %v1627 = vadd.f32 %v1267, %v1603
    %v1628 = vadd.f32 %v1268, %v1605
    %v1629 = vadd.f32 %v1269, %v1609
    %v1630 = vadd.f32 %v1270, %v1611
    %v1631 = vadd.f32 %v1271, %v1613
    %v1632 = vadd.f32 %v1272, %v1615
    %vm1633 = vcmp.ge.f32.partialorder %v1617, 0.0
    %vm1634 = vcmp.ge.f32.partialorder %v1618, 0.0
    %vm1635 = vcmp.ge.f32.partialorder %v1619, 0.0
    %vm1636 = vcmp.ge.f32.partialorder %v1620, 0.0
    %vm1637 = vcmp.ge.f32.partialorder %v1621, 0.0
    %vm1638 = vcmp.ge.f32.partialorder %v1622, 0.0
    %vm1639 = vcmp.ge.f32.partialorder %v1623, 0.0
    %vm1640 = vcmp.ge.f32.partialorder %v1624, 0.0
    %vm1641 = vcmp.ge.f32.partialorder %v1625, 0.0
    %vm1642 = vcmp.ge.f32.partialorder %v1626, 0.0
    %vm1643 = vcmp.ge.f32.partialorder %v1627, 0.0
    %vm1644 = vcmp.ge.f32.partialorder %v1628, 0.0
    %vm1645 = vcmp.ge.f32.partialorder %v1629, 0.0
    %vm1646 = vcmp.ge.f32.partialorder %v1630, 0.0
    %vm1647 = vcmp.ge.f32.partialorder %v1631, 0.0
    %vm1648 = vcmp.ge.f32.partialorder %v1632, 0.0
    %v1649 = vmul.f32 %v1617, 0.2
    %v1650 = vmul.f32 %v1618, 0.2
    %v1651 = vmul.f32 %v1619, 0.2
    %v1652 = vmul.f32 %v1620, 0.2
    %v1653 = vmul.f32 %v1621, 0.2
    %v1654 = vmul.f32 %v1622, 0.2
    %v1655 = vmul.f32 %v1623, 0.2
    %v1656 = vmul.f32 %v1624, 0.2
    %v1657 = vmul.f32 %v1625, 0.2
    %v1658 = vmul.f32 %v1626, 0.2
    %v1659 = vmul.f32 %v1627, 0.2
    %v1660 = vmul.f32 %v1628, 0.2
    %v1661 = vmul.f32 %v1629, 0.2
    %v1662 = vmul.f32 %v1630, 0.2
    %v1663 = vmul.f32 %v1631, 0.2
    %v1664 = vmul.f32 %v1632, 0.2
    %v1665 = vsel %vm1633, %v1617, %v1649
    %v1666 = vsel %vm1634, %v1618, %v1650
    %v1667 = vsel %vm1635, %v1619, %v1651
    %v1668 = vsel %vm1636, %v1620, %v1652
    %v1669 = vsel %vm1637, %v1621, %v1653
    %v1670 = vsel %vm1638, %v1622, %v1654
    %v1671 = vsel %vm1639, %v1623, %v1655
    %v1672 = vsel %vm1640, %v1624, %v1656
    %v1673 = vsel %vm1641, %v1625, %v1657
    %v1674 = vsel %vm1642, %v1626, %v1658
    %v1675 = vsel %vm1643, %v1627, %v1659
    %v1676 = vsel %vm1644, %v1628, %v1660
    %v1677 = vsel %vm1645, %v1629, %v1661
    %v1678 = vsel %vm1646, %v1630, %v1662
    %v1679 = vsel %vm1647, %v1631, %v1663
    %v1680 = vsel %vm1648, %v1632, %v1664
    %v1681 = vpack.c.bf16 %v1667, %v1665
    %v1682 = vpack.c.bf16 %v1668, %v1666
    %v1683 = vpack.c.bf16 %v1671, %v1669
    %v1684 = vpack.c.bf16 %v1672, %v1670
    %v1685 = vpack.c.bf16 %v1675, %v1673
    %v1686 = vpack.c.bf16 %v1676, %v1674
    %v1687 = vpack.c.bf16 %v1679, %v1677
    %v1688 = vpack.c.bf16 %v1680, %v1678
    %v1689 = vld [vmem:[%s3] sm:$0xf]
    %v1690 = vld [vmem:[%s3 + $0x4] sm:$0xf]
    %v1691 = vld [vmem:[%s3 + $0x8] sm:$0xf]
    %v1692 = vld [vmem:[%s3 + $0xc] sm:$0xf]
    %v1697 = vunpack.c.l.b16 %v1689
    %v1698 = vunpack.c.l.b16 %v1690
    %v1699 = vunpack.c.l.b16 %v1691
    %v1700 = vunpack.c.l.b16 %v1692
    %v1701 = vpack.c.b16 %v1698, %v1697
    %v1702 = vpack.c.b16 %v1700, %v1699
    %v1704 = vsel %vm622, %v1701, 0
    %v1707 = vsel %vm622, %v1702, 0
    %1709 = vmatprep.subr.bf16.mxu0 0
    %1710 = vmatpush1.bf16.msra.mxu0 0
    %1711 = vmatprep.subr.bf16.mxu0 0
    %1712 = vmatpush1.bf16.msra.mxu0 0
    %1713 = vmatprep.subr.bf16.mxu0 0
    %1714 = vmatpush1.bf16.msra.mxu0 0
    %1715 = vmatprep.subr.bf16.mxu0 0
    %1716 = vmatpush1.bf16.msra.mxu0 0
    %1717 = vmatprep.subr.bf16.mxu0 %v1688
    %1718 = vmatpush1.bf16.msra.mxu0 %v1687
    %1719 = vmatprep.subr.bf16.mxu0 %v1686
    %1720 = vmatpush1.bf16.msra.mxu0 %v1685
    %1721 = vmatprep.subr.bf16.mxu0 %v1684
    %1722 = vmatpush1.bf16.msra.mxu0 %v1683
    %1723 = vmatprep.subr.bf16.mxu0 %v1682
    %1724 = vmatpush1.bf16.msra.mxu0 %v1681
    %1725 = vmatprep.subr.bf16.mxu0 0
    %1726 = vmatpush2.bf16.msra.mxu0 0
    %1727 = vmatprep.subr.bf16.mxu0 0
    %1728 = vmatpush2.bf16.msra.mxu0 0
    %1729 = vmatprep.subr.bf16.mxu0 0
    %1730 = vmatpush2.bf16.msra.mxu0 0
    %1731 = vmatprep.subr.bf16.mxu0 0
    %1732 = vmatpush2.bf16.msra.mxu0 0
    %1733 = vmatprep.subr.bf16.mxu0 0
    %1734 = vmatpush2.bf16.msra.mxu0 0
    %1735 = vmatprep.subr.bf16.mxu0 0
    %1736 = vmatpush2.bf16.msra.mxu0 0
    %1737 = vmatprep.subr.bf16.mxu0 0
    %1738 = vmatpush2.bf16.msra.mxu0 0
    %1739 = vmatprep.subr.bf16.mxu0 0
    %1740 = vmatpush2.bf16.msra.mxu0 0
    %1741 = vmatprep.mubr.bf16.mxu0 0
    %1742 = vmatmul.mubr.bf16.gmra.mxu0 %v1704
    %v1743 = vpop.f32.mrf.mxu0
    %v1744 = vadd.f32 0.0, %v1743
    %v1745 = vpop.f32.mrf.mxu0
    %v1746 = vadd.f32 0.0, %v1745
    %v1747 = vpop.f32.mrf.mxu0
    %v1748 = vadd.f32 0.0, %v1747
    %v1749 = vpop.f32.mrf.mxu0
    %v1750 = vadd.f32 0.0, %v1749
    %1751 = vmatprep.mubr.bf16.mxu0 0
    %1752 = vmatmul.mubr.bf16.gmra.mxu0 %v1707
    %v1753 = vpop.f32.mrf.mxu0
    %v1754 = vadd.f32 0.0, %v1753
    %v1755 = vpop.f32.mrf.mxu0
    %v1756 = vadd.f32 0.0, %v1755
    %v1757 = vpop.f32.mrf.mxu0
    %v1758 = vadd.f32 0.0, %v1757
    %v1759 = vpop.f32.mrf.mxu0
    %v1760 = vadd.f32 0.0, %v1759
    %1761 = vdwg.mxu0
    %v1762 = vpack.c.bf16 %v1748, %v1744
    %v1763 = vpack.c.bf16 %v1750, %v1746
    %v1764 = vpack.c.bf16 %v1758, %v1754
    %v1765 = vpack.c.bf16 %v1760, %v1756
    %v1766 = vld [vmem:[%s4] sm:$0xff]
    %v1767 = vld [vmem:[%s4 + $0x8] sm:$0xff]
    %v1768 = vld [vmem:[%s4 + $0x10] sm:$0xff]
    %v1769 = vld [vmem:[%s4 + $0x18] sm:$0xff]
    %v1770 = vld [vmem:[%s4 + $0x20] sm:$0xff]
    %v1771 = vld [vmem:[%s4 + $0x28] sm:$0xff]
    %v1772 = vld [vmem:[%s4 + $0x30] sm:$0xff]
    %v1773 = vld [vmem:[%s4 + $0x38] sm:$0xff]
    %v1774 = vld [vmem:[%s4 + $0x40] sm:$0xff]
    %v1775 = vld [vmem:[%s4 + $0x48] sm:$0xff]
    %v1776 = vld [vmem:[%s4 + $0x50] sm:$0xff]
    %v1777 = vld [vmem:[%s4 + $0x58] sm:$0xff]
    %v1778 = vld [vmem:[%s4 + $0x60] sm:$0xff]
    %v1779 = vld [vmem:[%s4 + $0x68] sm:$0xff]
    %v1780 = vld [vmem:[%s4 + $0x70] sm:$0xff]
    %v1781 = vld [vmem:[%s4 + $0x78] sm:$0xff]
    %v1782 = vld [vmem:[%s4 + $0x80] sm:$0xff]
    %v1783 = vld [vmem:[%s4 + $0x88] sm:$0xff]
    %v1784 = vld [vmem:[%s4 + $0x90] sm:$0xff]
    %v1785 = vld [vmem:[%s4 + $0x98] sm:$0xff]
    %v1786 = vld [vmem:[%s4 + $0xa0] sm:$0xff]
    %v1787 = vld [vmem:[%s4 + $0xa8] sm:$0xff]
    %v1788 = vld [vmem:[%s4 + $0xb0] sm:$0xff]
    %v1789 = vld [vmem:[%s4 + $0xb8] sm:$0xff]
    %v1790 = vld [vmem:[%s4 + $0xc0] sm:$0xff]
    %v1791 = vld [vmem:[%s4 + $0xc8] sm:$0xff]
    %v1792 = vld [vmem:[%s4 + $0xd0] sm:$0xff]
    %v1793 = vld [vmem:[%s4 + $0xd8] sm:$0xff]
    %v1794 = vld [vmem:[%s4 + $0xe0] sm:$0xff]
    %v1795 = vld [vmem:[%s4 + $0xe8] sm:$0xff]
    %v1796 = vld [vmem:[%s4 + $0xf0] sm:$0xff]
    %v1797 = vld [vmem:[%s4 + $0xf8] sm:$0xff]
    %s1798 = scalar_lea.vmem %s3, 16
    %v1799 = vld [vmem:[%s1798] sm:$0xf]
    %v1800 = vld [vmem:[%s1798 + $0x4] sm:$0xf]
    %v1801 = vld [vmem:[%s1798 + $0x8] sm:$0xf]
    %v1802 = vld [vmem:[%s1798 + $0xc] sm:$0xf]
    %v1807 = vunpack.c.l.b16 %v1799
    %v1808 = vunpack.c.l.b16 %v1800
    %v1809 = vunpack.c.l.b16 %v1801
    %v1810 = vunpack.c.l.b16 %v1802
    %v1811 = vpack.c.b16 %v1808, %v1807
    %v1812 = vpack.c.b16 %v1810, %v1809
    %v1814 = vsel %vm622, %v1811, 0
    %v1817 = vsel %vm622, %v1812, 0
    %1819 = vmatprep.subr.bf16.mxu0 0
    %1820 = vmatpush1.bf16.msra.mxu0 0
    %1821 = vmatprep.subr.bf16.mxu0 0
    %1822 = vmatpush1.bf16.msra.mxu0 0
    %1823 = vmatprep.subr.bf16.mxu0 0
    %1824 = vmatpush1.bf16.msra.mxu0 0
    %1825 = vmatprep.subr.bf16.mxu0 0
    %1826 = vmatpush1.bf16.msra.mxu0 0
    %1827 = vmatprep.subr.bf16.mxu0 %v1688
    %1828 = vmatpush1.bf16.msra.mxu0 %v1687
    %1829 = vmatprep.subr.bf16.mxu0 %v1686
    %1830 = vmatpush1.bf16.msra.mxu0 %v1685
    %1831 = vmatprep.subr.bf16.mxu0 %v1684
    %1832 = vmatpush1.bf16.msra.mxu0 %v1683
    %1833 = vmatprep.subr.bf16.mxu0 %v1682
    %1834 = vmatpush1.bf16.msra.mxu0 %v1681
    %1835 = vmatprep.subr.bf16.mxu0 0
    %1836 = vmatpush2.bf16.msra.mxu0 0
    %1837 = vmatprep.subr.bf16.mxu0 0
    %1838 = vmatpush2.bf16.msra.mxu0 0
    %1839 = vmatprep.subr.bf16.mxu0 0
    %1840 = vmatpush2.bf16.msra.mxu0 0
    %1841 = vmatprep.subr.bf16.mxu0 0
    %1842 = vmatpush2.bf16.msra.mxu0 0
    %1843 = vmatprep.subr.bf16.mxu0 0
    %1844 = vmatpush2.bf16.msra.mxu0 0
    %1845 = vmatprep.subr.bf16.mxu0 0
    %1846 = vmatpush2.bf16.msra.mxu0 0
    %1847 = vmatprep.subr.bf16.mxu0 0
    %1848 = vmatpush2.bf16.msra.mxu0 0
    %1849 = vmatprep.subr.bf16.mxu0 0
    %1850 = vmatpush2.bf16.msra.mxu0 0
    %1851 = vmatprep.mubr.bf16.mxu0 0
    %1852 = vmatmul.mubr.bf16.gmra.mxu0 %v1814
    %v1853 = vpop.f32.mrf.mxu0
    %v1854 = vadd.f32 0.0, %v1853
    %v1855 = vpop.f32.mrf.mxu0
    %v1856 = vadd.f32 0.0, %v1855
    %v1857 = vpop.f32.mrf.mxu0
    %v1858 = vadd.f32 0.0, %v1857
    %v1859 = vpop.f32.mrf.mxu0
    %v1860 = vadd.f32 0.0, %v1859
    %1861 = vmatprep.mubr.bf16.mxu0 0
    %1862 = vmatmul.mubr.bf16.gmra.mxu0 %v1817
    %v1863 = vpop.f32.mrf.mxu0
    %v1864 = vadd.f32 0.0, %v1863
    %v1865 = vpop.f32.mrf.mxu0
    %v1866 = vadd.f32 0.0, %v1865
    %v1867 = vpop.f32.mrf.mxu0
    %v1868 = vadd.f32 0.0, %v1867
    %v1869 = vpop.f32.mrf.mxu0
    %v1870 = vadd.f32 0.0, %v1869
    %1871 = vdwg.mxu0
    %v1872 = vpack.c.bf16 %v1858, %v1854
    %v1873 = vpack.c.bf16 %v1860, %v1856
    %v1874 = vpack.c.bf16 %v1868, %v1864
    %v1875 = vpack.c.bf16 %v1870, %v1866
    %s1876 = scalar_lea.vmem %s4, 256
    %v1877 = vld [vmem:[%s1876] sm:$0xff]
    %v1878 = vld [vmem:[%s1876 + $0x8] sm:$0xff]
    %v1879 = vld [vmem:[%s1876 + $0x10] sm:$0xff]
    %v1880 = vld [vmem:[%s1876 + $0x18] sm:$0xff]
    %v1881 = vld [vmem:[%s1876 + $0x20] sm:$0xff]
    %v1882 = vld [vmem:[%s1876 + $0x28] sm:$0xff]
    %v1883 = vld [vmem:[%s1876 + $0x30] sm:$0xff]
    %v1884 = vld [vmem:[%s1876 + $0x38] sm:$0xff]
    %v1885 = vld [vmem:[%s1876 + $0x40] sm:$0xff]
    %v1886 = vld [vmem:[%s1876 + $0x48] sm:$0xff]
    %v1887 = vld [vmem:[%s1876 + $0x50] sm:$0xff]
    %v1888 = vld [vmem:[%s1876 + $0x58] sm:$0xff]
    %v1889 = vld [vmem:[%s1876 + $0x60] sm:$0xff]
    %v1890 = vld [vmem:[%s1876 + $0x68] sm:$0xff]
    %v1891 = vld [vmem:[%s1876 + $0x70] sm:$0xff]
    %v1892 = vld [vmem:[%s1876 + $0x78] sm:$0xff]
    %v1893 = vld [vmem:[%s1876 + $0x80] sm:$0xff]
    %v1894 = vld [vmem:[%s1876 + $0x88] sm:$0xff]
    %v1895 = vld [vmem:[%s1876 + $0x90] sm:$0xff]
    %v1896 = vld [vmem:[%s1876 + $0x98] sm:$0xff]
    %v1897 = vld [vmem:[%s1876 + $0xa0] sm:$0xff]
    %v1898 = vld [vmem:[%s1876 + $0xa8] sm:$0xff]
    %v1899 = vld [vmem:[%s1876 + $0xb0] sm:$0xff]
    %v1900 = vld [vmem:[%s1876 + $0xb8] sm:$0xff]
    %v1901 = vld [vmem:[%s1876 + $0xc0] sm:$0xff]
    %v1902 = vld [vmem:[%s1876 + $0xc8] sm:$0xff]
    %v1903 = vld [vmem:[%s1876 + $0xd0] sm:$0xff]
    %v1904 = vld [vmem:[%s1876 + $0xd8] sm:$0xff]
    %v1905 = vld [vmem:[%s1876 + $0xe0] sm:$0xff]
    %v1906 = vld [vmem:[%s1876 + $0xe8] sm:$0xff]
    %v1907 = vld [vmem:[%s1876 + $0xf0] sm:$0xff]
    %v1908 = vld [vmem:[%s1876 + $0xf8] sm:$0xff]
    %v1941 = vunpack.c.l.b16 %v1877
    %v1942 = vunpack.c.h.b16 %v1877
    %v1943 = vunpack.c.l.b16 %v1878
    %v1944 = vunpack.c.h.b16 %v1878
    %v1945 = vunpack.c.l.b16 %v1879
    %v1946 = vunpack.c.h.b16 %v1879
    %v1947 = vunpack.c.l.b16 %v1880
    %v1948 = vunpack.c.h.b16 %v1880
    %v1949 = vunpack.c.l.b16 %v1881
    %v1950 = vunpack.c.h.b16 %v1881
    %v1951 = vunpack.c.l.b16 %v1882
    %v1952 = vunpack.c.h.b16 %v1882
    %v1953 = vunpack.c.l.b16 %v1883
    %v1954 = vunpack.c.h.b16 %v1883
    %v1955 = vunpack.c.l.b16 %v1884
    %v1956 = vunpack.c.h.b16 %v1884
    %v1957 = vunpack.c.l.b16 %v1885
    %v1958 = vunpack.c.h.b16 %v1885
    %v1959 = vunpack.c.l.b16 %v1886
    %v1960 = vunpack.c.h.b16 %v1886
    %v1961 = vunpack.c.l.b16 %v1887
    %v1962 = vunpack.c.h.b16 %v1887
    %v1963 = vunpack.c.l.b16 %v1888
    %v1964 = vunpack.c.h.b16 %v1888
    %v1965 = vunpack.c.l.b16 %v1889
    %v1966 = vunpack.c.h.b16 %v1889
    %v1967 = vunpack.c.l.b16 %v1890
    %v1968 = vunpack.c.h.b16 %v1890
    %v1969 = vunpack.c.l.b16 %v1891
    %v1970 = vunpack.c.h.b16 %v1891
    %v1971 = vunpack.c.l.b16 %v1892
    %v1972 = vunpack.c.h.b16 %v1892
    %v1973 = vunpack.c.l.b16 %v1893
    %v1974 = vunpack.c.h.b16 %v1893
    %v1975 = vunpack.c.l.b16 %v1894
    %v1976 = vunpack.c.h.b16 %v1894
    %v1977 = vunpack.c.l.b16 %v1895
    %v1978 = vunpack.c.h.b16 %v1895
    %v1979 = vunpack.c.l.b16 %v1896
    %v1980 = vunpack.c.h.b16 %v1896
    %v1981 = vunpack.c.l.b16 %v1897
    %v1982 = vunpack.c.h.b16 %v1897
    %v1983 = vunpack.c.l.b16 %v1898
    %v1984 = vunpack.c.h.b16 %v1898
    %v1985 = vunpack.c.l.b16 %v1899
    %v1986 = vunpack.c.h.b16 %v1899
    %v1987 = vunpack.c.l.b16 %v1900
    %v1988 = vunpack.c.h.b16 %v1900
    %v1989 = vunpack.c.l.b16 %v1901
    %v1990 = vunpack.c.h.b16 %v1901
    %v1991 = vunpack.c.l.b16 %v1902
    %v1992 = vunpack.c.h.b16 %v1902
    %v1993 = vunpack.c.l.b16 %v1903
    %v1994 = vunpack.c.h.b16 %v1903
    %v1995 = vunpack.c.l.b16 %v1904
    %v1996 = vunpack.c.h.b16 %v1904
    %v1997 = vunpack.c.l.b16 %v1905
    %v1998 = vunpack.c.h.b16 %v1905
    %v1999 = vunpack.c.l.b16 %v1906
    %v2000 = vunpack.c.h.b16 %v1906
    %v2001 = vunpack.c.l.b16 %v1907
    %v2002 = vunpack.c.h.b16 %v1907
    %v2003 = vunpack.c.l.b16 %v1908
    %v2004 = vunpack.c.h.b16 %v1908
    %v2005 = vpack.c.b16 %v1943, %v1941
    %v2006 = vpack.c.b16 %v1944, %v1942
    %v2007 = vpack.c.b16 %v1947, %v1945
    %v2008 = vpack.c.b16 %v1948, %v1946
    %v2009 = vpack.c.b16 %v1951, %v1949
    %v2010 = vpack.c.b16 %v1952, %v1950
    %v2011 = vpack.c.b16 %v1955, %v1953
    %v2012 = vpack.c.b16 %v1956, %v1954
    %v2013 = vpack.c.b16 %v1959, %v1957
    %v2014 = vpack.c.b16 %v1960, %v1958
    %v2015 = vpack.c.b16 %v1963, %v1961
    %v2016 = vpack.c.b16 %v1964, %v1962
    %v2017 = vpack.c.b16 %v1967, %v1965
    %v2018 = vpack.c.b16 %v1968, %v1966
    %v2019 = vpack.c.b16 %v1971, %v1969
    %v2020 = vpack.c.b16 %v1972, %v1970
    %v2021 = vpack.c.b16 %v1975, %v1973
    %v2022 = vpack.c.b16 %v1976, %v1974
    %v2023 = vpack.c.b16 %v1979, %v1977
    %v2024 = vpack.c.b16 %v1980, %v1978
    %v2025 = vpack.c.b16 %v1983, %v1981
    %v2026 = vpack.c.b16 %v1984, %v1982
    %v2027 = vpack.c.b16 %v1987, %v1985
    %v2028 = vpack.c.b16 %v1988, %v1986
    %v2029 = vpack.c.b16 %v1991, %v1989
    %v2030 = vpack.c.b16 %v1992, %v1990
    %v2031 = vpack.c.b16 %v1995, %v1993
    %v2032 = vpack.c.b16 %v1996, %v1994
    %v2033 = vpack.c.b16 %v1999, %v1997
    %v2034 = vpack.c.b16 %v2000, %v1998
    %v2035 = vpack.c.b16 %v2003, %v2001
    %v2036 = vpack.c.b16 %v2004, %v2002
    %2069 = vmatprep.subr.bf16.mxu0 %v2020
    %2070 = vmatpush1.bf16.msra.mxu0 %v2019
    %2071 = vmatprep.subr.bf16.mxu0 %v2018
    %2072 = vmatpush1.bf16.msra.mxu0 %v2017
    %2073 = vmatprep.subr.bf16.mxu0 %v2016
    %2074 = vmatpush1.bf16.msra.mxu0 %v2015
    %2075 = vmatprep.subr.bf16.mxu0 %v2014
    %2076 = vmatpush1.bf16.msra.mxu0 %v2013
    %2077 = vmatprep.subr.bf16.mxu0 %v2012
    %2078 = vmatpush1.bf16.msra.mxu0 %v2011
    %2079 = vmatprep.subr.bf16.mxu0 %v2010
    %2080 = vmatpush1.bf16.msra.mxu0 %v2009
    %2081 = vmatprep.subr.bf16.mxu0 %v2008
    %2082 = vmatpush1.bf16.msra.mxu0 %v2007
    %2083 = vmatprep.subr.bf16.mxu0 %v2006
    %2084 = vmatpush1.bf16.msra.mxu0 %v2005
    %2085 = vmatprep.subr.bf16.mxu0 %v2036
    %2086 = vmatpush2.bf16.msra.mxu0 %v2035
    %2087 = vmatprep.subr.bf16.mxu0 %v2034
    %2088 = vmatpush2.bf16.msra.mxu0 %v2033
    %2089 = vmatprep.subr.bf16.mxu0 %v2032
    %2090 = vmatpush2.bf16.msra.mxu0 %v2031
    %2091 = vmatprep.subr.bf16.mxu0 %v2030
    %2092 = vmatpush2.bf16.msra.mxu0 %v2029
    %2093 = vmatprep.subr.bf16.mxu0 %v2028
    %2094 = vmatpush2.bf16.msra.mxu0 %v2027
    %2095 = vmatprep.subr.bf16.mxu0 %v2026
    %2096 = vmatpush2.bf16.msra.mxu0 %v2025
    %2097 = vmatprep.subr.bf16.mxu0 %v2024
    %2098 = vmatpush2.bf16.msra.mxu0 %v2023
    %2099 = vmatprep.subr.bf16.mxu0 %v2022
    %2100 = vmatpush2.bf16.msra.mxu0 %v2021
    %2101 = vmatprep.mubr.bf16.mxu0 %v1873
    %2102 = vmatmul.mubr.bf16.gmra.mxu0 %v1872
    %v2103 = vpop.f32.mrf.mxu0
    %v2104 = vadd.f32 0.0, %v2103
    %v2105 = vpop.f32.mrf.mxu0
    %v2106 = vadd.f32 0.0, %v2105
    %v2107 = vpop.f32.mrf.mxu0
    %v2108 = vadd.f32 0.0, %v2107
    %v2109 = vpop.f32.mrf.mxu0
    %v2110 = vadd.f32 0.0, %v2109
    %2111 = vmatprep.mubr.bf16.mxu0 %v1875
    %2112 = vmatmul.mubr.bf16.gmra.mxu0 %v1874
    %v2113 = vpop.f32.mrf.mxu0
    %v2114 = vadd.f32 0.0, %v2113
    %v2115 = vpop.f32.mrf.mxu0
    %v2116 = vadd.f32 0.0, %v2115
    %v2117 = vpop.f32.mrf.mxu0
    %v2118 = vadd.f32 0.0, %v2117
    %v2119 = vpop.f32.mrf.mxu0
    %v2120 = vadd.f32 0.0, %v2119
    %2121 = vdwg.mxu0
    %v2154 = vunpack.c.l.b16 %v1766
    %v2155 = vunpack.c.h.b16 %v1766
    %v2156 = vunpack.c.l.b16 %v1767
    %v2157 = vunpack.c.h.b16 %v1767
    %v2158 = vunpack.c.l.b16 %v1768
    %v2159 = vunpack.c.h.b16 %v1768
    %v2160 = vunpack.c.l.b16 %v1769
    %v2161 = vunpack.c.h.b16 %v1769
    %v2162 = vunpack.c.l.b16 %v1770
    %v2163 = vunpack.c.h.b16 %v1770
    %v2164 = vunpack.c.l.b16 %v1771
    %v2165 = vunpack.c.h.b16 %v1771
    %v2166 = vunpack.c.l.b16 %v1772
    %v2167 = vunpack.c.h.b16 %v1772
    %v2168 = vunpack.c.l.b16 %v1773
    %v2169 = vunpack.c.h.b16 %v1773
    %v2170 = vunpack.c.l.b16 %v1774
    %v2171 = vunpack.c.h.b16 %v1774
    %v2172 = vunpack.c.l.b16 %v1775
    %v2173 = vunpack.c.h.b16 %v1775
    %v2174 = vunpack.c.l.b16 %v1776
    %v2175 = vunpack.c.h.b16 %v1776
    %v2176 = vunpack.c.l.b16 %v1777
    %v2177 = vunpack.c.h.b16 %v1777
    %v2178 = vunpack.c.l.b16 %v1778
    %v2179 = vunpack.c.h.b16 %v1778
    %v2180 = vunpack.c.l.b16 %v1779
    %v2181 = vunpack.c.h.b16 %v1779
    %v2182 = vunpack.c.l.b16 %v1780
    %v2183 = vunpack.c.h.b16 %v1780
    %v2184 = vunpack.c.l.b16 %v1781
    %v2185 = vunpack.c.h.b16 %v1781
    %v2186 = vunpack.c.l.b16 %v1782
    %v2187 = vunpack.c.h.b16 %v1782
    %v2188 = vunpack.c.l.b16 %v1783
    %v2189 = vunpack.c.h.b16 %v1783
    %v2190 = vunpack.c.l.b16 %v1784
    %v2191 = vunpack.c.h.b16 %v1784
    %v2192 = vunpack.c.l.b16 %v1785
    %v2193 = vunpack.c.h.b16 %v1785
    %v2194 = vunpack.c.l.b16 %v1786
    %v2195 = vunpack.c.h.b16 %v1786
    %v2196 = vunpack.c.l.b16 %v1787
    %v2197 = vunpack.c.h.b16 %v1787
    %v2198 = vunpack.c.l.b16 %v1788
    %v2199 = vunpack.c.h.b16 %v1788
    %v2200 = vunpack.c.l.b16 %v1789
    %v2201 = vunpack.c.h.b16 %v1789
    %v2202 = vunpack.c.l.b16 %v1790
    %v2203 = vunpack.c.h.b16 %v1790
    %v2204 = vunpack.c.l.b16 %v1791
    %v2205 = vunpack.c.h.b16 %v1791
    %v2206 = vunpack.c.l.b16 %v1792
    %v2207 = vunpack.c.h.b16 %v1792
    %v2208 = vunpack.c.l.b16 %v1793
    %v2209 = vunpack.c.h.b16 %v1793
    %v2210 = vunpack.c.l.b16 %v1794
    %v2211 = vunpack.c.h.b16 %v1794
    %v2212 = vunpack.c.l.b16 %v1795
    %v2213 = vunpack.c.h.b16 %v1795
    %v2214 = vunpack.c.l.b16 %v1796
    %v2215 = vunpack.c.h.b16 %v1796
    %v2216 = vunpack.c.l.b16 %v1797
    %v2217 = vunpack.c.h.b16 %v1797
    %v2218 = vpack.c.b16 %v2156, %v2154
    %v2219 = vpack.c.b16 %v2157, %v2155
    %v2220 = vpack.c.b16 %v2160, %v2158
    %v2221 = vpack.c.b16 %v2161, %v2159
    %v2222 = vpack.c.b16 %v2164, %v2162
    %v2223 = vpack.c.b16 %v2165, %v2163
    %v2224 = vpack.c.b16 %v2168, %v2166
    %v2225 = vpack.c.b16 %v2169, %v2167
    %v2226 = vpack.c.b16 %v2172, %v2170
    %v2227 = vpack.c.b16 %v2173, %v2171
    %v2228 = vpack.c.b16 %v2176, %v2174
    %v2229 = vpack.c.b16 %v2177, %v2175
    %v2230 = vpack.c.b16 %v2180, %v2178
    %v2231 = vpack.c.b16 %v2181, %v2179
    %v2232 = vpack.c.b16 %v2184, %v2182
    %v2233 = vpack.c.b16 %v2185, %v2183
    %v2234 = vpack.c.b16 %v2188, %v2186
    %v2235 = vpack.c.b16 %v2189, %v2187
    %v2236 = vpack.c.b16 %v2192, %v2190
    %v2237 = vpack.c.b16 %v2193, %v2191
    %v2238 = vpack.c.b16 %v2196, %v2194
    %v2239 = vpack.c.b16 %v2197, %v2195
    %v2240 = vpack.c.b16 %v2200, %v2198
    %v2241 = vpack.c.b16 %v2201, %v2199
    %v2242 = vpack.c.b16 %v2204, %v2202
    %v2243 = vpack.c.b16 %v2205, %v2203
    %v2244 = vpack.c.b16 %v2208, %v2206
    %v2245 = vpack.c.b16 %v2209, %v2207
    %v2246 = vpack.c.b16 %v2212, %v2210
    %v2247 = vpack.c.b16 %v2213, %v2211
    %v2248 = vpack.c.b16 %v2216, %v2214
    %v2249 = vpack.c.b16 %v2217, %v2215
    %2282 = vmatprep.subr.bf16.mxu0 %v2233
    %2283 = vmatpush1.bf16.msra.mxu0 %v2232
    %2284 = vmatprep.subr.bf16.mxu0 %v2231
    %2285 = vmatpush1.bf16.msra.mxu0 %v2230
    %2286 = vmatprep.subr.bf16.mxu0 %v2229
    %2287 = vmatpush1.bf16.msra.mxu0 %v2228
    %2288 = vmatprep.subr.bf16.mxu0 %v2227
    %2289 = vmatpush1.bf16.msra.mxu0 %v2226
    %2290 = vmatprep.subr.bf16.mxu0 %v2225
    %2291 = vmatpush1.bf16.msra.mxu0 %v2224
    %2292 = vmatprep.subr.bf16.mxu0 %v2223
    %2293 = vmatpush1.bf16.msra.mxu0 %v2222
    %2294 = vmatprep.subr.bf16.mxu0 %v2221
    %2295 = vmatpush1.bf16.msra.mxu0 %v2220
    %2296 = vmatprep.subr.bf16.mxu0 %v2219
    %2297 = vmatpush1.bf16.msra.mxu0 %v2218
    %2298 = vmatprep.subr.bf16.mxu0 %v2249
    %2299 = vmatpush2.bf16.msra.mxu0 %v2248
    %2300 = vmatprep.subr.bf16.mxu0 %v2247
    %2301 = vmatpush2.bf16.msra.mxu0 %v2246
    %2302 = vmatprep.subr.bf16.mxu0 %v2245
    %2303 = vmatpush2.bf16.msra.mxu0 %v2244
    %2304 = vmatprep.subr.bf16.mxu0 %v2243
    %2305 = vmatpush2.bf16.msra.mxu0 %v2242
    %2306 = vmatprep.subr.bf16.mxu0 %v2241
    %2307 = vmatpush2.bf16.msra.mxu0 %v2240
    %2308 = vmatprep.subr.bf16.mxu0 %v2239
    %2309 = vmatpush2.bf16.msra.mxu0 %v2238
    %2310 = vmatprep.subr.bf16.mxu0 %v2237
    %2311 = vmatpush2.bf16.msra.mxu0 %v2236
    %2312 = vmatprep.subr.bf16.mxu0 %v2235
    %2313 = vmatpush2.bf16.msra.mxu0 %v2234
    %2314 = vmatprep.mubr.bf16.mxu0 %v1763
    %2315 = vmatmul.mubr.bf16.gmra.mxu0 %v1762
    %v2316 = vpop.f32.mrf.mxu0
    %v2317 = vadd.f32 %v2104, %v2316
    %v2318 = vpop.f32.mrf.mxu0
    %v2319 = vadd.f32 %v2106, %v2318
    %v2320 = vpop.f32.mrf.mxu0
    %v2321 = vadd.f32 %v2108, %v2320
    %v2322 = vpop.f32.mrf.mxu0
    %v2323 = vadd.f32 %v2110, %v2322
    %2324 = vmatprep.mubr.bf16.mxu0 %v1765
    %2325 = vmatmul.mubr.bf16.gmra.mxu0 %v1764
    %v2326 = vpop.f32.mrf.mxu0
    %v2327 = vadd.f32 %v2114, %v2326
    %v2328 = vpop.f32.mrf.mxu0
    %v2329 = vadd.f32 %v2116, %v2328
    %v2330 = vpop.f32.mrf.mxu0
    %v2331 = vadd.f32 %v2118, %v2330
    %v2332 = vpop.f32.mrf.mxu0
    %v2333 = vadd.f32 %v2120, %v2332
    %2334 = vdwg.mxu0
    %s2335 = scalar_lea.vmem %s3, 32
    %v2336 = vld [vmem:[%s2335] sm:$0xf]
    %v2337 = vld [vmem:[%s2335 + $0x4] sm:$0xf]
    %v2338 = vld [vmem:[%s2335 + $0x8] sm:$0xf]
    %v2339 = vld [vmem:[%s2335 + $0xc] sm:$0xf]
    %v2344 = vunpack.c.l.b16 %v2336
    %v2345 = vunpack.c.l.b16 %v2337
    %v2346 = vunpack.c.l.b16 %v2338
    %v2347 = vunpack.c.l.b16 %v2339
    %v2348 = vpack.c.b16 %v2345, %v2344
    %v2349 = vpack.c.b16 %v2347, %v2346
    %v2351 = vsel %vm622, %v2348, 0
    %v2354 = vsel %vm622, %v2349, 0
    %2356 = vmatprep.subr.bf16.mxu0 0
    %2357 = vmatpush1.bf16.msra.mxu0 0
    %2358 = vmatprep.subr.bf16.mxu0 0
    %2359 = vmatpush1.bf16.msra.mxu0 0
    %2360 = vmatprep.subr.bf16.mxu0 0
    %2361 = vmatpush1.bf16.msra.mxu0 0
    %2362 = vmatprep.subr.bf16.mxu0 0
    %2363 = vmatpush1.bf16.msra.mxu0 0
    %2364 = vmatprep.subr.bf16.mxu0 %v1688
    %2365 = vmatpush1.bf16.msra.mxu0 %v1687
    %2366 = vmatprep.subr.bf16.mxu0 %v1686
    %2367 = vmatpush1.bf16.msra.mxu0 %v1685
    %2368 = vmatprep.subr.bf16.mxu0 %v1684
    %2369 = vmatpush1.bf16.msra.mxu0 %v1683
    %2370 = vmatprep.subr.bf16.mxu0 %v1682
    %2371 = vmatpush1.bf16.msra.mxu0 %v1681
    %2372 = vmatprep.subr.bf16.mxu0 0
    %2373 = vmatpush2.bf16.msra.mxu0 0
    %2374 = vmatprep.subr.bf16.mxu0 0
    %2375 = vmatpush2.bf16.msra.mxu0 0
    %2376 = vmatprep.subr.bf16.mxu0 0
    %2377 = vmatpush2.bf16.msra.mxu0 0
    %2378 = vmatprep.subr.bf16.mxu0 0
    %2379 = vmatpush2.bf16.msra.mxu0 0
    %2380 = vmatprep.subr.bf16.mxu0 0
    %2381 = vmatpush2.bf16.msra.mxu0 0
    %2382 = vmatprep.subr.bf16.mxu0 0
    %2383 = vmatpush2.bf16.msra.mxu0 0
    %2384 = vmatprep.subr.bf16.mxu0 0
    %2385 = vmatpush2.bf16.msra.mxu0 0
    %2386 = vmatprep.subr.bf16.mxu0 0
    %2387 = vmatpush2.bf16.msra.mxu0 0
    %2388 = vmatprep.mubr.bf16.mxu0 0
    %2389 = vmatmul.mubr.bf16.gmra.mxu0 %v2351
    %v2390 = vpop.f32.mrf.mxu0
    %v2391 = vadd.f32 0.0, %v2390
    %v2392 = vpop.f32.mrf.mxu0
    %v2393 = vadd.f32 0.0, %v2392
    %v2394 = vpop.f32.mrf.mxu0
    %v2395 = vadd.f32 0.0, %v2394
    %v2396 = vpop.f32.mrf.mxu0
    %v2397 = vadd.f32 0.0, %v2396
    %2398 = vmatprep.mubr.bf16.mxu0 0
    %2399 = vmatmul.mubr.bf16.gmra.mxu0 %v2354
    %v2400 = vpop.f32.mrf.mxu0
    %v2401 = vadd.f32 0.0, %v2400
    %v2402 = vpop.f32.mrf.mxu0
    %v2403 = vadd.f32 0.0, %v2402
    %v2404 = vpop.f32.mrf.mxu0
    %v2405 = vadd.f32 0.0, %v2404
    %v2406 = vpop.f32.mrf.mxu0
    %v2407 = vadd.f32 0.0, %v2406
    %2408 = vdwg.mxu0
    %v2409 = vpack.c.bf16 %v2395, %v2391
    %v2410 = vpack.c.bf16 %v2397, %v2393
    %v2411 = vpack.c.bf16 %v2405, %v2401
    %v2412 = vpack.c.bf16 %v2407, %v2403
    %s2413 = scalar_lea.vmem %s4, 512
    %v2414 = vld [vmem:[%s2413] sm:$0xff]
    %v2415 = vld [vmem:[%s2413 + $0x8] sm:$0xff]
    %v2416 = vld [vmem:[%s2413 + $0x10] sm:$0xff]
    %v2417 = vld [vmem:[%s2413 + $0x18] sm:$0xff]
    %v2418 = vld [vmem:[%s2413 + $0x20] sm:$0xff]
    %v2419 = vld [vmem:[%s2413 + $0x28] sm:$0xff]
    %v2420 = vld [vmem:[%s2413 + $0x30] sm:$0xff]
    %v2421 = vld [vmem:[%s2413 + $0x38] sm:$0xff]
    %v2422 = vld [vmem:[%s2413 + $0x40] sm:$0xff]
    %v2423 = vld [vmem:[%s2413 + $0x48] sm:$0xff]
    %v2424 = vld [vmem:[%s2413 + $0x50] sm:$0xff]
    %v2425 = vld [vmem:[%s2413 + $0x58] sm:$0xff]
    %v2426 = vld [vmem:[%s2413 + $0x60] sm:$0xff]
    %v2427 = vld [vmem:[%s2413 + $0x68] sm:$0xff]
    %v2428 = vld [vmem:[%s2413 + $0x70] sm:$0xff]
    %v2429 = vld [vmem:[%s2413 + $0x78] sm:$0xff]
    %v2430 = vld [vmem:[%s2413 + $0x80] sm:$0xff]
    %v2431 = vld [vmem:[%s2413 + $0x88] sm:$0xff]
    %v2432 = vld [vmem:[%s2413 + $0x90] sm:$0xff]
    %v2433 = vld [vmem:[%s2413 + $0x98] sm:$0xff]
    %v2434 = vld [vmem:[%s2413 + $0xa0] sm:$0xff]
    %v2435 = vld [vmem:[%s2413 + $0xa8] sm:$0xff]
    %v2436 = vld [vmem:[%s2413 + $0xb0] sm:$0xff]
    %v2437 = vld [vmem:[%s2413 + $0xb8] sm:$0xff]
    %v2438 = vld [vmem:[%s2413 + $0xc0] sm:$0xff]
    %v2439 = vld [vmem:[%s2413 + $0xc8] sm:$0xff]
    %v2440 = vld [vmem:[%s2413 + $0xd0] sm:$0xff]
    %v2441 = vld [vmem:[%s2413 + $0xd8] sm:$0xff]
    %v2442 = vld [vmem:[%s2413 + $0xe0] sm:$0xff]
    %v2443 = vld [vmem:[%s2413 + $0xe8] sm:$0xff]
    %v2444 = vld [vmem:[%s2413 + $0xf0] sm:$0xff]
    %v2445 = vld [vmem:[%s2413 + $0xf8] sm:$0xff]
    %v2478 = vunpack.c.l.b16 %v2414
    %v2479 = vunpack.c.h.b16 %v2414
    %v2480 = vunpack.c.l.b16 %v2415
    %v2481 = vunpack.c.h.b16 %v2415
    %v2482 = vunpack.c.l.b16 %v2416
    %v2483 = vunpack.c.h.b16 %v2416
    %v2484 = vunpack.c.l.b16 %v2417
    %v2485 = vunpack.c.h.b16 %v2417
    %v2486 = vunpack.c.l.b16 %v2418
    %v2487 = vunpack.c.h.b16 %v2418
    %v2488 = vunpack.c.l.b16 %v2419
    %v2489 = vunpack.c.h.b16 %v2419
    %v2490 = vunpack.c.l.b16 %v2420
    %v2491 = vunpack.c.h.b16 %v2420
    %v2492 = vunpack.c.l.b16 %v2421
    %v2493 = vunpack.c.h.b16 %v2421
    %v2494 = vunpack.c.l.b16 %v2422
    %v2495 = vunpack.c.h.b16 %v2422
    %v2496 = vunpack.c.l.b16 %v2423
    %v2497 = vunpack.c.h.b16 %v2423
    %v2498 = vunpack.c.l.b16 %v2424
    %v2499 = vunpack.c.h.b16 %v2424
    %v2500 = vunpack.c.l.b16 %v2425
    %v2501 = vunpack.c.h.b16 %v2425
    %v2502 = vunpack.c.l.b16 %v2426
    %v2503 = vunpack.c.h.b16 %v2426
    %v2504 = vunpack.c.l.b16 %v2427
    %v2505 = vunpack.c.h.b16 %v2427
    %v2506 = vunpack.c.l.b16 %v2428
    %v2507 = vunpack.c.h.b16 %v2428
    %v2508 = vunpack.c.l.b16 %v2429
    %v2509 = vunpack.c.h.b16 %v2429
    %v2510 = vunpack.c.l.b16 %v2430
    %v2511 = vunpack.c.h.b16 %v2430
    %v2512 = vunpack.c.l.b16 %v2431
    %v2513 = vunpack.c.h.b16 %v2431
    %v2514 = vunpack.c.l.b16 %v2432
    %v2515 = vunpack.c.h.b16 %v2432
    %v2516 = vunpack.c.l.b16 %v2433
    %v2517 = vunpack.c.h.b16 %v2433
    %v2518 = vunpack.c.l.b16 %v2434
    %v2519 = vunpack.c.h.b16 %v2434
    %v2520 = vunpack.c.l.b16 %v2435
    %v2521 = vunpack.c.h.b16 %v2435
    %v2522 = vunpack.c.l.b16 %v2436
    %v2523 = vunpack.c.h.b16 %v2436
    %v2524 = vunpack.c.l.b16 %v2437
    %v2525 = vunpack.c.h.b16 %v2437
    %v2526 = vunpack.c.l.b16 %v2438
    %v2527 = vunpack.c.h.b16 %v2438
    %v2528 = vunpack.c.l.b16 %v2439
    %v2529 = vunpack.c.h.b16 %v2439
    %v2530 = vunpack.c.l.b16 %v2440
    %v2531 = vunpack.c.h.b16 %v2440
    %v2532 = vunpack.c.l.b16 %v2441
    %v2533 = vunpack.c.h.b16 %v2441
    %v2534 = vunpack.c.l.b16 %v2442
    %v2535 = vunpack.c.h.b16 %v2442
    %v2536 = vunpack.c.l.b16 %v2443
    %v2537 = vunpack.c.h.b16 %v2443
    %v2538 = vunpack.c.l.b16 %v2444
    %v2539 = vunpack.c.h.b16 %v2444
    %v2540 = vunpack.c.l.b16 %v2445
    %v2541 = vunpack.c.h.b16 %v2445
    %v2542 = vpack.c.b16 %v2480, %v2478
    %v2543 = vpack.c.b16 %v2481, %v2479
    %v2544 = vpack.c.b16 %v2484, %v2482
    %v2545 = vpack.c.b16 %v2485, %v2483
    %v2546 = vpack.c.b16 %v2488, %v2486
    %v2547 = vpack.c.b16 %v2489, %v2487
    %v2548 = vpack.c.b16 %v2492, %v2490
    %v2549 = vpack.c.b16 %v2493, %v2491
    %v2550 = vpack.c.b16 %v2496, %v2494
    %v2551 = vpack.c.b16 %v2497, %v2495
    %v2552 = vpack.c.b16 %v2500, %v2498
    %v2553 = vpack.c.b16 %v2501, %v2499
    %v2554 = vpack.c.b16 %v2504, %v2502
    %v2555 = vpack.c.b16 %v2505, %v2503
    %v2556 = vpack.c.b16 %v2508, %v2506
    %v2557 = vpack.c.b16 %v2509, %v2507
    %v2558 = vpack.c.b16 %v2512, %v2510
    %v2559 = vpack.c.b16 %v2513, %v2511
    %v2560 = vpack.c.b16 %v2516, %v2514
    %v2561 = vpack.c.b16 %v2517, %v2515
    %v2562 = vpack.c.b16 %v2520, %v2518
    %v2563 = vpack.c.b16 %v2521, %v2519
    %v2564 = vpack.c.b16 %v2524, %v2522
    %v2565 = vpack.c.b16 %v2525, %v2523
    %v2566 = vpack.c.b16 %v2528, %v2526
    %v2567 = vpack.c.b16 %v2529, %v2527
    %v2568 = vpack.c.b16 %v2532, %v2530
    %v2569 = vpack.c.b16 %v2533, %v2531
    %v2570 = vpack.c.b16 %v2536, %v2534
    %v2571 = vpack.c.b16 %v2537, %v2535
    %v2572 = vpack.c.b16 %v2540, %v2538
    %v2573 = vpack.c.b16 %v2541, %v2539
    %2606 = vmatprep.subr.bf16.mxu0 %v2557
    %2607 = vmatpush1.bf16.msra.mxu0 %v2556
    %2608 = vmatprep.subr.bf16.mxu0 %v2555
    %2609 = vmatpush1.bf16.msra.mxu0 %v2554
    %2610 = vmatprep.subr.bf16.mxu0 %v2553
    %2611 = vmatpush1.bf16.msra.mxu0 %v2552
    %2612 = vmatprep.subr.bf16.mxu0 %v2551
    %2613 = vmatpush1.bf16.msra.mxu0 %v2550
    %2614 = vmatprep.subr.bf16.mxu0 %v2549
    %2615 = vmatpush1.bf16.msra.mxu0 %v2548
    %2616 = vmatprep.subr.bf16.mxu0 %v2547
    %2617 = vmatpush1.bf16.msra.mxu0 %v2546
    %2618 = vmatprep.subr.bf16.mxu0 %v2545
    %2619 = vmatpush1.bf16.msra.mxu0 %v2544
    %2620 = vmatprep.subr.bf16.mxu0 %v2543
    %2621 = vmatpush1.bf16.msra.mxu0 %v2542
    %2622 = vmatprep.subr.bf16.mxu0 %v2573
    %2623 = vmatpush2.bf16.msra.mxu0 %v2572
    %2624 = vmatprep.subr.bf16.mxu0 %v2571
    %2625 = vmatpush2.bf16.msra.mxu0 %v2570
    %2626 = vmatprep.subr.bf16.mxu0 %v2569
    %2627 = vmatpush2.bf16.msra.mxu0 %v2568
    %2628 = vmatprep.subr.bf16.mxu0 %v2567
    %2629 = vmatpush2.bf16.msra.mxu0 %v2566
    %2630 = vmatprep.subr.bf16.mxu0 %v2565
    %2631 = vmatpush2.bf16.msra.mxu0 %v2564
    %2632 = vmatprep.subr.bf16.mxu0 %v2563
    %2633 = vmatpush2.bf16.msra.mxu0 %v2562
    %2634 = vmatprep.subr.bf16.mxu0 %v2561
    %2635 = vmatpush2.bf16.msra.mxu0 %v2560
    %2636 = vmatprep.subr.bf16.mxu0 %v2559
    %2637 = vmatpush2.bf16.msra.mxu0 %v2558
    %2638 = vmatprep.mubr.bf16.mxu0 %v2410
    %2639 = vmatmul.mubr.bf16.gmra.mxu0 %v2409
    %v2640 = vpop.f32.mrf.mxu0
    %v2641 = vadd.f32 0.0, %v2640
    %v2642 = vpop.f32.mrf.mxu0
    %v2643 = vadd.f32 0.0, %v2642
    %v2644 = vpop.f32.mrf.mxu0
    %v2645 = vadd.f32 0.0, %v2644
    %v2646 = vpop.f32.mrf.mxu0
    %v2647 = vadd.f32 0.0, %v2646
    %2648 = vmatprep.mubr.bf16.mxu0 %v2412
    %2649 = vmatmul.mubr.bf16.gmra.mxu0 %v2411
    %v2650 = vpop.f32.mrf.mxu0
    %v2651 = vadd.f32 0.0, %v2650
    %v2652 = vpop.f32.mrf.mxu0
    %v2653 = vadd.f32 0.0, %v2652
    %v2654 = vpop.f32.mrf.mxu0
    %v2655 = vadd.f32 0.0, %v2654
    %v2656 = vpop.f32.mrf.mxu0
    %v2657 = vadd.f32 0.0, %v2656
    %2658 = vdwg.mxu0
    %v2659 = vadd.f32 %v2317, %v2641
    %v2660 = vadd.f32 %v2319, %v2643
    %v2661 = vadd.f32 %v2321, %v2645
    %v2662 = vadd.f32 %v2323, %v2647
    %v2663 = vadd.f32 %v2327, %v2651
    %v2664 = vadd.f32 %v2329, %v2653
    %v2665 = vadd.f32 %v2331, %v2655
    %v2666 = vadd.f32 %v2333, %v2657
    %s2667 = scalar_lea.vmem %s3, 48
    %v2668 = vld [vmem:[%s2667] sm:$0xf]
    %v2669 = vld [vmem:[%s2667 + $0x4] sm:$0xf]
    %v2670 = vld [vmem:[%s2667 + $0x8] sm:$0xf]
    %v2671 = vld [vmem:[%s2667 + $0xc] sm:$0xf]
    %v2676 = vunpack.c.l.b16 %v2668
    %v2677 = vunpack.c.l.b16 %v2669
    %v2678 = vunpack.c.l.b16 %v2670
    %v2679 = vunpack.c.l.b16 %v2671
    %v2680 = vpack.c.b16 %v2677, %v2676
    %v2681 = vpack.c.b16 %v2679, %v2678
    %v2683 = vsel %vm622, %v2680, 0
    %v2686 = vsel %vm622, %v2681, 0
    %2688 = vmatprep.subr.bf16.mxu0 0
    %2689 = vmatpush1.bf16.msra.mxu0 0
    %2690 = vmatprep.subr.bf16.mxu0 0
    %2691 = vmatpush1.bf16.msra.mxu0 0
    %2692 = vmatprep.subr.bf16.mxu0 0
    %2693 = vmatpush1.bf16.msra.mxu0 0
    %2694 = vmatprep.subr.bf16.mxu0 0
    %2695 = vmatpush1.bf16.msra.mxu0 0
    %2696 = vmatprep.subr.bf16.mxu0 %v1688
    %2697 = vmatpush1.bf16.msra.mxu0 %v1687
    %2698 = vmatprep.subr.bf16.mxu0 %v1686
    %2699 = vmatpush1.bf16.msra.mxu0 %v1685
    %2700 = vmatprep.subr.bf16.mxu0 %v1684
    %2701 = vmatpush1.bf16.msra.mxu0 %v1683
    %2702 = vmatprep.subr.bf16.mxu0 %v1682
    %2703 = vmatpush1.bf16.msra.mxu0 %v1681
    %2704 = vmatprep.subr.bf16.mxu0 0
    %2705 = vmatpush2.bf16.msra.mxu0 0
    %2706 = vmatprep.subr.bf16.mxu0 0
    %2707 = vmatpush2.bf16.msra.mxu0 0
    %2708 = vmatprep.subr.bf16.mxu0 0
    %2709 = vmatpush2.bf16.msra.mxu0 0
    %2710 = vmatprep.subr.bf16.mxu0 0
    %2711 = vmatpush2.bf16.msra.mxu0 0
    %2712 = vmatprep.subr.bf16.mxu0 0
    %2713 = vmatpush2.bf16.msra.mxu0 0
    %2714 = vmatprep.subr.bf16.mxu0 0
    %2715 = vmatpush2.bf16.msra.mxu0 0
    %2716 = vmatprep.subr.bf16.mxu0 0
    %2717 = vmatpush2.bf16.msra.mxu0 0
    %2718 = vmatprep.subr.bf16.mxu0 0
    %2719 = vmatpush2.bf16.msra.mxu0 0
    %2720 = vmatprep.mubr.bf16.mxu0 0
    %2721 = vmatmul.mubr.bf16.gmra.mxu0 %v2683
    %v2722 = vpop.f32.mrf.mxu0
    %v2723 = vadd.f32 0.0, %v2722
    %v2724 = vpop.f32.mrf.mxu0
    %v2725 = vadd.f32 0.0, %v2724
    %v2726 = vpop.f32.mrf.mxu0
    %v2727 = vadd.f32 0.0, %v2726
    %v2728 = vpop.f32.mrf.mxu0
    %v2729 = vadd.f32 0.0, %v2728
    %2730 = vmatprep.mubr.bf16.mxu0 0
    %2731 = vmatmul.mubr.bf16.gmra.mxu0 %v2686
    %v2732 = vpop.f32.mrf.mxu0
    %v2733 = vadd.f32 0.0, %v2732
    %v2734 = vpop.f32.mrf.mxu0
    %v2735 = vadd.f32 0.0, %v2734
    %v2736 = vpop.f32.mrf.mxu0
    %v2737 = vadd.f32 0.0, %v2736
    %v2738 = vpop.f32.mrf.mxu0
    %v2739 = vadd.f32 0.0, %v2738
    %2740 = vdwg.mxu0
    %v2741 = vpack.c.bf16 %v2727, %v2723
    %v2742 = vpack.c.bf16 %v2729, %v2725
    %v2743 = vpack.c.bf16 %v2737, %v2733
    %v2744 = vpack.c.bf16 %v2739, %v2735
    %s2745 = scalar_lea.vmem %s4, 768
    %v2746 = vld [vmem:[%s2745] sm:$0xff]
    %v2747 = vld [vmem:[%s2745 + $0x8] sm:$0xff]
    %v2748 = vld [vmem:[%s2745 + $0x10] sm:$0xff]
    %v2749 = vld [vmem:[%s2745 + $0x18] sm:$0xff]
    %v2750 = vld [vmem:[%s2745 + $0x20] sm:$0xff]
    %v2751 = vld [vmem:[%s2745 + $0x28] sm:$0xff]
    %v2752 = vld [vmem:[%s2745 + $0x30] sm:$0xff]
    %v2753 = vld [vmem:[%s2745 + $0x38] sm:$0xff]
    %v2754 = vld [vmem:[%s2745 + $0x40] sm:$0xff]
    %v2755 = vld [vmem:[%s2745 + $0x48] sm:$0xff]
    %v2756 = vld [vmem:[%s2745 + $0x50] sm:$0xff]
    %v2757 = vld [vmem:[%s2745 + $0x58] sm:$0xff]
    %v2758 = vld [vmem:[%s2745 + $0x60] sm:$0xff]
    %v2759 = vld [vmem:[%s2745 + $0x68] sm:$0xff]
    %v2760 = vld [vmem:[%s2745 + $0x70] sm:$0xff]
    %v2761 = vld [vmem:[%s2745 + $0x78] sm:$0xff]
    %v2762 = vld [vmem:[%s2745 + $0x80] sm:$0xff]
    %v2763 = vld [vmem:[%s2745 + $0x88] sm:$0xff]
    %v2764 = vld [vmem:[%s2745 + $0x90] sm:$0xff]
    %v2765 = vld [vmem:[%s2745 + $0x98] sm:$0xff]
    %v2766 = vld [vmem:[%s2745 + $0xa0] sm:$0xff]
    %v2767 = vld [vmem:[%s2745 + $0xa8] sm:$0xff]
    %v2768 = vld [vmem:[%s2745 + $0xb0] sm:$0xff]
    %v2769 = vld [vmem:[%s2745 + $0xb8] sm:$0xff]
    %v2770 = vld [vmem:[%s2745 + $0xc0] sm:$0xff]
    %v2771 = vld [vmem:[%s2745 + $0xc8] sm:$0xff]
    %v2772 = vld [vmem:[%s2745 + $0xd0] sm:$0xff]
    %v2773 = vld [vmem:[%s2745 + $0xd8] sm:$0xff]
    %v2774 = vld [vmem:[%s2745 + $0xe0] sm:$0xff]
    %v2775 = vld [vmem:[%s2745 + $0xe8] sm:$0xff]
    %v2776 = vld [vmem:[%s2745 + $0xf0] sm:$0xff]
    %v2777 = vld [vmem:[%s2745 + $0xf8] sm:$0xff]
    %v2810 = vunpack.c.l.b16 %v2746
    %v2811 = vunpack.c.h.b16 %v2746
    %v2812 = vunpack.c.l.b16 %v2747
    %v2813 = vunpack.c.h.b16 %v2747
    %v2814 = vunpack.c.l.b16 %v2748
    %v2815 = vunpack.c.h.b16 %v2748
    %v2816 = vunpack.c.l.b16 %v2749
    %v2817 = vunpack.c.h.b16 %v2749
    %v2818 = vunpack.c.l.b16 %v2750
    %v2819 = vunpack.c.h.b16 %v2750
    %v2820 = vunpack.c.l.b16 %v2751
    %v2821 = vunpack.c.h.b16 %v2751
    %v2822 = vunpack.c.l.b16 %v2752
    %v2823 = vunpack.c.h.b16 %v2752
    %v2824 = vunpack.c.l.b16 %v2753
    %v2825 = vunpack.c.h.b16 %v2753
    %v2826 = vunpack.c.l.b16 %v2754
    %v2827 = vunpack.c.h.b16 %v2754
    %v2828 = vunpack.c.l.b16 %v2755
    %v2829 = vunpack.c.h.b16 %v2755
    %v2830 = vunpack.c.l.b16 %v2756
    %v2831 = vunpack.c.h.b16 %v2756
    %v2832 = vunpack.c.l.b16 %v2757
    %v2833 = vunpack.c.h.b16 %v2757
    %v2834 = vunpack.c.l.b16 %v2758
    %v2835 = vunpack.c.h.b16 %v2758
    %v2836 = vunpack.c.l.b16 %v2759
    %v2837 = vunpack.c.h.b16 %v2759
    %v2838 = vunpack.c.l.b16 %v2760
    %v2839 = vunpack.c.h.b16 %v2760
    %v2840 = vunpack.c.l.b16 %v2761
    %v2841 = vunpack.c.h.b16 %v2761
    %v2842 = vunpack.c.l.b16 %v2762
    %v2843 = vunpack.c.h.b16 %v2762
    %v2844 = vunpack.c.l.b16 %v2763
    %v2845 = vunpack.c.h.b16 %v2763
    %v2846 = vunpack.c.l.b16 %v2764
    %v2847 = vunpack.c.h.b16 %v2764
    %v2848 = vunpack.c.l.b16 %v2765
    %v2849 = vunpack.c.h.b16 %v2765
    %v2850 = vunpack.c.l.b16 %v2766
    %v2851 = vunpack.c.h.b16 %v2766
    %v2852 = vunpack.c.l.b16 %v2767
    %v2853 = vunpack.c.h.b16 %v2767
    %v2854 = vunpack.c.l.b16 %v2768
    %v2855 = vunpack.c.h.b16 %v2768
    %v2856 = vunpack.c.l.b16 %v2769
    %v2857 = vunpack.c.h.b16 %v2769
    %v2858 = vunpack.c.l.b16 %v2770
    %v2859 = vunpack.c.h.b16 %v2770
    %v2860 = vunpack.c.l.b16 %v2771
    %v2861 = vunpack.c.h.b16 %v2771
    %v2862 = vunpack.c.l.b16 %v2772
    %v2863 = vunpack.c.h.b16 %v2772
    %v2864 = vunpack.c.l.b16 %v2773
    %v2865 = vunpack.c.h.b16 %v2773
    %v2866 = vunpack.c.l.b16 %v2774
    %v2867 = vunpack.c.h.b16 %v2774
    %v2868 = vunpack.c.l.b16 %v2775
    %v2869 = vunpack.c.h.b16 %v2775
    %v2870 = vunpack.c.l.b16 %v2776
    %v2871 = vunpack.c.h.b16 %v2776
    %v2872 = vunpack.c.l.b16 %v2777
    %v2873 = vunpack.c.h.b16 %v2777
    %v2874 = vpack.c.b16 %v2812, %v2810
    %v2875 = vpack.c.b16 %v2813, %v2811
    %v2876 = vpack.c.b16 %v2816, %v2814
    %v2877 = vpack.c.b16 %v2817, %v2815
    %v2878 = vpack.c.b16 %v2820, %v2818
    %v2879 = vpack.c.b16 %v2821, %v2819
    %v2880 = vpack.c.b16 %v2824, %v2822
    %v2881 = vpack.c.b16 %v2825, %v2823
    %v2882 = vpack.c.b16 %v2828, %v2826
    %v2883 = vpack.c.b16 %v2829, %v2827
    %v2884 = vpack.c.b16 %v2832, %v2830
    %v2885 = vpack.c.b16 %v2833, %v2831
    %v2886 = vpack.c.b16 %v2836, %v2834
    %v2887 = vpack.c.b16 %v2837, %v2835
    %v2888 = vpack.c.b16 %v2840, %v2838
    %v2889 = vpack.c.b16 %v2841, %v2839
    %v2890 = vpack.c.b16 %v2844, %v2842
    %v2891 = vpack.c.b16 %v2845, %v2843
    %v2892 = vpack.c.b16 %v2848, %v2846
    %v2893 = vpack.c.b16 %v2849, %v2847
    %v2894 = vpack.c.b16 %v2852, %v2850
    %v2895 = vpack.c.b16 %v2853, %v2851
    %v2896 = vpack.c.b16 %v2856, %v2854
    %v2897 = vpack.c.b16 %v2857, %v2855
    %v2898 = vpack.c.b16 %v2860, %v2858
    %v2899 = vpack.c.b16 %v2861, %v2859
    %v2900 = vpack.c.b16 %v2864, %v2862
    %v2901 = vpack.c.b16 %v2865, %v2863
    %v2902 = vpack.c.b16 %v2868, %v2866
    %v2903 = vpack.c.b16 %v2869, %v2867
    %v2904 = vpack.c.b16 %v2872, %v2870
    %v2905 = vpack.c.b16 %v2873, %v2871
    %2938 = vmatprep.subr.bf16.mxu0 %v2889
    %2939 = vmatpush1.bf16.msra.mxu0 %v2888
    %2940 = vmatprep.subr.bf16.mxu0 %v2887
    %2941 = vmatpush1.bf16.msra.mxu0 %v2886
    %2942 = vmatprep.subr.bf16.mxu0 %v2885
    %2943 = vmatpush1.bf16.msra.mxu0 %v2884
    %2944 = vmatprep.subr.bf16.mxu0 %v2883
    %2945 = vmatpush1.bf16.msra.mxu0 %v2882
    %2946 = vmatprep.subr.bf16.mxu0 %v2881
    %2947 = vmatpush1.bf16.msra.mxu0 %v2880
    %2948 = vmatprep.subr.bf16.mxu0 %v2879
    %2949 = vmatpush1.bf16.msra.mxu0 %v2878
    %2950 = vmatprep.subr.bf16.mxu0 %v2877
    %2951 = vmatpush1.bf16.msra.mxu0 %v2876
    %2952 = vmatprep.subr.bf16.mxu0 %v2875
    %2953 = vmatpush1.bf16.msra.mxu0 %v2874
    %2954 = vmatprep.subr.bf16.mxu0 %v2905
    %2955 = vmatpush2.bf16.msra.mxu0 %v2904
    %2956 = vmatprep.subr.bf16.mxu0 %v2903
    %2957 = vmatpush2.bf16.msra.mxu0 %v2902
    %2958 = vmatprep.subr.bf16.mxu0 %v2901
    %2959 = vmatpush2.bf16.msra.mxu0 %v2900
    %2960 = vmatprep.subr.bf16.mxu0 %v2899
    %2961 = vmatpush2.bf16.msra.mxu0 %v2898
    %2962 = vmatprep.subr.bf16.mxu0 %v2897
    %2963 = vmatpush2.bf16.msra.mxu0 %v2896
    %2964 = vmatprep.subr.bf16.mxu0 %v2895
    %2965 = vmatpush2.bf16.msra.mxu0 %v2894
    %2966 = vmatprep.subr.bf16.mxu0 %v2893
    %2967 = vmatpush2.bf16.msra.mxu0 %v2892
    %2968 = vmatprep.subr.bf16.mxu0 %v2891
    %2969 = vmatpush2.bf16.msra.mxu0 %v2890
    %2970 = vmatprep.mubr.bf16.mxu0 %v2742
    %2971 = vmatmul.mubr.bf16.gmra.mxu0 %v2741
    %v2972 = vpop.f32.mrf.mxu0
    %v2973 = vadd.f32 0.0, %v2972
    %v2974 = vpop.f32.mrf.mxu0
    %v2975 = vadd.f32 0.0, %v2974
    %v2976 = vpop.f32.mrf.mxu0
    %v2977 = vadd.f32 0.0, %v2976
    %v2978 = vpop.f32.mrf.mxu0
    %v2979 = vadd.f32 0.0, %v2978
    %2980 = vmatprep.mubr.bf16.mxu0 %v2744
    %2981 = vmatmul.mubr.bf16.gmra.mxu0 %v2743
    %v2982 = vpop.f32.mrf.mxu0
    %v2983 = vadd.f32 0.0, %v2982
    %v2984 = vpop.f32.mrf.mxu0
    %v2985 = vadd.f32 0.0, %v2984
    %v2986 = vpop.f32.mrf.mxu0
    %v2987 = vadd.f32 0.0, %v2986
    %v2988 = vpop.f32.mrf.mxu0
    %v2989 = vadd.f32 0.0, %v2988
    %2990 = vdwg.mxu0
    %v2991 = vadd.f32 %v2659, %v2973
    %v2992 = vadd.f32 %v2660, %v2975
    %v2993 = vadd.f32 %v2661, %v2977
    %v2994 = vadd.f32 %v2662, %v2979
    %v2995 = vadd.f32 %v2663, %v2983
    %v2996 = vadd.f32 %v2664, %v2985
    %v2997 = vadd.f32 %v2665, %v2987
    %v2998 = vadd.f32 %v2666, %v2989
    %v2999 = vadd.f32 %v2991, %v2993
    %v3000 = vadd.f32 %v2999, %v2995
    %v3001 = vadd.f32 %v3000, %v2997
    %v3002 = vrot.slane %v3001, 4
    %v3003 = vadd.f32 %v3001, %v3002
    %v3004 = vrot.slane %v3003, 2
    %v3005 = vadd.f32 %v3003, %v3004
    %v3006 = vrot.slane %v3005, 1
    %v3007 = vadd.f32 %v3005, %v3006
    %v3008 = vadd.f32 %v2992, %v2994
    %v3009 = vadd.f32 %v3008, %v2996
    %v3010 = vadd.f32 %v3009, %v2998
    %v3011 = vrot.slane %v3010, 4
    %v3012 = vadd.f32 %v3010, %v3011
    %v3013 = vrot.slane %v3012, 2
    %v3014 = vadd.f32 %v3012, %v3013
    %v3015 = vrot.slane %v3014, 1
    %v3016 = vadd.f32 %v3014, %v3015
    %v3017 = vmul.f32 %v2991, %v2991
    %v3018 = vmul.f32 %v2992, %v2992
    %v3019 = vmul.f32 %v2993, %v2993
    %v3020 = vmul.f32 %v2994, %v2994
    %v3021 = vmul.f32 %v2995, %v2995
    %v3022 = vmul.f32 %v2996, %v2996
    %v3023 = vmul.f32 %v2997, %v2997
    %v3024 = vmul.f32 %v2998, %v2998
    %v3025 = vadd.f32 %v3017, %v3019
    %v3026 = vadd.f32 %v3025, %v3021
    %v3027 = vadd.f32 %v3026, %v3023
    %v3028 = vrot.slane %v3027, 4
    %v3029 = vadd.f32 %v3027, %v3028
    %v3030 = vrot.slane %v3029, 2
    %v3031 = vadd.f32 %v3029, %v3030
    %v3032 = vrot.slane %v3031, 1
    %v3033 = vadd.f32 %v3031, %v3032
    %v3034 = vadd.f32 %v3018, %v3020
    %v3035 = vadd.f32 %v3034, %v3022
    %v3036 = vadd.f32 %v3035, %v3024
    %v3037 = vrot.slane %v3036, 4
    %v3038 = vadd.f32 %v3036, %v3037
    %v3039 = vrot.slane %v3038, 2
    %v3040 = vadd.f32 %v3038, %v3039
    %v3041 = vrot.slane %v3040, 1
    %v3042 = vadd.f32 %v3040, %v3041
    %v3043 = vld [vmem:[#allocation4] sm:$0xff]
    %v3044 = vld [vmem:[#allocation4 + $0x8] sm:$0xff]
    %v3045 = vld [vmem:[#allocation4 + $0x10] sm:$0xff]
    %v3046 = vld [vmem:[#allocation4 + $0x18] sm:$0xff]
    %v3047 = vld [vmem:[#allocation4 + $0x20] sm:$0xff]
    %v3048 = vld [vmem:[#allocation4 + $0x28] sm:$0xff]
    %v3049 = vld [vmem:[#allocation4 + $0x30] sm:$0xff]
    %v3050 = vld [vmem:[#allocation4 + $0x38] sm:$0xff]
    %v3051 = vld [vmem:[#allocation4 + $0x40] sm:$0xff]
    %v3052 = vld [vmem:[#allocation4 + $0x48] sm:$0xff]
    %v3053 = vld [vmem:[#allocation4 + $0x50] sm:$0xff]
    %v3054 = vld [vmem:[#allocation4 + $0x58] sm:$0xff]
    %v3055 = vld [vmem:[#allocation4 + $0x60] sm:$0xff]
    %v3056 = vld [vmem:[#allocation4 + $0x68] sm:$0xff]
    %v3057 = vld [vmem:[#allocation4 + $0x70] sm:$0xff]
    %v3058 = vld [vmem:[#allocation4 + $0x78] sm:$0xff]
    %v3059 = vld [vmem:[#allocation4 + $0x80] sm:$0xff]
    %v3060 = vld [vmem:[#allocation4 + $0x88] sm:$0xff]
    %v3061 = vld [vmem:[#allocation4 + $0x90] sm:$0xff]
    %v3062 = vld [vmem:[#allocation4 + $0x98] sm:$0xff]
    %v3063 = vld [vmem:[#allocation4 + $0xa0] sm:$0xff]
    %v3064 = vld [vmem:[#allocation4 + $0xa8] sm:$0xff]
    %v3065 = vld [vmem:[#allocation4 + $0xb0] sm:$0xff]
    %v3066 = vld [vmem:[#allocation4 + $0xb8] sm:$0xff]
    %v3067 = vld [vmem:[#allocation4 + $0xc0] sm:$0xff]
    %v3068 = vld [vmem:[#allocation4 + $0xc8] sm:$0xff]
    %v3069 = vld [vmem:[#allocation4 + $0xd0] sm:$0xff]
    %v3070 = vld [vmem:[#allocation4 + $0xd8] sm:$0xff]
    %v3071 = vld [vmem:[#allocation4 + $0xe0] sm:$0xff]
    %v3072 = vld [vmem:[#allocation4 + $0xe8] sm:$0xff]
    %v3073 = vld [vmem:[#allocation4 + $0xf0] sm:$0xff]
    %v3074 = vld [vmem:[#allocation4 + $0xf8] sm:$0xff]
    %v3075 = vld [vmem:[#allocation4 + $0x100] sm:$0xff]
    %v3076 = vld [vmem:[#allocation4 + $0x108] sm:$0xff]
    %v3077 = vld [vmem:[#allocation4 + $0x110] sm:$0xff]
    %v3078 = vld [vmem:[#allocation4 + $0x118] sm:$0xff]
    %v3079 = vld [vmem:[#allocation4 + $0x120] sm:$0xff]
    %v3080 = vld [vmem:[#allocation4 + $0x128] sm:$0xff]
    %v3081 = vld [vmem:[#allocation4 + $0x130] sm:$0xff]
    %v3082 = vld [vmem:[#allocation4 + $0x138] sm:$0xff]
    %v3083 = vld [vmem:[#allocation4 + $0x140] sm:$0xff]
    %v3084 = vld [vmem:[#allocation4 + $0x148] sm:$0xff]
    %v3085 = vld [vmem:[#allocation4 + $0x150] sm:$0xff]
    %v3086 = vld [vmem:[#allocation4 + $0x158] sm:$0xff]
    %v3087 = vld [vmem:[#allocation4 + $0x160] sm:$0xff]
    %v3088 = vld [vmem:[#allocation4 + $0x168] sm:$0xff]
    %v3089 = vld [vmem:[#allocation4 + $0x170] sm:$0xff]
    %v3090 = vld [vmem:[#allocation4 + $0x178] sm:$0xff]
    %v3091 = vld [vmem:[#allocation4 + $0x180] sm:$0xff]
    %v3092 = vld [vmem:[#allocation4 + $0x188] sm:$0xff]
    %v3093 = vld [vmem:[#allocation4 + $0x190] sm:$0xff]
    %v3094 = vld [vmem:[#allocation4 + $0x198] sm:$0xff]
    %v3095 = vld [vmem:[#allocation4 + $0x1a0] sm:$0xff]
    %v3096 = vld [vmem:[#allocation4 + $0x1a8] sm:$0xff]
    %v3097 = vld [vmem:[#allocation4 + $0x1b0] sm:$0xff]
    %v3098 = vld [vmem:[#allocation4 + $0x1b8] sm:$0xff]
    %v3099 = vld [vmem:[#allocation4 + $0x1c0] sm:$0xff]
    %v3100 = vld [vmem:[#allocation4 + $0x1c8] sm:$0xff]
    %v3101 = vld [vmem:[#allocation4 + $0x1d0] sm:$0xff]
    %v3102 = vld [vmem:[#allocation4 + $0x1d8] sm:$0xff]
    %v3103 = vld [vmem:[#allocation4 + $0x1e0] sm:$0xff]
    %v3104 = vld [vmem:[#allocation4 + $0x1e8] sm:$0xff]
    %v3105 = vld [vmem:[#allocation4 + $0x1f0] sm:$0xff]
    %v3106 = vld [vmem:[#allocation4 + $0x1f8] sm:$0xff]
    %3107 = vmatprep.subr.mxu0 %v3074
    %3108 = vmatpush1.msra.mxu0 %v3073
    %3109 = vmatprep.subr.mxu0 %v3072
    %3110 = vmatpush1.msra.mxu0 %v3071
    %3111 = vmatprep.subr.mxu0 %v3070
    %3112 = vmatpush1.msra.mxu0 %v3069
    %3113 = vmatprep.subr.mxu0 %v3068
    %3114 = vmatpush1.msra.mxu0 %v3067
    %3115 = vmatprep.subr.mxu0 %v3066
    %3116 = vmatpush1.msra.mxu0 %v3065
    %3117 = vmatprep.subr.mxu0 %v3064
    %3118 = vmatpush1.msra.mxu0 %v3063
    %3119 = vmatprep.subr.mxu0 %v3062
    %3120 = vmatpush1.msra.mxu0 %v3061
    %3121 = vmatprep.subr.mxu0 %v3060
    %3122 = vmatpush1.msra.mxu0 %v3059
    %3123 = vmatprep.subr.mxu0 %v3058
    %3124 = vmatpush1.msra.mxu0 %v3057
    %3125 = vmatprep.subr.mxu0 %v3056
    %3126 = vmatpush1.msra.mxu0 %v3055
    %3127 = vmatprep.subr.mxu0 %v3054
    %3128 = vmatpush1.msra.mxu0 %v3053
    %3129 = vmatprep.subr.mxu0 %v3052
    %3130 = vmatpush1.msra.mxu0 %v3051
    %3131 = vmatprep.subr.mxu0 %v3050
    %3132 = vmatpush1.msra.mxu0 %v3049
    %3133 = vmatprep.subr.mxu0 %v3048
    %3134 = vmatpush1.msra.mxu0 %v3047
    %3135 = vmatprep.subr.mxu0 %v3046
    %3136 = vmatpush1.msra.mxu0 %v3045
    %3137 = vmatprep.subr.mxu0 %v3044
    %3138 = vmatpush1.msra.mxu0 %v3043
    %3139 = vmatprep.subr.mxu0 %v3106
    %3140 = vmatpush2.msra.mxu0 %v3105
    %3141 = vmatprep.subr.mxu0 %v3104
    %3142 = vmatpush2.msra.mxu0 %v3103
    %3143 = vmatprep.subr.mxu0 %v3102
    %3144 = vmatpush2.msra.mxu0 %v3101
    %3145 = vmatprep.subr.mxu0 %v3100
    %3146 = vmatpush2.msra.mxu0 %v3099
    %3147 = vmatprep.subr.mxu0 %v3098
    %3148 = vmatpush2.msra.mxu0 %v3097
    %3149 = vmatprep.subr.mxu0 %v3096
    %3150 = vmatpush2.msra.mxu0 %v3095
    %3151 = vmatprep.subr.mxu0 %v3094
    %3152 = vmatpush2.msra.mxu0 %v3093
    %3153 = vmatprep.subr.mxu0 %v3092
    %3154 = vmatpush2.msra.mxu0 %v3091
    %3155 = vmatprep.subr.mxu0 %v3090
    %3156 = vmatpush2.msra.mxu0 %v3089
    %3157 = vmatprep.subr.mxu0 %v3088
    %3158 = vmatpush2.msra.mxu0 %v3087
    %3159 = vmatprep.subr.mxu0 %v3086
    %3160 = vmatpush2.msra.mxu0 %v3085
    %3161 = vmatprep.subr.mxu0 %v3084
    %3162 = vmatpush2.msra.mxu0 %v3083
    %3163 = vmatprep.subr.mxu0 %v3082
    %3164 = vmatpush2.msra.mxu0 %v3081
    %3165 = vmatprep.subr.mxu0 %v3080
    %3166 = vmatpush2.msra.mxu0 %v3079
    %3167 = vmatprep.subr.mxu0 %v3078
    %3168 = vmatpush2.msra.mxu0 %v3077
    %3169 = vmatprep.subr.mxu0 %v3076
    %3170 = vmatpush2.msra.mxu0 %v3075
    %3171 = vmatprep.mubr.f32.mxu0 %v3016
    %3172 = vmatmul.mubr.f32.gmra.mxu0 %v3007
    %v3173 = vpop.f32.mrf.mxu0
    %v3174 = vadd.f32 0.0, %v3173
    %v3175 = vpop.f32.mrf.mxu0
    %v3176 = vadd.f32 0.0, %v3175
    %3177 = vdwg.mxu0
    %v3178 = vmul.f32 %v3174, 0.001953125
    %v3179 = vmul.f32 %v3176, 0.001953125
    %3180 = vmatprep.subr.mxu0 %v3074
    %3181 = vmatpush1.msra.mxu0 %v3073
    %3182 = vmatprep.subr.mxu0 %v3072
    %3183 = vmatpush1.msra.mxu0 %v3071
    %3184 = vmatprep.subr.mxu0 %v3070
    %3185 = vmatpush1.msra.mxu0 %v3069
    %3186 = vmatprep.subr.mxu0 %v3068
    %3187 = vmatpush1.msra.mxu0 %v3067
    %3188 = vmatprep.subr.mxu0 %v3066
    %3189 = vmatpush1.msra.mxu0 %v3065
    %3190 = vmatprep.subr.mxu0 %v3064
    %3191 = vmatpush1.msra.mxu0 %v3063
    %3192 = vmatprep.subr.mxu0 %v3062
    %3193 = vmatpush1.msra.mxu0 %v3061
    %3194 = vmatprep.subr.mxu0 %v3060
    %3195 = vmatpush1.msra.mxu0 %v3059
    %3196 = vmatprep.subr.mxu0 %v3058
    %3197 = vmatpush1.msra.mxu0 %v3057
    %3198 = vmatprep.subr.mxu0 %v3056
    %3199 = vmatpush1.msra.mxu0 %v3055
    %3200 = vmatprep.subr.mxu0 %v3054
    %3201 = vmatpush1.msra.mxu0 %v3053
    %3202 = vmatprep.subr.mxu0 %v3052
    %3203 = vmatpush1.msra.mxu0 %v3051
    %3204 = vmatprep.subr.mxu0 %v3050
    %3205 = vmatpush1.msra.mxu0 %v3049
    %3206 = vmatprep.subr.mxu0 %v3048
    %3207 = vmatpush1.msra.mxu0 %v3047
    %3208 = vmatprep.subr.mxu0 %v3046
    %3209 = vmatpush1.msra.mxu0 %v3045
    %3210 = vmatprep.subr.mxu0 %v3044
    %3211 = vmatpush1.msra.mxu0 %v3043
    %3212 = vmatprep.subr.mxu0 %v3106
    %3213 = vmatpush2.msra.mxu0 %v3105
    %3214 = vmatprep.subr.mxu0 %v3104
    %3215 = vmatpush2.msra.mxu0 %v3103
    %3216 = vmatprep.subr.mxu0 %v3102
    %3217 = vmatpush2.msra.mxu0 %v3101
    %3218 = vmatprep.subr.mxu0 %v3100
    %3219 = vmatpush2.msra.mxu0 %v3099
    %3220 = vmatprep.subr.mxu0 %v3098
    %3221 = vmatpush2.msra.mxu0 %v3097
    %3222 = vmatprep.subr.mxu0 %v3096
    %3223 = vmatpush2.msra.mxu0 %v3095
    %3224 = vmatprep.subr.mxu0 %v3094
    %3225 = vmatpush2.msra.mxu0 %v3093
    %3226 = vmatprep.subr.mxu0 %v3092
    %3227 = vmatpush2.msra.mxu0 %v3091
    %3228 = vmatprep.subr.mxu0 %v3090
    %3229 = vmatpush2.msra.mxu0 %v3089
    %3230 = vmatprep.subr.mxu0 %v3088
    %3231 = vmatpush2.msra.mxu0 %v3087
    %3232 = vmatprep.subr.mxu0 %v3086
    %3233 = vmatpush2.msra.mxu0 %v3085
    %3234 = vmatprep.subr.mxu0 %v3084
    %3235 = vmatpush2.msra.mxu0 %v3083
    %3236 = vmatprep.subr.mxu0 %v3082
    %3237 = vmatpush2.msra.mxu0 %v3081
    %3238 = vmatprep.subr.mxu0 %v3080
    %3239 = vmatpush2.msra.mxu0 %v3079
    %3240 = vmatprep.subr.mxu0 %v3078
    %3241 = vmatpush2.msra.mxu0 %v3077
    %3242 = vmatprep.subr.mxu0 %v3076
    %3243 = vmatpush2.msra.mxu0 %v3075
    %3244 = vmatprep.mubr.f32.mxu0 %v3042
    %3245 = vmatmul.mubr.f32.gmra.mxu0 %v3033
    %v3246 = vpop.f32.mrf.mxu0
    %v3247 = vadd.f32 0.0, %v3246
    %v3248 = vpop.f32.mrf.mxu0
    %v3249 = vadd.f32 0.0, %v3248
    %3250 = vdwg.mxu0
    %v3251 = vmul.f32 %v3247, 0.001953125
    %v3252 = vmul.f32 %v3249, 0.001953125
    %v3253 = vmul.f32 %v3178, %v3178
    %v3254 = vmul.f32 %v3179, %v3179
    %v3255 = vsub.f32 %v3251, %v3253
    %v3256 = vsub.f32 %v3252, %v3254
    %v3257 = vmax.f32 %v3255, 0.0
    %v3258 = vmax.f32 %v3256, 0.0
    %v3259 = vlaneseq
    %v3260 = vshrl.u32 %v3259, 7
    %v3261 = vsub.s32 0, %v3260
    %v3262 = vrot.slane %v3178, %v3261
    %v3263 = vlaneseq
    %v3264 = vshrl.u32 %v3263, 7
    %v3265 = vsub.s32 0, %v3264
    %v3266 = vrot.slane %v3179, %v3265
    %v3267 = vsub.f32 %v2991, %v3262
    %v3268 = vsub.f32 %v2992, %v3266
    %v3269 = vsub.f32 %v2993, %v3262
    %v3270 = vsub.f32 %v2994, %v3266
    %v3271 = vsub.f32 %v2995, %v3262
    %v3272 = vsub.f32 %v2996, %v3266
    %v3273 = vsub.f32 %v2997, %v3262
    %v3274 = vsub.f32 %v2998, %v3266
    %v3275 = vadd.f32 %v3257, 1e-05
    %v3276 = vadd.f32 %v3258, 1e-05
    %v3277 = vrsqrt.pop %v3275
    %v3278 = vrsqrt.pop %v3276
    %v3279 = vlaneseq
    %v3280 = vshrl.u32 %v3279, 7
    %v3281 = vsub.s32 0, %v3280
    %v3282 = vrot.slane %v3277, %v3281
    %v3283 = vlaneseq
    %v3284 = vshrl.u32 %v3283, 7
    %v3285 = vsub.s32 0, %v3284
    %v3286 = vrot.slane %v3278, %v3285
    %v3287 = vmul.f32 %v3267, %v3282
    %v3288 = vmul.f32 %v3268, %v3286
    %v3289 = vmul.f32 %v3269, %v3282
    %v3290 = vmul.f32 %v3270, %v3286
    %v3291 = vmul.f32 %v3271, %v3282
    %v3292 = vmul.f32 %v3272, %v3286
    %v3293 = vmul.f32 %v3273, %v3282
    %v3294 = vmul.f32 %v3274, %v3286
    %vm3295 = vcmp.ge.f32.partialorder %v3287, 0.0
    %vm3296 = vcmp.ge.f32.partialorder %v3288, 0.0
    %vm3297 = vcmp.ge.f32.partialorder %v3289, 0.0
    %vm3298 = vcmp.ge.f32.partialorder %v3290, 0.0
    %vm3299 = vcmp.ge.f32.partialorder %v3291, 0.0
    %vm3300 = vcmp.ge.f32.partialorder %v3292, 0.0
    %vm3301 = vcmp.ge.f32.partialorder %v3293, 0.0
    %vm3302 = vcmp.ge.f32.partialorder %v3294, 0.0
    %v3303 = vmul.f32 %v3287, 0.2
    %v3304 = vmul.f32 %v3288, 0.2
    %v3305 = vmul.f32 %v3289, 0.2
    %v3306 = vmul.f32 %v3290, 0.2
    %v3307 = vmul.f32 %v3291, 0.2
    %v3308 = vmul.f32 %v3292, 0.2
    %v3309 = vmul.f32 %v3293, 0.2
    %v3310 = vmul.f32 %v3294, 0.2
    %v3311 = vsel %vm3295, %v3287, %v3303
    %v3312 = vsel %vm3296, %v3288, %v3304
    %v3313 = vsel %vm3297, %v3289, %v3305
    %v3314 = vsel %vm3298, %v3290, %v3306
    %v3315 = vsel %vm3299, %v3291, %v3307
    %v3316 = vsel %vm3300, %v3292, %v3308
    %v3317 = vsel %vm3301, %v3293, %v3309
    %v3318 = vsel %vm3302, %v3294, %v3310
    %v3319 = vpack.c.bf16 %v3313, %v3311
    %v3320 = vpack.c.bf16 %v3314, %v3312
    %v3321 = vpack.c.bf16 %v3317, %v3315
    %v3322 = vpack.c.bf16 %v3318, %v3316
    %v3323 = vld [vmem:[%s6] sm:$0xf]
    %v3324 = vld [vmem:[%s6 + $0x4] sm:$0xf]
    %v3327 = vunpack.c.l.b16 %v3323
    %v3328 = vunpack.c.l.b16 %v3324
    %v3329 = vpack.c.b16 %v3328, %v3327
    %vm3330 = vcmask 261120
    %v3332 = vsel %vm3330, %v3329, 0
    %3334 = vmatprep.subr.bf16.mxu0 0
    %3335 = vmatpush1.bf16.msra.mxu0 0
    %3336 = vmatprep.subr.bf16.mxu0 0
    %3337 = vmatpush1.bf16.msra.mxu0 0
    %3338 = vmatprep.subr.bf16.mxu0 0
    %3339 = vmatpush1.bf16.msra.mxu0 0
    %3340 = vmatprep.subr.bf16.mxu0 0
    %3341 = vmatpush1.bf16.msra.mxu0 0
    %3342 = vmatprep.subr.bf16.mxu0 0
    %3343 = vmatpush1.bf16.msra.mxu0 0
    %3344 = vmatprep.subr.bf16.mxu0 0
    %3345 = vmatpush1.bf16.msra.mxu0 0
    %3346 = vmatprep.subr.bf16.mxu0 %v3322
    %3347 = vmatpush1.bf16.msra.mxu0 %v3321
    %3348 = vmatprep.subr.bf16.mxu0 %v3320
    %3349 = vmatpush1.bf16.msra.mxu0 %v3319
    %3350 = vmatprep.subr.bf16.mxu0 0
    %3351 = vmatpush2.bf16.msra.mxu0 0
    %3352 = vmatprep.subr.bf16.mxu0 0
    %3353 = vmatpush2.bf16.msra.mxu0 0
    %3354 = vmatprep.subr.bf16.mxu0 0
    %3355 = vmatpush2.bf16.msra.mxu0 0
    %3356 = vmatprep.subr.bf16.mxu0 0
    %3357 = vmatpush2.bf16.msra.mxu0 0
    %3358 = vmatprep.subr.bf16.mxu0 0
    %3359 = vmatpush2.bf16.msra.mxu0 0
    %3360 = vmatprep.subr.bf16.mxu0 0
    %3361 = vmatpush2.bf16.msra.mxu0 0
    %3362 = vmatprep.subr.bf16.mxu0 0
    %3363 = vmatpush2.bf16.msra.mxu0 0
    %3364 = vmatprep.subr.bf16.mxu0 0
    %3365 = vmatpush2.bf16.msra.mxu0 0
    %3366 = vmatprep.mubr.bf16.mxu0 0
    %3367 = vmatmul.mubr.bf16.gmra.mxu0 %v3332
    %v3368 = vpop.f32.mrf.mxu0
    %v3369 = vadd.f32 0.0, %v3368
    %v3370 = vpop.f32.mrf.mxu0
    %v3371 = vadd.f32 0.0, %v3370
    %v3372 = vpop.f32.mrf.mxu0
    %v3373 = vadd.f32 0.0, %v3372
    %v3374 = vpop.f32.mrf.mxu0
    %v3375 = vadd.f32 0.0, %v3374
    %3376 = vdwg.mxu0
    %v3377 = vpack.c.bf16 %v3373, %v3369
    %v3378 = vpack.c.bf16 %v3375, %v3371
    %v3379 = vld [vmem:[#allocation6] sm:$0xff]
    %v3380 = vld [vmem:[#allocation6 + $0x8] sm:$0xff]
    %v3381 = vld [vmem:[#allocation6 + $0x10] sm:$0xff]
    %v3382 = vld [vmem:[#allocation6 + $0x18] sm:$0xff]
    %v3383 = vld [vmem:[#allocation6 + $0x20] sm:$0xff]
    %v3384 = vld [vmem:[#allocation6 + $0x28] sm:$0xff]
    %v3385 = vld [vmem:[#allocation6 + $0x30] sm:$0xff]
    %v3386 = vld [vmem:[#allocation6 + $0x38] sm:$0xff]
    %v3387 = vld [vmem:[#allocation6 + $0x40] sm:$0xff]
    %v3388 = vld [vmem:[#allocation6 + $0x48] sm:$0xff]
    %v3389 = vld [vmem:[#allocation6 + $0x50] sm:$0xff]
    %v3390 = vld [vmem:[#allocation6 + $0x58] sm:$0xff]
    %v3391 = vld [vmem:[#allocation6 + $0x60] sm:$0xff]
    %v3392 = vld [vmem:[#allocation6 + $0x68] sm:$0xff]
    %v3393 = vld [vmem:[#allocation6 + $0x70] sm:$0xff]
    %v3394 = vld [vmem:[#allocation6 + $0x78] sm:$0xff]
    %v3395 = vld [vmem:[#allocation6 + $0x80] sm:$0xff]
    %v3396 = vld [vmem:[#allocation6 + $0x88] sm:$0xff]
    %v3397 = vld [vmem:[#allocation6 + $0x90] sm:$0xff]
    %v3398 = vld [vmem:[#allocation6 + $0x98] sm:$0xff]
    %v3399 = vld [vmem:[#allocation6 + $0xa0] sm:$0xff]
    %v3400 = vld [vmem:[#allocation6 + $0xa8] sm:$0xff]
    %v3401 = vld [vmem:[#allocation6 + $0xb0] sm:$0xff]
    %v3402 = vld [vmem:[#allocation6 + $0xb8] sm:$0xff]
    %v3403 = vld [vmem:[#allocation6 + $0xc0] sm:$0xff]
    %v3404 = vld [vmem:[#allocation6 + $0xc8] sm:$0xff]
    %v3405 = vld [vmem:[#allocation6 + $0xd0] sm:$0xff]
    %v3406 = vld [vmem:[#allocation6 + $0xd8] sm:$0xff]
    %v3407 = vld [vmem:[#allocation6 + $0xe0] sm:$0xff]
    %v3408 = vld [vmem:[#allocation6 + $0xe8] sm:$0xff]
    %v3409 = vld [vmem:[#allocation6 + $0xf0] sm:$0xff]
    %v3410 = vld [vmem:[#allocation6 + $0xf8] sm:$0xff]
    %s3411 = scalar_lea.vmem %s6, 8
    %v3412 = vld [vmem:[%s3411] sm:$0xf]
    %v3413 = vld [vmem:[%s3411 + $0x4] sm:$0xf]
    %v3416 = vunpack.c.l.b16 %v3412
    %v3417 = vunpack.c.l.b16 %v3413
    %v3418 = vpack.c.b16 %v3417, %v3416
    %v3420 = vsel %vm3330, %v3418, 0
    %3422 = vmatprep.subr.bf16.mxu0 0
    %3423 = vmatpush1.bf16.msra.mxu0 0
    %3424 = vmatprep.subr.bf16.mxu0 0
    %3425 = vmatpush1.bf16.msra.mxu0 0
    %3426 = vmatprep.subr.bf16.mxu0 0
    %3427 = vmatpush1.bf16.msra.mxu0 0
    %3428 = vmatprep.subr.bf16.mxu0 0
    %3429 = vmatpush1.bf16.msra.mxu0 0
    %3430 = vmatprep.subr.bf16.mxu0 0
    %3431 = vmatpush1.bf16.msra.mxu0 0
    %3432 = vmatprep.subr.bf16.mxu0 0
    %3433 = vmatpush1.bf16.msra.mxu0 0
    %3434 = vmatprep.subr.bf16.mxu0 %v3322
    %3435 = vmatpush1.bf16.msra.mxu0 %v3321
    %3436 = vmatprep.subr.bf16.mxu0 %v3320
    %3437 = vmatpush1.bf16.msra.mxu0 %v3319
    %3438 = vmatprep.subr.bf16.mxu0 0
    %3439 = vmatpush2.bf16.msra.mxu0 0
    %3440 = vmatprep.subr.bf16.mxu0 0
    %3441 = vmatpush2.bf16.msra.mxu0 0
    %3442 = vmatprep.subr.bf16.mxu0 0
    %3443 = vmatpush2.bf16.msra.mxu0 0
    %3444 = vmatprep.subr.bf16.mxu0 0
    %3445 = vmatpush2.bf16.msra.mxu0 0
    %3446 = vmatprep.subr.bf16.mxu0 0
    %3447 = vmatpush2.bf16.msra.mxu0 0
    %3448 = vmatprep.subr.bf16.mxu0 0
    %3449 = vmatpush2.bf16.msra.mxu0 0
    %3450 = vmatprep.subr.bf16.mxu0 0
    %3451 = vmatpush2.bf16.msra.mxu0 0
    %3452 = vmatprep.subr.bf16.mxu0 0
    %3453 = vmatpush2.bf16.msra.mxu0 0
    %3454 = vmatprep.mubr.bf16.mxu0 0
    %3455 = vmatmul.mubr.bf16.gmra.mxu0 %v3420
    %v3456 = vpop.f32.mrf.mxu0
    %v3457 = vadd.f32 0.0, %v3456
    %v3458 = vpop.f32.mrf.mxu0
    %v3459 = vadd.f32 0.0, %v3458
    %v3460 = vpop.f32.mrf.mxu0
    %v3461 = vadd.f32 0.0, %v3460
    %v3462 = vpop.f32.mrf.mxu0
    %v3463 = vadd.f32 0.0, %v3462
    %3464 = vdwg.mxu0
    %v3465 = vpack.c.bf16 %v3461, %v3457
    %v3466 = vpack.c.bf16 %v3463, %v3459
    %s3467 = scalar_lea.vmem [#allocation6], 256
    %v3468 = vld [vmem:[%s3467] sm:$0xff]
    %v3469 = vld [vmem:[%s3467 + $0x8] sm:$0xff]
    %v3470 = vld [vmem:[%s3467 + $0x10] sm:$0xff]
    %v3471 = vld [vmem:[%s3467 + $0x18] sm:$0xff]
    %v3472 = vld [vmem:[%s3467 + $0x20] sm:$0xff]
    %v3473 = vld [vmem:[%s3467 + $0x28] sm:$0xff]
    %v3474 = vld [vmem:[%s3467 + $0x30] sm:$0xff]
    %v3475 = vld [vmem:[%s3467 + $0x38] sm:$0xff]
    %v3476 = vld [vmem:[%s3467 + $0x40] sm:$0xff]
    %v3477 = vld [vmem:[%s3467 + $0x48] sm:$0xff]
    %v3478 = vld [vmem:[%s3467 + $0x50] sm:$0xff]
    %v3479 = vld [vmem:[%s3467 + $0x58] sm:$0xff]
    %v3480 = vld [vmem:[%s3467 + $0x60] sm:$0xff]
    %v3481 = vld [vmem:[%s3467 + $0x68] sm:$0xff]
    %v3482 = vld [vmem:[%s3467 + $0x70] sm:$0xff]
    %v3483 = vld [vmem:[%s3467 + $0x78] sm:$0xff]
    %v3484 = vld [vmem:[%s3467 + $0x80] sm:$0xff]
    %v3485 = vld [vmem:[%s3467 + $0x88] sm:$0xff]
    %v3486 = vld [vmem:[%s3467 + $0x90] sm:$0xff]
    %v3487 = vld [vmem:[%s3467 + $0x98] sm:$0xff]
    %v3488 = vld [vmem:[%s3467 + $0xa0] sm:$0xff]
    %v3489 = vld [vmem:[%s3467 + $0xa8] sm:$0xff]
    %v3490 = vld [vmem:[%s3467 + $0xb0] sm:$0xff]
    %v3491 = vld [vmem:[%s3467 + $0xb8] sm:$0xff]
    %v3492 = vld [vmem:[%s3467 + $0xc0] sm:$0xff]
    %v3493 = vld [vmem:[%s3467 + $0xc8] sm:$0xff]
    %v3494 = vld [vmem:[%s3467 + $0xd0] sm:$0xff]
    %v3495 = vld [vmem:[%s3467 + $0xd8] sm:$0xff]
    %v3496 = vld [vmem:[%s3467 + $0xe0] sm:$0xff]
    %v3497 = vld [vmem:[%s3467 + $0xe8] sm:$0xff]
    %v3498 = vld [vmem:[%s3467 + $0xf0] sm:$0xff]
    %v3499 = vld [vmem:[%s3467 + $0xf8] sm:$0xff]
    %v3532 = vunpack.c.l.b16 %v3468
    %v3533 = vunpack.c.h.b16 %v3468
    %v3534 = vunpack.c.l.b16 %v3469
    %v3535 = vunpack.c.h.b16 %v3469
    %v3536 = vunpack.c.l.b16 %v3470
    %v3537 = vunpack.c.h.b16 %v3470
    %v3538 = vunpack.c.l.b16 %v3471
    %v3539 = vunpack.c.h.b16 %v3471
    %v3540 = vunpack.c.l.b16 %v3472
    %v3541 = vunpack.c.h.b16 %v3472
    %v3542 = vunpack.c.l.b16 %v3473
    %v3543 = vunpack.c.h.b16 %v3473
    %v3544 = vunpack.c.l.b16 %v3474
    %v3545 = vunpack.c.h.b16 %v3474
    %v3546 = vunpack.c.l.b16 %v3475
    %v3547 = vunpack.c.h.b16 %v3475
    %v3548 = vunpack.c.l.b16 %v3476
    %v3549 = vunpack.c.h.b16 %v3476
    %v3550 = vunpack.c.l.b16 %v3477
    %v3551 = vunpack.c.h.b16 %v3477
    %v3552 = vunpack.c.l.b16 %v3478
    %v3553 = vunpack.c.h.b16 %v3478
    %v3554 = vunpack.c.l.b16 %v3479
    %v3555 = vunpack.c.h.b16 %v3479
    %v3556 = vunpack.c.l.b16 %v3480
    %v3557 = vunpack.c.h.b16 %v3480
    %v3558 = vunpack.c.l.b16 %v3481
    %v3559 = vunpack.c.h.b16 %v3481
    %v3560 = vunpack.c.l.b16 %v3482
    %v3561 = vunpack.c.h.b16 %v3482
    %v3562 = vunpack.c.l.b16 %v3483
    %v3563 = vunpack.c.h.b16 %v3483
    %v3564 = vunpack.c.l.b16 %v3484
    %v3565 = vunpack.c.h.b16 %v3484
    %v3566 = vunpack.c.l.b16 %v3485
    %v3567 = vunpack.c.h.b16 %v3485
    %v3568 = vunpack.c.l.b16 %v3486
    %v3569 = vunpack.c.h.b16 %v3486
    %v3570 = vunpack.c.l.b16 %v3487
    %v3571 = vunpack.c.h.b16 %v3487
    %v3572 = vunpack.c.l.b16 %v3488
    %v3573 = vunpack.c.h.b16 %v3488
    %v3574 = vunpack.c.l.b16 %v3489
    %v3575 = vunpack.c.h.b16 %v3489
    %v3576 = vunpack.c.l.b16 %v3490
    %v3577 = vunpack.c.h.b16 %v3490
    %v3578 = vunpack.c.l.b16 %v3491
    %v3579 = vunpack.c.h.b16 %v3491
    %v3580 = vunpack.c.l.b16 %v3492
    %v3581 = vunpack.c.h.b16 %v3492
    %v3582 = vunpack.c.l.b16 %v3493
    %v3583 = vunpack.c.h.b16 %v3493
    %v3584 = vunpack.c.l.b16 %v3494
    %v3585 = vunpack.c.h.b16 %v3494
    %v3586 = vunpack.c.l.b16 %v3495
    %v3587 = vunpack.c.h.b16 %v3495
    %v3588 = vunpack.c.l.b16 %v3496
    %v3589 = vunpack.c.h.b16 %v3496
    %v3590 = vunpack.c.l.b16 %v3497
    %v3591 = vunpack.c.h.b16 %v3497
    %v3592 = vunpack.c.l.b16 %v3498
    %v3593 = vunpack.c.h.b16 %v3498
    %v3594 = vunpack.c.l.b16 %v3499
    %v3595 = vunpack.c.h.b16 %v3499
    %v3596 = vpack.c.b16 %v3534, %v3532
    %v3597 = vpack.c.b16 %v3535, %v3533
    %v3598 = vpack.c.b16 %v3538, %v3536
    %v3599 = vpack.c.b16 %v3539, %v3537
    %v3600 = vpack.c.b16 %v3542, %v3540
    %v3601 = vpack.c.b16 %v3543, %v3541
    %v3602 = vpack.c.b16 %v3546, %v3544
    %v3603 = vpack.c.b16 %v3547, %v3545
    %v3604 = vpack.c.b16 %v3550, %v3548
    %v3605 = vpack.c.b16 %v3551, %v3549
    %v3606 = vpack.c.b16 %v3554, %v3552
    %v3607 = vpack.c.b16 %v3555, %v3553
    %v3608 = vpack.c.b16 %v3558, %v3556
    %v3609 = vpack.c.b16 %v3559, %v3557
    %v3610 = vpack.c.b16 %v3562, %v3560
    %v3611 = vpack.c.b16 %v3563, %v3561
    %v3612 = vpack.c.b16 %v3566, %v3564
    %v3613 = vpack.c.b16 %v3567, %v3565
    %v3614 = vpack.c.b16 %v3570, %v3568
    %v3615 = vpack.c.b16 %v3571, %v3569
    %v3616 = vpack.c.b16 %v3574, %v3572
    %v3617 = vpack.c.b16 %v3575, %v3573
    %v3618 = vpack.c.b16 %v3578, %v3576
    %v3619 = vpack.c.b16 %v3579, %v3577
    %v3620 = vpack.c.b16 %v3582, %v3580
    %v3621 = vpack.c.b16 %v3583, %v3581
    %v3622 = vpack.c.b16 %v3586, %v3584
    %v3623 = vpack.c.b16 %v3587, %v3585
    %v3624 = vpack.c.b16 %v3590, %v3588
    %v3625 = vpack.c.b16 %v3591, %v3589
    %v3626 = vpack.c.b16 %v3594, %v3592
    %v3627 = vpack.c.b16 %v3595, %v3593
    %3660 = vmatprep.subr.bf16.mxu0 %v3611
    %3661 = vmatpush1.bf16.msra.mxu0 %v3610
    %3662 = vmatprep.subr.bf16.mxu0 %v3609
    %3663 = vmatpush1.bf16.msra.mxu0 %v3608
    %3664 = vmatprep.subr.bf16.mxu0 %v3607
    %3665 = vmatpush1.bf16.msra.mxu0 %v3606
    %3666 = vmatprep.subr.bf16.mxu0 %v3605
    %3667 = vmatpush1.bf16.msra.mxu0 %v3604
    %3668 = vmatprep.subr.bf16.mxu0 %v3603
    %3669 = vmatpush1.bf16.msra.mxu0 %v3602
    %3670 = vmatprep.subr.bf16.mxu0 %v3601
    %3671 = vmatpush1.bf16.msra.mxu0 %v3600
    %3672 = vmatprep.subr.bf16.mxu0 %v3599
    %3673 = vmatpush1.bf16.msra.mxu0 %v3598
    %3674 = vmatprep.subr.bf16.mxu0 %v3597
    %3675 = vmatpush1.bf16.msra.mxu0 %v3596
    %3676 = vmatprep.subr.bf16.mxu0 %v3627
    %3677 = vmatpush2.bf16.msra.mxu0 %v3626
    %3678 = vmatprep.subr.bf16.mxu0 %v3625
    %3679 = vmatpush2.bf16.msra.mxu0 %v3624
    %3680 = vmatprep.subr.bf16.mxu0 %v3623
    %3681 = vmatpush2.bf16.msra.mxu0 %v3622
    %3682 = vmatprep.subr.bf16.mxu0 %v3621
    %3683 = vmatpush2.bf16.msra.mxu0 %v3620
    %3684 = vmatprep.subr.bf16.mxu0 %v3619
    %3685 = vmatpush2.bf16.msra.mxu0 %v3618
    %3686 = vmatprep.subr.bf16.mxu0 %v3617
    %3687 = vmatpush2.bf16.msra.mxu0 %v3616
    %3688 = vmatprep.subr.bf16.mxu0 %v3615
    %3689 = vmatpush2.bf16.msra.mxu0 %v3614
    %3690 = vmatprep.subr.bf16.mxu0 %v3613
    %3691 = vmatpush2.bf16.msra.mxu0 %v3612
    %3692 = vmatprep.mubr.bf16.mxu0 %v3466
    %3693 = vmatmul.mubr.bf16.gmra.mxu0 %v3465
    %v3694 = vpop.f32.mrf.mxu0
    %v3695 = vadd.f32 0.0, %v3694
    %v3696 = vpop.f32.mrf.mxu0
    %v3697 = vadd.f32 0.0, %v3696
    %v3698 = vpop.f32.mrf.mxu0
    %v3699 = vadd.f32 0.0, %v3698
    %v3700 = vpop.f32.mrf.mxu0
    %v3701 = vadd.f32 0.0, %v3700
    %3702 = vdwg.mxu0
    %v3735 = vunpack.c.l.b16 %v3379
    %v3736 = vunpack.c.h.b16 %v3379
    %v3737 = vunpack.c.l.b16 %v3380
    %v3738 = vunpack.c.h.b16 %v3380
    %v3739 = vunpack.c.l.b16 %v3381
    %v3740 = vunpack.c.h.b16 %v3381
    %v3741 = vunpack.c.l.b16 %v3382
    %v3742 = vunpack.c.h.b16 %v3382
    %v3743 = vunpack.c.l.b16 %v3383
    %v3744 = vunpack.c.h.b16 %v3383
    %v3745 = vunpack.c.l.b16 %v3384
    %v3746 = vunpack.c.h.b16 %v3384
    %v3747 = vunpack.c.l.b16 %v3385
    %v3748 = vunpack.c.h.b16 %v3385
    %v3749 = vunpack.c.l.b16 %v3386
    %v3750 = vunpack.c.h.b16 %v3386
    %v3751 = vunpack.c.l.b16 %v3387
    %v3752 = vunpack.c.h.b16 %v3387
    %v3753 = vunpack.c.l.b16 %v3388
    %v3754 = vunpack.c.h.b16 %v3388
    %v3755 = vunpack.c.l.b16 %v3389
    %v3756 = vunpack.c.h.b16 %v3389
    %v3757 = vunpack.c.l.b16 %v3390
    %v3758 = vunpack.c.h.b16 %v3390
    %v3759 = vunpack.c.l.b16 %v3391
    %v3760 = vunpack.c.h.b16 %v3391
    %v3761 = vunpack.c.l.b16 %v3392
    %v3762 = vunpack.c.h.b16 %v3392
    %v3763 = vunpack.c.l.b16 %v3393
    %v3764 = vunpack.c.h.b16 %v3393
    %v3765 = vunpack.c.l.b16 %v3394
    %v3766 = vunpack.c.h.b16 %v3394
    %v3767 = vunpack.c.l.b16 %v3395
    %v3768 = vunpack.c.h.b16 %v3395
    %v3769 = vunpack.c.l.b16 %v3396
    %v3770 = vunpack.c.h.b16 %v3396
    %v3771 = vunpack.c.l.b16 %v3397
    %v3772 = vunpack.c.h.b16 %v3397
    %v3773 = vunpack.c.l.b16 %v3398
    %v3774 = vunpack.c.h.b16 %v3398
    %v3775 = vunpack.c.l.b16 %v3399
    %v3776 = vunpack.c.h.b16 %v3399
    %v3777 = vunpack.c.l.b16 %v3400
    %v3778 = vunpack.c.h.b16 %v3400
    %v3779 = vunpack.c.l.b16 %v3401
    %v3780 = vunpack.c.h.b16 %v3401
    %v3781 = vunpack.c.l.b16 %v3402
    %v3782 = vunpack.c.h.b16 %v3402
    %v3783 = vunpack.c.l.b16 %v3403
    %v3784 = vunpack.c.h.b16 %v3403
    %v3785 = vunpack.c.l.b16 %v3404
    %v3786 = vunpack.c.h.b16 %v3404
    %v3787 = vunpack.c.l.b16 %v3405
    %v3788 = vunpack.c.h.b16 %v3405
    %v3789 = vunpack.c.l.b16 %v3406
    %v3790 = vunpack.c.h.b16 %v3406
    %v3791 = vunpack.c.l.b16 %v3407
    %v3792 = vunpack.c.h.b16 %v3407
    %v3793 = vunpack.c.l.b16 %v3408
    %v3794 = vunpack.c.h.b16 %v3408
    %v3795 = vunpack.c.l.b16 %v3409
    %v3796 = vunpack.c.h.b16 %v3409
    %v3797 = vunpack.c.l.b16 %v3410
    %v3798 = vunpack.c.h.b16 %v3410
    %v3799 = vpack.c.b16 %v3737, %v3735
    %v3800 = vpack.c.b16 %v3738, %v3736
    %v3801 = vpack.c.b16 %v3741, %v3739
    %v3802 = vpack.c.b16 %v3742, %v3740
    %v3803 = vpack.c.b16 %v3745, %v3743
    %v3804 = vpack.c.b16 %v3746, %v3744
    %v3805 = vpack.c.b16 %v3749, %v3747
    %v3806 = vpack.c.b16 %v3750, %v3748
    %v3807 = vpack.c.b16 %v3753, %v3751
    %v3808 = vpack.c.b16 %v3754, %v3752
    %v3809 = vpack.c.b16 %v3757, %v3755
    %v3810 = vpack.c.b16 %v3758, %v3756
    %v3811 = vpack.c.b16 %v3761, %v3759
    %v3812 = vpack.c.b16 %v3762, %v3760
    %v3813 = vpack.c.b16 %v3765, %v3763
    %v3814 = vpack.c.b16 %v3766, %v3764
    %v3815 = vpack.c.b16 %v3769, %v3767
    %v3816 = vpack.c.b16 %v3770, %v3768
    %v3817 = vpack.c.b16 %v3773, %v3771
    %v3818 = vpack.c.b16 %v3774, %v3772
    %v3819 = vpack.c.b16 %v3777, %v3775
    %v3820 = vpack.c.b16 %v3778, %v3776
    %v3821 = vpack.c.b16 %v3781, %v3779
    %v3822 = vpack.c.b16 %v3782, %v3780
    %v3823 = vpack.c.b16 %v3785, %v3783
    %v3824 = vpack.c.b16 %v3786, %v3784
    %v3825 = vpack.c.b16 %v3789, %v3787
    %v3826 = vpack.c.b16 %v3790, %v3788
    %v3827 = vpack.c.b16 %v3793, %v3791
    %v3828 = vpack.c.b16 %v3794, %v3792
    %v3829 = vpack.c.b16 %v3797, %v3795
    %v3830 = vpack.c.b16 %v3798, %v3796
    %3863 = vmatprep.subr.bf16.mxu0 %v3814
    %3864 = vmatpush1.bf16.msra.mxu0 %v3813
    %3865 = vmatprep.subr.bf16.mxu0 %v3812
    %3866 = vmatpush1.bf16.msra.mxu0 %v3811
    %3867 = vmatprep.subr.bf16.mxu0 %v3810
    %3868 = vmatpush1.bf16.msra.mxu0 %v3809
    %3869 = vmatprep.subr.bf16.mxu0 %v3808
    %3870 = vmatpush1.bf16.msra.mxu0 %v3807
    %3871 = vmatprep.subr.bf16.mxu0 %v3806
    %3872 = vmatpush1.bf16.msra.mxu0 %v3805
    %3873 = vmatprep.subr.bf16.mxu0 %v3804
    %3874 = vmatpush1.bf16.msra.mxu0 %v3803
    %3875 = vmatprep.subr.bf16.mxu0 %v3802
    %3876 = vmatpush1.bf16.msra.mxu0 %v3801
    %3877 = vmatprep.subr.bf16.mxu0 %v3800
    %3878 = vmatpush1.bf16.msra.mxu0 %v3799
    %3879 = vmatprep.subr.bf16.mxu0 %v3830
    %3880 = vmatpush2.bf16.msra.mxu0 %v3829
    %3881 = vmatprep.subr.bf16.mxu0 %v3828
    %3882 = vmatpush2.bf16.msra.mxu0 %v3827
    %3883 = vmatprep.subr.bf16.mxu0 %v3826
    %3884 = vmatpush2.bf16.msra.mxu0 %v3825
    %3885 = vmatprep.subr.bf16.mxu0 %v3824
    %3886 = vmatpush2.bf16.msra.mxu0 %v3823
    %3887 = vmatprep.subr.bf16.mxu0 %v3822
    %3888 = vmatpush2.bf16.msra.mxu0 %v3821
    %3889 = vmatprep.subr.bf16.mxu0 %v3820
    %3890 = vmatpush2.bf16.msra.mxu0 %v3819
    %3891 = vmatprep.subr.bf16.mxu0 %v3818
    %3892 = vmatpush2.bf16.msra.mxu0 %v3817
    %3893 = vmatprep.subr.bf16.mxu0 %v3816
    %3894 = vmatpush2.bf16.msra.mxu0 %v3815
    %3895 = vmatprep.mubr.bf16.mxu0 %v3378
    %3896 = vmatmul.mubr.bf16.gmra.mxu0 %v3377
    %v3897 = vpop.f32.mrf.mxu0
    %v3898 = vadd.f32 %v3695, %v3897
    %v3899 = vpop.f32.mrf.mxu0
    %v3900 = vadd.f32 %v3697, %v3899
    %v3901 = vpop.f32.mrf.mxu0
    %v3902 = vadd.f32 %v3699, %v3901
    %v3903 = vpop.f32.mrf.mxu0
    %v3904 = vadd.f32 %v3701, %v3903
    %3905 = vdwg.mxu0
    %s3906 = scalar_lea.vmem %s6, 16
    %v3907 = vld [vmem:[%s3906] sm:$0xf]
    %v3908 = vld [vmem:[%s3906 + $0x4] sm:$0xf]
    %v3911 = vunpack.c.l.b16 %v3907
    %v3912 = vunpack.c.l.b16 %v3908
    %v3913 = vpack.c.b16 %v3912, %v3911
    %v3915 = vsel %vm3330, %v3913, 0
    %3917 = vmatprep.subr.bf16.mxu0 0
    %3918 = vmatpush1.bf16.msra.mxu0 0
    %3919 = vmatprep.subr.bf16.mxu0 0
    %3920 = vmatpush1.bf16.msra.mxu0 0
    %3921 = vmatprep.subr.bf16.mxu0 0
    %3922 = vmatpush1.bf16.msra.mxu0 0
    %3923 = vmatprep.subr.bf16.mxu0 0
    %3924 = vmatpush1.bf16.msra.mxu0 0
    %3925 = vmatprep.subr.bf16.mxu0 0
    %3926 = vmatpush1.bf16.msra.mxu0 0
    %3927 = vmatprep.subr.bf16.mxu0 0
    %3928 = vmatpush1.bf16.msra.mxu0 0
    %3929 = vmatprep.subr.bf16.mxu0 %v3322
    %3930 = vmatpush1.bf16.msra.mxu0 %v3321
    %3931 = vmatprep.subr.bf16.mxu0 %v3320
    %3932 = vmatpush1.bf16.msra.mxu0 %v3319
    %3933 = vmatprep.subr.bf16.mxu0 0
    %3934 = vmatpush2.bf16.msra.mxu0 0
    %3935 = vmatprep.subr.bf16.mxu0 0
    %3936 = vmatpush2.bf16.msra.mxu0 0
    %3937 = vmatprep.subr.bf16.mxu0 0
    %3938 = vmatpush2.bf16.msra.mxu0 0
    %3939 = vmatprep.subr.bf16.mxu0 0
    %3940 = vmatpush2.bf16.msra.mxu0 0
    %3941 = vmatprep.subr.bf16.mxu0 0
    %3942 = vmatpush2.bf16.msra.mxu0 0
    %3943 = vmatprep.subr.bf16.mxu0 0
    %3944 = vmatpush2.bf16.msra.mxu0 0
    %3945 = vmatprep.subr.bf16.mxu0 0
    %3946 = vmatpush2.bf16.msra.mxu0 0
    %3947 = vmatprep.subr.bf16.mxu0 0
    %3948 = vmatpush2.bf16.msra.mxu0 0
    %3949 = vmatprep.mubr.bf16.mxu0 0
    %3950 = vmatmul.mubr.bf16.gmra.mxu0 %v3915
    %v3951 = vpop.f32.mrf.mxu0
    %v3952 = vadd.f32 0.0, %v3951
    %v3953 = vpop.f32.mrf.mxu0
    %v3954 = vadd.f32 0.0, %v3953
    %v3955 = vpop.f32.mrf.mxu0
    %v3956 = vadd.f32 0.0, %v3955
    %v3957 = vpop.f32.mrf.mxu0
    %v3958 = vadd.f32 0.0, %v3957
    %3959 = vdwg.mxu0
    %v3960 = vpack.c.bf16 %v3956, %v3952
    %v3961 = vpack.c.bf16 %v3958, %v3954
    %s3962 = scalar_lea.vmem [#allocation6], 512
    %v3963 = vld [vmem:[%s3962] sm:$0xff]
    %v3964 = vld [vmem:[%s3962 + $0x8] sm:$0xff]
    %v3965 = vld [vmem:[%s3962 + $0x10] sm:$0xff]
    %v3966 = vld [vmem:[%s3962 + $0x18] sm:$0xff]
    %v3967 = vld [vmem:[%s3962 + $0x20] sm:$0xff]
    %v3968 = vld [vmem:[%s3962 + $0x28] sm:$0xff]
    %v3969 = vld [vmem:[%s3962 + $0x30] sm:$0xff]
    %v3970 = vld [vmem:[%s3962 + $0x38] sm:$0xff]
    %v3971 = vld [vmem:[%s3962 + $0x40] sm:$0xff]
    %v3972 = vld [vmem:[%s3962 + $0x48] sm:$0xff]
    %v3973 = vld [vmem:[%s3962 + $0x50] sm:$0xff]
    %v3974 = vld [vmem:[%s3962 + $0x58] sm:$0xff]
    %v3975 = vld [vmem:[%s3962 + $0x60] sm:$0xff]
    %v3976 = vld [vmem:[%s3962 + $0x68] sm:$0xff]
    %v3977 = vld [vmem:[%s3962 + $0x70] sm:$0xff]
    %v3978 = vld [vmem:[%s3962 + $0x78] sm:$0xff]
    %v3979 = vld [vmem:[%s3962 + $0x80] sm:$0xff]
    %v3980 = vld [vmem:[%s3962 + $0x88] sm:$0xff]
    %v3981 = vld [vmem:[%s3962 + $0x90] sm:$0xff]
    %v3982 = vld [vmem:[%s3962 + $0x98] sm:$0xff]
    %v3983 = vld [vmem:[%s3962 + $0xa0] sm:$0xff]
    %v3984 = vld [vmem:[%s3962 + $0xa8] sm:$0xff]
    %v3985 = vld [vmem:[%s3962 + $0xb0] sm:$0xff]
    %v3986 = vld [vmem:[%s3962 + $0xb8] sm:$0xff]
    %v3987 = vld [vmem:[%s3962 + $0xc0] sm:$0xff]
    %v3988 = vld [vmem:[%s3962 + $0xc8] sm:$0xff]
    %v3989 = vld [vmem:[%s3962 + $0xd0] sm:$0xff]
    %v3990 = vld [vmem:[%s3962 + $0xd8] sm:$0xff]
    %v3991 = vld [vmem:[%s3962 + $0xe0] sm:$0xff]
    %v3992 = vld [vmem:[%s3962 + $0xe8] sm:$0xff]
    %v3993 = vld [vmem:[%s3962 + $0xf0] sm:$0xff]
    %v3994 = vld [vmem:[%s3962 + $0xf8] sm:$0xff]
    %v4027 = vunpack.c.l.b16 %v3963
    %v4028 = vunpack.c.h.b16 %v3963
    %v4029 = vunpack.c.l.b16 %v3964
    %v4030 = vunpack.c.h.b16 %v3964
    %v4031 = vunpack.c.l.b16 %v3965
    %v4032 = vunpack.c.h.b16 %v3965
    %v4033 = vunpack.c.l.b16 %v3966
    %v4034 = vunpack.c.h.b16 %v3966
    %v4035 = vunpack.c.l.b16 %v3967
    %v4036 = vunpack.c.h.b16 %v3967
    %v4037 = vunpack.c.l.b16 %v3968
    %v4038 = vunpack.c.h.b16 %v3968
    %v4039 = vunpack.c.l.b16 %v3969
    %v4040 = vunpack.c.h.b16 %v3969
    %v4041 = vunpack.c.l.b16 %v3970
    %v4042 = vunpack.c.h.b16 %v3970
    %v4043 = vunpack.c.l.b16 %v3971
    %v4044 = vunpack.c.h.b16 %v3971
    %v4045 = vunpack.c.l.b16 %v3972
    %v4046 = vunpack.c.h.b16 %v3972
    %v4047 = vunpack.c.l.b16 %v3973
    %v4048 = vunpack.c.h.b16 %v3973
    %v4049 = vunpack.c.l.b16 %v3974
    %v4050 = vunpack.c.h.b16 %v3974
    %v4051 = vunpack.c.l.b16 %v3975
    %v4052 = vunpack.c.h.b16 %v3975
    %v4053 = vunpack.c.l.b16 %v3976
    %v4054 = vunpack.c.h.b16 %v3976
    %v4055 = vunpack.c.l.b16 %v3977
    %v4056 = vunpack.c.h.b16 %v3977
    %v4057 = vunpack.c.l.b16 %v3978
    %v4058 = vunpack.c.h.b16 %v3978
    %v4059 = vunpack.c.l.b16 %v3979
    %v4060 = vunpack.c.h.b16 %v3979
    %v4061 = vunpack.c.l.b16 %v3980
    %v4062 = vunpack.c.h.b16 %v3980
    %v4063 = vunpack.c.l.b16 %v3981
    %v4064 = vunpack.c.h.b16 %v3981
    %v4065 = vunpack.c.l.b16 %v3982
    %v4066 = vunpack.c.h.b16 %v3982
    %v4067 = vunpack.c.l.b16 %v3983
    %v4068 = vunpack.c.h.b16 %v3983
    %v4069 = vunpack.c.l.b16 %v3984
    %v4070 = vunpack.c.h.b16 %v3984
    %v4071 = vunpack.c.l.b16 %v3985
    %v4072 = vunpack.c.h.b16 %v3985
    %v4073 = vunpack.c.l.b16 %v3986
    %v4074 = vunpack.c.h.b16 %v3986
    %v4075 = vunpack.c.l.b16 %v3987
    %v4076 = vunpack.c.h.b16 %v3987
    %v4077 = vunpack.c.l.b16 %v3988
    %v4078 = vunpack.c.h.b16 %v3988
    %v4079 = vunpack.c.l.b16 %v3989
    %v4080 = vunpack.c.h.b16 %v3989
    %v4081 = vunpack.c.l.b16 %v3990
    %v4082 = vunpack.c.h.b16 %v3990
    %v4083 = vunpack.c.l.b16 %v3991
    %v4084 = vunpack.c.h.b16 %v3991
    %v4085 = vunpack.c.l.b16 %v3992
    %v4086 = vunpack.c.h.b16 %v3992
    %v4087 = vunpack.c.l.b16 %v3993
    %v4088 = vunpack.c.h.b16 %v3993
    %v4089 = vunpack.c.l.b16 %v3994
    %v4090 = vunpack.c.h.b16 %v3994
    %v4091 = vpack.c.b16 %v4029, %v4027
    %v4092 = vpack.c.b16 %v4030, %v4028
    %v4093 = vpack.c.b16 %v4033, %v4031
    %v4094 = vpack.c.b16 %v4034, %v4032
    %v4095 = vpack.c.b16 %v4037, %v4035
    %v4096 = vpack.c.b16 %v4038, %v4036
    %v4097 = vpack.c.b16 %v4041, %v4039
    %v4098 = vpack.c.b16 %v4042, %v4040
    %v4099 = vpack.c.b16 %v4045, %v4043
    %v4100 = vpack.c.b16 %v4046, %v4044
    %v4101 = vpack.c.b16 %v4049, %v4047
    %v4102 = vpack.c.b16 %v4050, %v4048
    %v4103 = vpack.c.b16 %v4053, %v4051
    %v4104 = vpack.c.b16 %v4054, %v4052
    %v4105 = vpack.c.b16 %v4057, %v4055
    %v4106 = vpack.c.b16 %v4058, %v4056
    %v4107 = vpack.c.b16 %v4061, %v4059
    %v4108 = vpack.c.b16 %v4062, %v4060
    %v4109 = vpack.c.b16 %v4065, %v4063
    %v4110 = vpack.c.b16 %v4066, %v4064
    %v4111 = vpack.c.b16 %v4069, %v4067
    %v4112 = vpack.c.b16 %v4070, %v4068
    %v4113 = vpack.c.b16 %v4073, %v4071
    %v4114 = vpack.c.b16 %v4074, %v4072
    %v4115 = vpack.c.b16 %v4077, %v4075
    %v4116 = vpack.c.b16 %v4078, %v4076
    %v4117 = vpack.c.b16 %v4081, %v4079
    %v4118 = vpack.c.b16 %v4082, %v4080
    %v4119 = vpack.c.b16 %v4085, %v4083
    %v4120 = vpack.c.b16 %v4086, %v4084
    %v4121 = vpack.c.b16 %v4089, %v4087
    %v4122 = vpack.c.b16 %v4090, %v4088
    %4155 = vmatprep.subr.bf16.mxu0 %v4106
    %4156 = vmatpush1.bf16.msra.mxu0 %v4105
    %4157 = vmatprep.subr.bf16.mxu0 %v4104
    %4158 = vmatpush1.bf16.msra.mxu0 %v4103
    %4159 = vmatprep.subr.bf16.mxu0 %v4102
    %4160 = vmatpush1.bf16.msra.mxu0 %v4101
    %4161 = vmatprep.subr.bf16.mxu0 %v4100
    %4162 = vmatpush1.bf16.msra.mxu0 %v4099
    %4163 = vmatprep.subr.bf16.mxu0 %v4098
    %4164 = vmatpush1.bf16.msra.mxu0 %v4097
    %4165 = vmatprep.subr.bf16.mxu0 %v4096
    %4166 = vmatpush1.bf16.msra.mxu0 %v4095
    %4167 = vmatprep.subr.bf16.mxu0 %v4094
    %4168 = vmatpush1.bf16.msra.mxu0 %v4093
    %4169 = vmatprep.subr.bf16.mxu0 %v4092
    %4170 = vmatpush1.bf16.msra.mxu0 %v4091
    %4171 = vmatprep.subr.bf16.mxu0 %v4122
    %4172 = vmatpush2.bf16.msra.mxu0 %v4121
    %4173 = vmatprep.subr.bf16.mxu0 %v4120
    %4174 = vmatpush2.bf16.msra.mxu0 %v4119
    %4175 = vmatprep.subr.bf16.mxu0 %v4118
    %4176 = vmatpush2.bf16.msra.mxu0 %v4117
    %4177 = vmatprep.subr.bf16.mxu0 %v4116
    %4178 = vmatpush2.bf16.msra.mxu0 %v4115
    %4179 = vmatprep.subr.bf16.mxu0 %v4114
    %4180 = vmatpush2.bf16.msra.mxu0 %v4113
    %4181 = vmatprep.subr.bf16.mxu0 %v4112
    %4182 = vmatpush2.bf16.msra.mxu0 %v4111
    %4183 = vmatprep.subr.bf16.mxu0 %v4110
    %4184 = vmatpush2.bf16.msra.mxu0 %v4109
    %4185 = vmatprep.subr.bf16.mxu0 %v4108
    %4186 = vmatpush2.bf16.msra.mxu0 %v4107
    %4187 = vmatprep.mubr.bf16.mxu0 %v3961
    %4188 = vmatmul.mubr.bf16.gmra.mxu0 %v3960
    %v4189 = vpop.f32.mrf.mxu0
    %v4190 = vadd.f32 0.0, %v4189
    %v4191 = vpop.f32.mrf.mxu0
    %v4192 = vadd.f32 0.0, %v4191
    %v4193 = vpop.f32.mrf.mxu0
    %v4194 = vadd.f32 0.0, %v4193
    %v4195 = vpop.f32.mrf.mxu0
    %v4196 = vadd.f32 0.0, %v4195
    %4197 = vdwg.mxu0
    %v4198 = vadd.f32 %v3898, %v4190
    %v4199 = vadd.f32 %v3900, %v4192
    %v4200 = vadd.f32 %v3902, %v4194
    %v4201 = vadd.f32 %v3904, %v4196
    %s4202 = scalar_lea.vmem %s6, 24
    %v4203 = vld [vmem:[%s4202] sm:$0xf]
    %v4204 = vld [vmem:[%s4202 + $0x4] sm:$0xf]
    %v4207 = vunpack.c.l.b16 %v4203
    %v4208 = vunpack.c.l.b16 %v4204
    %v4209 = vpack.c.b16 %v4208, %v4207
    %v4211 = vsel %vm3330, %v4209, 0
    %4213 = vmatprep.subr.bf16.mxu0 0
    %4214 = vmatpush1.bf16.msra.mxu0 0
    %4215 = vmatprep.subr.bf16.mxu0 0
    %4216 = vmatpush1.bf16.msra.mxu0 0
    %4217 = vmatprep.subr.bf16.mxu0 0
    %4218 = vmatpush1.bf16.msra.mxu0 0
    %4219 = vmatprep.subr.bf16.mxu0 0
    %4220 = vmatpush1.bf16.msra.mxu0 0
    %4221 = vmatprep.subr.bf16.mxu0 0
    %4222 = vmatpush1.bf16.msra.mxu0 0
    %4223 = vmatprep.subr.bf16.mxu0 0
    %4224 = vmatpush1.bf16.msra.mxu0 0
    %4225 = vmatprep.subr.bf16.mxu0 %v3322
    %4226 = vmatpush1.bf16.msra.mxu0 %v3321
    %4227 = vmatprep.subr.bf16.mxu0 %v3320
    %4228 = vmatpush1.bf16.msra.mxu0 %v3319
    %4229 = vmatprep.subr.bf16.mxu0 0
    %4230 = vmatpush2.bf16.msra.mxu0 0
    %4231 = vmatprep.subr.bf16.mxu0 0
    %4232 = vmatpush2.bf16.msra.mxu0 0
    %4233 = vmatprep.subr.bf16.mxu0 0
    %4234 = vmatpush2.bf16.msra.mxu0 0
    %4235 = vmatprep.subr.bf16.mxu0 0
    %4236 = vmatpush2.bf16.msra.mxu0 0
    %4237 = vmatprep.subr.bf16.mxu0 0
    %4238 = vmatpush2.bf16.msra.mxu0 0
    %4239 = vmatprep.subr.bf16.mxu0 0
    %4240 = vmatpush2.bf16.msra.mxu0 0
    %4241 = vmatprep.subr.bf16.mxu0 0
    %4242 = vmatpush2.bf16.msra.mxu0 0
    %4243 = vmatprep.subr.bf16.mxu0 0
    %4244 = vmatpush2.bf16.msra.mxu0 0
    %4245 = vmatprep.mubr.bf16.mxu0 0
    %4246 = vmatmul.mubr.bf16.gmra.mxu0 %v4211
    %v4247 = vpop.f32.mrf.mxu0
    %v4248 = vadd.f32 0.0, %v4247
    %v4249 = vpop.f32.mrf.mxu0
    %v4250 = vadd.f32 0.0, %v4249
    %v4251 = vpop.f32.mrf.mxu0
    %v4252 = vadd.f32 0.0, %v4251
    %v4253 = vpop.f32.mrf.mxu0
    %v4254 = vadd.f32 0.0, %v4253
    %4255 = vdwg.mxu0
    %v4256 = vpack.c.bf16 %v4252, %v4248
    %v4257 = vpack.c.bf16 %v4254, %v4250
    %s4258 = scalar_lea.vmem [#allocation6], 768
    %v4259 = vld [vmem:[%s4258] sm:$0xff]
    %v4260 = vld [vmem:[%s4258 + $0x8] sm:$0xff]
    %v4261 = vld [vmem:[%s4258 + $0x10] sm:$0xff]
    %v4262 = vld [vmem:[%s4258 + $0x18] sm:$0xff]
    %v4263 = vld [vmem:[%s4258 + $0x20] sm:$0xff]
    %v4264 = vld [vmem:[%s4258 + $0x28] sm:$0xff]
    %v4265 = vld [vmem:[%s4258 + $0x30] sm:$0xff]
    %v4266 = vld [vmem:[%s4258 + $0x38] sm:$0xff]
    %v4267 = vld [vmem:[%s4258 + $0x40] sm:$0xff]
    %v4268 = vld [vmem:[%s4258 + $0x48] sm:$0xff]
    %v4269 = vld [vmem:[%s4258 + $0x50] sm:$0xff]
    %v4270 = vld [vmem:[%s4258 + $0x58] sm:$0xff]
    %v4271 = vld [vmem:[%s4258 + $0x60] sm:$0xff]
    %v4272 = vld [vmem:[%s4258 + $0x68] sm:$0xff]
    %v4273 = vld [vmem:[%s4258 + $0x70] sm:$0xff]
    %v4274 = vld [vmem:[%s4258 + $0x78] sm:$0xff]
    %v4275 = vld [vmem:[%s4258 + $0x80] sm:$0xff]
    %v4276 = vld [vmem:[%s4258 + $0x88] sm:$0xff]
    %v4277 = vld [vmem:[%s4258 + $0x90] sm:$0xff]
    %v4278 = vld [vmem:[%s4258 + $0x98] sm:$0xff]
    %v4279 = vld [vmem:[%s4258 + $0xa0] sm:$0xff]
    %v4280 = vld [vmem:[%s4258 + $0xa8] sm:$0xff]
    %v4281 = vld [vmem:[%s4258 + $0xb0] sm:$0xff]
    %v4282 = vld [vmem:[%s4258 + $0xb8] sm:$0xff]
    %v4283 = vld [vmem:[%s4258 + $0xc0] sm:$0xff]
    %v4284 = vld [vmem:[%s4258 + $0xc8] sm:$0xff]
    %v4285 = vld [vmem:[%s4258 + $0xd0] sm:$0xff]
    %v4286 = vld [vmem:[%s4258 + $0xd8] sm:$0xff]
    %v4287 = vld [vmem:[%s4258 + $0xe0] sm:$0xff]
    %v4288 = vld [vmem:[%s4258 + $0xe8] sm:$0xff]
    %v4289 = vld [vmem:[%s4258 + $0xf0] sm:$0xff]
    %v4290 = vld [vmem:[%s4258 + $0xf8] sm:$0xff]
    %v4323 = vunpack.c.l.b16 %v4259
    %v4324 = vunpack.c.h.b16 %v4259
    %v4325 = vunpack.c.l.b16 %v4260
    %v4326 = vunpack.c.h.b16 %v4260
    %v4327 = vunpack.c.l.b16 %v4261
    %v4328 = vunpack.c.h.b16 %v4261
    %v4329 = vunpack.c.l.b16 %v4262
    %v4330 = vunpack.c.h.b16 %v4262
    %v4331 = vunpack.c.l.b16 %v4263
    %v4332 = vunpack.c.h.b16 %v4263
    %v4333 = vunpack.c.l.b16 %v4264
    %v4334 = vunpack.c.h.b16 %v4264
    %v4335 = vunpack.c.l.b16 %v4265
    %v4336 = vunpack.c.h.b16 %v4265
    %v4337 = vunpack.c.l.b16 %v4266
    %v4338 = vunpack.c.h.b16 %v4266
    %v4339 = vunpack.c.l.b16 %v4267
    %v4340 = vunpack.c.h.b16 %v4267
    %v4341 = vunpack.c.l.b16 %v4268
    %v4342 = vunpack.c.h.b16 %v4268
    %v4343 = vunpack.c.l.b16 %v4269
    %v4344 = vunpack.c.h.b16 %v4269
    %v4345 = vunpack.c.l.b16 %v4270
    %v4346 = vunpack.c.h.b16 %v4270
    %v4347 = vunpack.c.l.b16 %v4271
    %v4348 = vunpack.c.h.b16 %v4271
    %v4349 = vunpack.c.l.b16 %v4272
    %v4350 = vunpack.c.h.b16 %v4272
    %v4351 = vunpack.c.l.b16 %v4273
    %v4352 = vunpack.c.h.b16 %v4273
    %v4353 = vunpack.c.l.b16 %v4274
    %v4354 = vunpack.c.h.b16 %v4274
    %v4355 = vunpack.c.l.b16 %v4275
    %v4356 = vunpack.c.h.b16 %v4275
    %v4357 = vunpack.c.l.b16 %v4276
    %v4358 = vunpack.c.h.b16 %v4276
    %v4359 = vunpack.c.l.b16 %v4277
    %v4360 = vunpack.c.h.b16 %v4277
    %v4361 = vunpack.c.l.b16 %v4278
    %v4362 = vunpack.c.h.b16 %v4278
    %v4363 = vunpack.c.l.b16 %v4279
    %v4364 = vunpack.c.h.b16 %v4279
    %v4365 = vunpack.c.l.b16 %v4280
    %v4366 = vunpack.c.h.b16 %v4280
    %v4367 = vunpack.c.l.b16 %v4281
    %v4368 = vunpack.c.h.b16 %v4281
    %v4369 = vunpack.c.l.b16 %v4282
    %v4370 = vunpack.c.h.b16 %v4282
    %v4371 = vunpack.c.l.b16 %v4283
    %v4372 = vunpack.c.h.b16 %v4283
    %v4373 = vunpack.c.l.b16 %v4284
    %v4374 = vunpack.c.h.b16 %v4284
    %v4375 = vunpack.c.l.b16 %v4285
    %v4376 = vunpack.c.h.b16 %v4285
    %v4377 = vunpack.c.l.b16 %v4286
    %v4378 = vunpack.c.h.b16 %v4286
    %v4379 = vunpack.c.l.b16 %v4287
    %v4380 = vunpack.c.h.b16 %v4287
    %v4381 = vunpack.c.l.b16 %v4288
    %v4382 = vunpack.c.h.b16 %v4288
    %v4383 = vunpack.c.l.b16 %v4289
    %v4384 = vunpack.c.h.b16 %v4289
    %v4385 = vunpack.c.l.b16 %v4290
    %v4386 = vunpack.c.h.b16 %v4290
    %v4387 = vpack.c.b16 %v4325, %v4323
    %v4388 = vpack.c.b16 %v4326, %v4324
    %v4389 = vpack.c.b16 %v4329, %v4327
    %v4390 = vpack.c.b16 %v4330, %v4328
    %v4391 = vpack.c.b16 %v4333, %v4331
    %v4392 = vpack.c.b16 %v4334, %v4332
    %v4393 = vpack.c.b16 %v4337, %v4335
    %v4394 = vpack.c.b16 %v4338, %v4336
    %v4395 = vpack.c.b16 %v4341, %v4339
    %v4396 = vpack.c.b16 %v4342, %v4340
    %v4397 = vpack.c.b16 %v4345, %v4343
    %v4398 = vpack.c.b16 %v4346, %v4344
    %v4399 = vpack.c.b16 %v4349, %v4347
    %v4400 = vpack.c.b16 %v4350, %v4348
    %v4401 = vpack.c.b16 %v4353, %v4351
    %v4402 = vpack.c.b16 %v4354, %v4352
    %v4403 = vpack.c.b16 %v4357, %v4355
    %v4404 = vpack.c.b16 %v4358, %v4356
    %v4405 = vpack.c.b16 %v4361, %v4359
    %v4406 = vpack.c.b16 %v4362, %v4360
    %v4407 = vpack.c.b16 %v4365, %v4363
    %v4408 = vpack.c.b16 %v4366, %v4364
    %v4409 = vpack.c.b16 %v4369, %v4367
    %v4410 = vpack.c.b16 %v4370, %v4368
    %v4411 = vpack.c.b16 %v4373, %v4371
    %v4412 = vpack.c.b16 %v4374, %v4372
    %v4413 = vpack.c.b16 %v4377, %v4375
    %v4414 = vpack.c.b16 %v4378, %v4376
    %v4415 = vpack.c.b16 %v4381, %v4379
    %v4416 = vpack.c.b16 %v4382, %v4380
    %v4417 = vpack.c.b16 %v4385, %v4383
    %v4418 = vpack.c.b16 %v4386, %v4384
    %4451 = vmatprep.subr.bf16.mxu0 %v4402
    %4452 = vmatpush1.bf16.msra.mxu0 %v4401
    %4453 = vmatprep.subr.bf16.mxu0 %v4400
    %4454 = vmatpush1.bf16.msra.mxu0 %v4399
    %4455 = vmatprep.subr.bf16.mxu0 %v4398
    %4456 = vmatpush1.bf16.msra.mxu0 %v4397
    %4457 = vmatprep.subr.bf16.mxu0 %v4396
    %4458 = vmatpush1.bf16.msra.mxu0 %v4395
    %4459 = vmatprep.subr.bf16.mxu0 %v4394
    %4460 = vmatpush1.bf16.msra.mxu0 %v4393
    %4461 = vmatprep.subr.bf16.mxu0 %v4392
    %4462 = vmatpush1.bf16.msra.mxu0 %v4391
    %4463 = vmatprep.subr.bf16.mxu0 %v4390
    %4464 = vmatpush1.bf16.msra.mxu0 %v4389
    %4465 = vmatprep.subr.bf16.mxu0 %v4388
    %4466 = vmatpush1.bf16.msra.mxu0 %v4387
    %4467 = vmatprep.subr.bf16.mxu0 %v4418
    %4468 = vmatpush2.bf16.msra.mxu0 %v4417
    %4469 = vmatprep.subr.bf16.mxu0 %v4416
    %4470 = vmatpush2.bf16.msra.mxu0 %v4415
    %4471 = vmatprep.subr.bf16.mxu0 %v4414
    %4472 = vmatpush2.bf16.msra.mxu0 %v4413
    %4473 = vmatprep.subr.bf16.mxu0 %v4412
    %4474 = vmatpush2.bf16.msra.mxu0 %v4411
    %4475 = vmatprep.subr.bf16.mxu0 %v4410
    %4476 = vmatpush2.bf16.msra.mxu0 %v4409
    %4477 = vmatprep.subr.bf16.mxu0 %v4408
    %4478 = vmatpush2.bf16.msra.mxu0 %v4407
    %4479 = vmatprep.subr.bf16.mxu0 %v4406
    %4480 = vmatpush2.bf16.msra.mxu0 %v4405
    %4481 = vmatprep.subr.bf16.mxu0 %v4404
    %4482 = vmatpush2.bf16.msra.mxu0 %v4403
    %4483 = vmatprep.mubr.bf16.mxu0 %v4257
    %4484 = vmatmul.mubr.bf16.gmra.mxu0 %v4256
    %v4485 = vpop.f32.mrf.mxu0
    %v4486 = vadd.f32 0.0, %v4485
    %v4487 = vpop.f32.mrf.mxu0
    %v4488 = vadd.f32 0.0, %v4487
    %v4489 = vpop.f32.mrf.mxu0
    %v4490 = vadd.f32 0.0, %v4489
    %v4491 = vpop.f32.mrf.mxu0
    %v4492 = vadd.f32 0.0, %v4491
    %4493 = vdwg.mxu0
    %v4494 = vadd.f32 %v4198, %v4486
    %v4495 = vadd.f32 %v4199, %v4488
    %v4496 = vadd.f32 %v4200, %v4490
    %v4497 = vadd.f32 %v4201, %v4492
    %v4498 = vadd.f32 %v4494, %v4496
    %v4499 = vrot.slane %v4498, 4
    %v4500 = vadd.f32 %v4498, %v4499
    %v4501 = vrot.slane %v4500, 2
    %v4502 = vadd.f32 %v4500, %v4501
    %v4503 = vrot.slane %v4502, 1
    %v4504 = vadd.f32 %v4502, %v4503
    %v4505 = vadd.f32 %v4495, %v4497
    %v4506 = vrot.slane %v4505, 4
    %v4507 = vadd.f32 %v4505, %v4506
    %v4508 = vrot.slane %v4507, 2
    %v4509 = vadd.f32 %v4507, %v4508
    %v4510 = vrot.slane %v4509, 1
    %v4511 = vadd.f32 %v4509, %v4510
    %v4512 = vmul.f32 %v4494, %v4494
    %v4513 = vmul.f32 %v4495, %v4495
    %v4514 = vmul.f32 %v4496, %v4496
    %v4515 = vmul.f32 %v4497, %v4497
    %v4516 = vadd.f32 %v4512, %v4514
    %v4517 = vrot.slane %v4516, 4
    %v4518 = vadd.f32 %v4516, %v4517
    %v4519 = vrot.slane %v4518, 2
    %v4520 = vadd.f32 %v4518, %v4519
    %v4521 = vrot.slane %v4520, 1
    %v4522 = vadd.f32 %v4520, %v4521
    %v4523 = vadd.f32 %v4513, %v4515
    %v4524 = vrot.slane %v4523, 4
    %v4525 = vadd.f32 %v4523, %v4524
    %v4526 = vrot.slane %v4525, 2
    %v4527 = vadd.f32 %v4525, %v4526
    %v4528 = vrot.slane %v4527, 1
    %v4529 = vadd.f32 %v4527, %v4528
    %v4530 = vld [vmem:[#allocation7] sm:$0xff]
    %v4531 = vld [vmem:[#allocation7 + $0x8] sm:$0xff]
    %v4532 = vld [vmem:[#allocation7 + $0x10] sm:$0xff]
    %v4533 = vld [vmem:[#allocation7 + $0x18] sm:$0xff]
    %v4534 = vld [vmem:[#allocation7 + $0x20] sm:$0xff]
    %v4535 = vld [vmem:[#allocation7 + $0x28] sm:$0xff]
    %v4536 = vld [vmem:[#allocation7 + $0x30] sm:$0xff]
    %v4537 = vld [vmem:[#allocation7 + $0x38] sm:$0xff]
    %v4538 = vld [vmem:[#allocation7 + $0x40] sm:$0xff]
    %v4539 = vld [vmem:[#allocation7 + $0x48] sm:$0xff]
    %v4540 = vld [vmem:[#allocation7 + $0x50] sm:$0xff]
    %v4541 = vld [vmem:[#allocation7 + $0x58] sm:$0xff]
    %v4542 = vld [vmem:[#allocation7 + $0x60] sm:$0xff]
    %v4543 = vld [vmem:[#allocation7 + $0x68] sm:$0xff]
    %v4544 = vld [vmem:[#allocation7 + $0x70] sm:$0xff]
    %v4545 = vld [vmem:[#allocation7 + $0x78] sm:$0xff]
    %v4546 = vld [vmem:[#allocation7 + $0x80] sm:$0xff]
    %v4547 = vld [vmem:[#allocation7 + $0x88] sm:$0xff]
    %v4548 = vld [vmem:[#allocation7 + $0x90] sm:$0xff]
    %v4549 = vld [vmem:[#allocation7 + $0x98] sm:$0xff]
    %v4550 = vld [vmem:[#allocation7 + $0xa0] sm:$0xff]
    %v4551 = vld [vmem:[#allocation7 + $0xa8] sm:$0xff]
    %v4552 = vld [vmem:[#allocation7 + $0xb0] sm:$0xff]
    %v4553 = vld [vmem:[#allocation7 + $0xb8] sm:$0xff]
    %v4554 = vld [vmem:[#allocation7 + $0xc0] sm:$0xff]
    %v4555 = vld [vmem:[#allocation7 + $0xc8] sm:$0xff]
    %v4556 = vld [vmem:[#allocation7 + $0xd0] sm:$0xff]
    %v4557 = vld [vmem:[#allocation7 + $0xd8] sm:$0xff]
    %v4558 = vld [vmem:[#allocation7 + $0xe0] sm:$0xff]
    %v4559 = vld [vmem:[#allocation7 + $0xe8] sm:$0xff]
    %v4560 = vld [vmem:[#allocation7 + $0xf0] sm:$0xff]
    %v4561 = vld [vmem:[#allocation7 + $0xf8] sm:$0xff]
    %v4562 = vld [vmem:[#allocation7 + $0x100] sm:$0xff]
    %v4563 = vld [vmem:[#allocation7 + $0x108] sm:$0xff]
    %v4564 = vld [vmem:[#allocation7 + $0x110] sm:$0xff]
    %v4565 = vld [vmem:[#allocation7 + $0x118] sm:$0xff]
    %v4566 = vld [vmem:[#allocation7 + $0x120] sm:$0xff]
    %v4567 = vld [vmem:[#allocation7 + $0x128] sm:$0xff]
    %v4568 = vld [vmem:[#allocation7 + $0x130] sm:$0xff]
    %v4569 = vld [vmem:[#allocation7 + $0x138] sm:$0xff]
    %v4570 = vld [vmem:[#allocation7 + $0x140] sm:$0xff]
    %v4571 = vld [vmem:[#allocation7 + $0x148] sm:$0xff]
    %v4572 = vld [vmem:[#allocation7 + $0x150] sm:$0xff]
    %v4573 = vld [vmem:[#allocation7 + $0x158] sm:$0xff]
    %v4574 = vld [vmem:[#allocation7 + $0x160] sm:$0xff]
    %v4575 = vld [vmem:[#allocation7 + $0x168] sm:$0xff]
    %v4576 = vld [vmem:[#allocation7 + $0x170] sm:$0xff]
    %v4577 = vld [vmem:[#allocation7 + $0x178] sm:$0xff]
    %v4578 = vld [vmem:[#allocation7 + $0x180] sm:$0xff]
    %v4579 = vld [vmem:[#allocation7 + $0x188] sm:$0xff]
    %v4580 = vld [vmem:[#allocation7 + $0x190] sm:$0xff]
    %v4581 = vld [vmem:[#allocation7 + $0x198] sm:$0xff]
    %v4582 = vld [vmem:[#allocation7 + $0x1a0] sm:$0xff]
    %v4583 = vld [vmem:[#allocation7 + $0x1a8] sm:$0xff]
    %v4584 = vld [vmem:[#allocation7 + $0x1b0] sm:$0xff]
    %v4585 = vld [vmem:[#allocation7 + $0x1b8] sm:$0xff]
    %v4586 = vld [vmem:[#allocation7 + $0x1c0] sm:$0xff]
    %v4587 = vld [vmem:[#allocation7 + $0x1c8] sm:$0xff]
    %v4588 = vld [vmem:[#allocation7 + $0x1d0] sm:$0xff]
    %v4589 = vld [vmem:[#allocation7 + $0x1d8] sm:$0xff]
    %v4590 = vld [vmem:[#allocation7 + $0x1e0] sm:$0xff]
    %v4591 = vld [vmem:[#allocation7 + $0x1e8] sm:$0xff]
    %v4592 = vld [vmem:[#allocation7 + $0x1f0] sm:$0xff]
    %v4593 = vld [vmem:[#allocation7 + $0x1f8] sm:$0xff]
    %4594 = vmatprep.subr.mxu0 %v4561
    %4595 = vmatpush1.msra.mxu0 %v4560
    %4596 = vmatprep.subr.mxu0 %v4559
    %4597 = vmatpush1.msra.mxu0 %v4558
    %4598 = vmatprep.subr.mxu0 %v4557
    %4599 = vmatpush1.msra.mxu0 %v4556
    %4600 = vmatprep.subr.mxu0 %v4555
    %4601 = vmatpush1.msra.mxu0 %v4554
    %4602 = vmatprep.subr.mxu0 %v4553
    %4603 = vmatpush1.msra.mxu0 %v4552
    %4604 = vmatprep.subr.mxu0 %v4551
    %4605 = vmatpush1.msra.mxu0 %v4550
    %4606 = vmatprep.subr.mxu0 %v4549
    %4607 = vmatpush1.msra.mxu0 %v4548
    %4608 = vmatprep.subr.mxu0 %v4547
    %4609 = vmatpush1.msra.mxu0 %v4546
    %4610 = vmatprep.subr.mxu0 %v4545
    %4611 = vmatpush1.msra.mxu0 %v4544
    %4612 = vmatprep.subr.mxu0 %v4543
    %4613 = vmatpush1.msra.mxu0 %v4542
    %4614 = vmatprep.subr.mxu0 %v4541
    %4615 = vmatpush1.msra.mxu0 %v4540
    %4616 = vmatprep.subr.mxu0 %v4539
    %4617 = vmatpush1.msra.mxu0 %v4538
    %4618 = vmatprep.subr.mxu0 %v4537
    %4619 = vmatpush1.msra.mxu0 %v4536
    %4620 = vmatprep.subr.mxu0 %v4535
    %4621 = vmatpush1.msra.mxu0 %v4534
    %4622 = vmatprep.subr.mxu0 %v4533
    %4623 = vmatpush1.msra.mxu0 %v4532
    %4624 = vmatprep.subr.mxu0 %v4531
    %4625 = vmatpush1.msra.mxu0 %v4530
    %4626 = vmatprep.subr.mxu0 %v4593
    %4627 = vmatpush2.msra.mxu0 %v4592
    %4628 = vmatprep.subr.mxu0 %v4591
    %4629 = vmatpush2.msra.mxu0 %v4590
    %4630 = vmatprep.subr.mxu0 %v4589
    %4631 = vmatpush2.msra.mxu0 %v4588
    %4632 = vmatprep.subr.mxu0 %v4587
    %4633 = vmatpush2.msra.mxu0 %v4586
    %4634 = vmatprep.subr.mxu0 %v4585
    %4635 = vmatpush2.msra.mxu0 %v4584
    %4636 = vmatprep.subr.mxu0 %v4583
    %4637 = vmatpush2.msra.mxu0 %v4582
    %4638 = vmatprep.subr.mxu0 %v4581
    %4639 = vmatpush2.msra.mxu0 %v4580
    %4640 = vmatprep.subr.mxu0 %v4579
    %4641 = vmatpush2.msra.mxu0 %v4578
    %4642 = vmatprep.subr.mxu0 %v4577
    %4643 = vmatpush2.msra.mxu0 %v4576
    %4644 = vmatprep.subr.mxu0 %v4575
    %4645 = vmatpush2.msra.mxu0 %v4574
    %4646 = vmatprep.subr.mxu0 %v4573
    %4647 = vmatpush2.msra.mxu0 %v4572
    %4648 = vmatprep.subr.mxu0 %v4571
    %4649 = vmatpush2.msra.mxu0 %v4570
    %4650 = vmatprep.subr.mxu0 %v4569
    %4651 = vmatpush2.msra.mxu0 %v4568
    %4652 = vmatprep.subr.mxu0 %v4567
    %4653 = vmatpush2.msra.mxu0 %v4566
    %4654 = vmatprep.subr.mxu0 %v4565
    %4655 = vmatpush2.msra.mxu0 %v4564
    %4656 = vmatprep.subr.mxu0 %v4563
    %4657 = vmatpush2.msra.mxu0 %v4562
    %4658 = vmatprep.mubr.f32.mxu0 %v4511
    %4659 = vmatmul.mubr.f32.gmra.mxu0 %v4504
    %v4660 = vpop.f32.mrf.mxu0
    %v4661 = vadd.f32 0.0, %v4660
    %v4662 = vpop.f32.mrf.mxu0
    %v4663 = vadd.f32 0.0, %v4662
    %4664 = vdwg.mxu0
    %v4665 = vmul.f32 %v4661, 0.0078125
    %v4666 = vmul.f32 %v4663, 0.0078125
    %4667 = vmatprep.subr.mxu0 %v4561
    %4668 = vmatpush1.msra.mxu0 %v4560
    %4669 = vmatprep.subr.mxu0 %v4559
    %4670 = vmatpush1.msra.mxu0 %v4558
    %4671 = vmatprep.subr.mxu0 %v4557
    %4672 = vmatpush1.msra.mxu0 %v4556
    %4673 = vmatprep.subr.mxu0 %v4555
    %4674 = vmatpush1.msra.mxu0 %v4554
    %4675 = vmatprep.subr.mxu0 %v4553
    %4676 = vmatpush1.msra.mxu0 %v4552
    %4677 = vmatprep.subr.mxu0 %v4551
    %4678 = vmatpush1.msra.mxu0 %v4550
    %4679 = vmatprep.subr.mxu0 %v4549
    %4680 = vmatpush1.msra.mxu0 %v4548
    %4681 = vmatprep.subr.mxu0 %v4547
    %4682 = vmatpush1.msra.mxu0 %v4546
    %4683 = vmatprep.subr.mxu0 %v4545
    %4684 = vmatpush1.msra.mxu0 %v4544
    %4685 = vmatprep.subr.mxu0 %v4543
    %4686 = vmatpush1.msra.mxu0 %v4542
    %4687 = vmatprep.subr.mxu0 %v4541
    %4688 = vmatpush1.msra.mxu0 %v4540
    %4689 = vmatprep.subr.mxu0 %v4539
    %4690 = vmatpush1.msra.mxu0 %v4538
    %4691 = vmatprep.subr.mxu0 %v4537
    %4692 = vmatpush1.msra.mxu0 %v4536
    %4693 = vmatprep.subr.mxu0 %v4535
    %4694 = vmatpush1.msra.mxu0 %v4534
    %4695 = vmatprep.subr.mxu0 %v4533
    %4696 = vmatpush1.msra.mxu0 %v4532
    %4697 = vmatprep.subr.mxu0 %v4531
    %4698 = vmatpush1.msra.mxu0 %v4530
    %4699 = vmatprep.subr.mxu0 %v4593
    %4700 = vmatpush2.msra.mxu0 %v4592
    %4701 = vmatprep.subr.mxu0 %v4591
    %4702 = vmatpush2.msra.mxu0 %v4590
    %4703 = vmatprep.subr.mxu0 %v4589
    %4704 = vmatpush2.msra.mxu0 %v4588
    %4705 = vmatprep.subr.mxu0 %v4587
    %4706 = vmatpush2.msra.mxu0 %v4586
    %4707 = vmatprep.subr.mxu0 %v4585
    %4708 = vmatpush2.msra.mxu0 %v4584
    %4709 = vmatprep.subr.mxu0 %v4583
    %4710 = vmatpush2.msra.mxu0 %v4582
    %4711 = vmatprep.subr.mxu0 %v4581
    %4712 = vmatpush2.msra.mxu0 %v4580
    %4713 = vmatprep.subr.mxu0 %v4579
    %4714 = vmatpush2.msra.mxu0 %v4578
    %4715 = vmatprep.subr.mxu0 %v4577
    %4716 = vmatpush2.msra.mxu0 %v4576
    %4717 = vmatprep.subr.mxu0 %v4575
    %4718 = vmatpush2.msra.mxu0 %v4574
    %4719 = vmatprep.subr.mxu0 %v4573
    %4720 = vmatpush2.msra.mxu0 %v4572
    %4721 = vmatprep.subr.mxu0 %v4571
    %4722 = vmatpush2.msra.mxu0 %v4570
    %4723 = vmatprep.subr.mxu0 %v4569
    %4724 = vmatpush2.msra.mxu0 %v4568
    %4725 = vmatprep.subr.mxu0 %v4567
    %4726 = vmatpush2.msra.mxu0 %v4566
    %4727 = vmatprep.subr.mxu0 %v4565
    %4728 = vmatpush2.msra.mxu0 %v4564
    %4729 = vmatprep.subr.mxu0 %v4563
    %4730 = vmatpush2.msra.mxu0 %v4562
    %4731 = vmatprep.mubr.f32.mxu0 %v4529
    %4732 = vmatmul.mubr.f32.gmra.mxu0 %v4522
    %v4733 = vpop.f32.mrf.mxu0
    %v4734 = vadd.f32 0.0, %v4733
    %v4735 = vpop.f32.mrf.mxu0
    %v4736 = vadd.f32 0.0, %v4735
    %4737 = vdwg.mxu0
    %v4738 = vmul.f32 %v4734, 0.0078125
    %v4739 = vmul.f32 %v4736, 0.0078125
    %v4740 = vmul.f32 %v4665, %v4665
    %v4741 = vmul.f32 %v4666, %v4666
    %v4742 = vsub.f32 %v4738, %v4740
    %v4743 = vsub.f32 %v4739, %v4741
    %v4744 = vmax.f32 %v4742, 0.0
    %v4745 = vmax.f32 %v4743, 0.0
    %v4746 = vlaneseq
    %v4747 = vshrl.u32 %v4746, 7
    %v4748 = vsub.s32 0, %v4747
    %v4749 = vrot.slane %v4665, %v4748
    %v4750 = vlaneseq
    %v4751 = vshrl.u32 %v4750, 7
    %v4752 = vsub.s32 0, %v4751
    %v4753 = vrot.slane %v4666, %v4752
    %v4754 = vsub.f32 %v4494, %v4749
    %v4755 = vsub.f32 %v4495, %v4753
    %v4756 = vsub.f32 %v4496, %v4749
    %v4757 = vsub.f32 %v4497, %v4753
    %v4758 = vadd.f32 %v4744, 1e-05
    %v4759 = vadd.f32 %v4745, 1e-05
    %v4760 = vrsqrt.pop %v4758
    %v4761 = vrsqrt.pop %v4759
    %v4762 = vlaneseq
    %v4763 = vshrl.u32 %v4762, 7
    %v4764 = vsub.s32 0, %v4763
    %v4765 = vrot.slane %v4760, %v4764
    %v4766 = vlaneseq
    %v4767 = vshrl.u32 %v4766, 7
    %v4768 = vsub.s32 0, %v4767
    %v4769 = vrot.slane %v4761, %v4768
    %v4770 = vmul.f32 %v4754, %v4765
    %v4771 = vmul.f32 %v4755, %v4769
    %v4772 = vmul.f32 %v4756, %v4765
    %v4773 = vmul.f32 %v4757, %v4769
    %vm4774 = vcmp.ge.f32.partialorder %v4770, 0.0
    %vm4775 = vcmp.ge.f32.partialorder %v4771, 0.0
    %vm4776 = vcmp.ge.f32.partialorder %v4772, 0.0
    %vm4777 = vcmp.ge.f32.partialorder %v4773, 0.0
    %v4778 = vmul.f32 %v4770, 0.2
    %v4779 = vmul.f32 %v4771, 0.2
    %v4780 = vmul.f32 %v4772, 0.2
    %v4781 = vmul.f32 %v4773, 0.2
    %v4782 = vsel %vm4774, %v4770, %v4778
    %v4783 = vsel %vm4775, %v4771, %v4779
    %v4784 = vsel %vm4776, %v4772, %v4780
    %v4785 = vsel %vm4777, %v4773, %v4781
    %v4786 = vpack.c.bf16 %v4784, %v4782
    %v4787 = vpack.c.bf16 %v4785, %v4783
    %v4788 = vld [vmem:[%s9] sm:$0xf]
    %vm4789 = vcmask 130048
    %v4791 = vsel %vm4789, %v4788, 0
    %4793 = vmatprep.subr.bf16.mxu0 0
    %4794 = vmatpush1.bf16.msra.mxu0 0
    %4795 = vmatprep.subr.bf16.mxu0 0
    %4796 = vmatpush1.bf16.msra.mxu0 0
    %4797 = vmatprep.subr.bf16.mxu0 0
    %4798 = vmatpush1.bf16.msra.mxu0 0
    %4799 = vmatprep.subr.bf16.mxu0 0
    %4800 = vmatpush1.bf16.msra.mxu0 0
    %4801 = vmatprep.subr.bf16.mxu0 0
    %4802 = vmatpush1.bf16.msra.mxu0 0
    %4803 = vmatprep.subr.bf16.mxu0 0
    %4804 = vmatpush1.bf16.msra.mxu0 0
    %4805 = vmatprep.subr.bf16.mxu0 0
    %4806 = vmatpush1.bf16.msra.mxu0 0
    %4807 = vmatprep.subr.bf16.mxu0 %v4787
    %4808 = vmatpush1.bf16.msra.mxu0 %v4786
    %4809 = vmatprep.subr.bf16.mxu0 0
    %4810 = vmatpush2.bf16.msra.mxu0 0
    %4811 = vmatprep.subr.bf16.mxu0 0
    %4812 = vmatpush2.bf16.msra.mxu0 0
    %4813 = vmatprep.subr.bf16.mxu0 0
    %4814 = vmatpush2.bf16.msra.mxu0 0
    %4815 = vmatprep.subr.bf16.mxu0 0
    %4816 = vmatpush2.bf16.msra.mxu0 0
    %4817 = vmatprep.subr.bf16.mxu0 0
    %4818 = vmatpush2.bf16.msra.mxu0 0
    %4819 = vmatprep.subr.bf16.mxu0 0
    %4820 = vmatpush2.bf16.msra.mxu0 0
    %4821 = vmatprep.subr.bf16.mxu0 0
    %4822 = vmatpush2.bf16.msra.mxu0 0
    %4823 = vmatprep.subr.bf16.mxu0 0
    %4824 = vmatpush2.bf16.msra.mxu0 0
    %4825 = vmatprep.mubr.bf16.mxu0 0
    %4826 = vmatmul.mubr.bf16.gmra.mxu0 %v4791
    %v4827 = vpop.f32.mrf.mxu0
    %v4828 = vadd.f32 0.0, %v4827
    %v4829 = vpop.f32.mrf.mxu0
    %v4830 = vadd.f32 0.0, %v4829
    %v4831 = vpop.f32.mrf.mxu0
    %v4832 = vpop.f32.mrf.mxu0
    %4833 = vdwg.mxu0
    %v4834 = vpack.c.bf16 %v4828, %v4828
    %v4835 = vpack.c.bf16 %v4830, %v4830
    %v4836 = vld [vmem:[#allocation9] sm:$0xff]
    %v4837 = vld [vmem:[#allocation9 + $0x8] sm:$0xff]
    %v4838 = vld [vmem:[#allocation9 + $0x10] sm:$0xff]
    %v4839 = vld [vmem:[#allocation9 + $0x18] sm:$0xff]
    %v4840 = vld [vmem:[#allocation9 + $0x20] sm:$0xff]
    %v4841 = vld [vmem:[#allocation9 + $0x28] sm:$0xff]
    %v4842 = vld [vmem:[#allocation9 + $0x30] sm:$0xff]
    %v4843 = vld [vmem:[#allocation9 + $0x38] sm:$0xff]
    %v4844 = vld [vmem:[#allocation9 + $0x40] sm:$0xff]
    %v4845 = vld [vmem:[#allocation9 + $0x48] sm:$0xff]
    %v4846 = vld [vmem:[#allocation9 + $0x50] sm:$0xff]
    %v4847 = vld [vmem:[#allocation9 + $0x58] sm:$0xff]
    %v4848 = vld [vmem:[#allocation9 + $0x60] sm:$0xff]
    %v4849 = vld [vmem:[#allocation9 + $0x68] sm:$0xff]
    %v4850 = vld [vmem:[#allocation9 + $0x70] sm:$0xff]
    %v4851 = vld [vmem:[#allocation9 + $0x78] sm:$0xff]
    %v4852 = vld [vmem:[#allocation9 + $0x80] sm:$0xff]
    %v4853 = vld [vmem:[#allocation9 + $0x88] sm:$0xff]
    %v4854 = vld [vmem:[#allocation9 + $0x90] sm:$0xff]
    %v4855 = vld [vmem:[#allocation9 + $0x98] sm:$0xff]
    %v4856 = vld [vmem:[#allocation9 + $0xa0] sm:$0xff]
    %v4857 = vld [vmem:[#allocation9 + $0xa8] sm:$0xff]
    %v4858 = vld [vmem:[#allocation9 + $0xb0] sm:$0xff]
    %v4859 = vld [vmem:[#allocation9 + $0xb8] sm:$0xff]
    %v4860 = vld [vmem:[#allocation9 + $0xc0] sm:$0xff]
    %v4861 = vld [vmem:[#allocation9 + $0xc8] sm:$0xff]
    %v4862 = vld [vmem:[#allocation9 + $0xd0] sm:$0xff]
    %v4863 = vld [vmem:[#allocation9 + $0xd8] sm:$0xff]
    %v4864 = vld [vmem:[#allocation9 + $0xe0] sm:$0xff]
    %v4865 = vld [vmem:[#allocation9 + $0xe8] sm:$0xff]
    %v4866 = vld [vmem:[#allocation9 + $0xf0] sm:$0xff]
    %v4867 = vld [vmem:[#allocation9 + $0xf8] sm:$0xff]
    %s4868 = scalar_lea.vmem %s9, 4
    %v4869 = vld [vmem:[%s4868] sm:$0xf]
    %v4871 = vsel %vm4789, %v4869, 0
    %4873 = vmatprep.subr.bf16.mxu0 0
    %4874 = vmatpush1.bf16.msra.mxu0 0
    %4875 = vmatprep.subr.bf16.mxu0 0
    %4876 = vmatpush1.bf16.msra.mxu0 0
    %4877 = vmatprep.subr.bf16.mxu0 0
    %4878 = vmatpush1.bf16.msra.mxu0 0
    %4879 = vmatprep.subr.bf16.mxu0 0
    %4880 = vmatpush1.bf16.msra.mxu0 0
    %4881 = vmatprep.subr.bf16.mxu0 0
    %4882 = vmatpush1.bf16.msra.mxu0 0
    %4883 = vmatprep.subr.bf16.mxu0 0
    %4884 = vmatpush1.bf16.msra.mxu0 0
    %4885 = vmatprep.subr.bf16.mxu0 0
    %4886 = vmatpush1.bf16.msra.mxu0 0
    %4887 = vmatprep.subr.bf16.mxu0 %v4787
    %4888 = vmatpush1.bf16.msra.mxu0 %v4786
    %4889 = vmatprep.subr.bf16.mxu0 0
    %4890 = vmatpush2.bf16.msra.mxu0 0
    %4891 = vmatprep.subr.bf16.mxu0 0
    %4892 = vmatpush2.bf16.msra.mxu0 0
    %4893 = vmatprep.subr.bf16.mxu0 0
    %4894 = vmatpush2.bf16.msra.mxu0 0
    %4895 = vmatprep.subr.bf16.mxu0 0
    %4896 = vmatpush2.bf16.msra.mxu0 0
    %4897 = vmatprep.subr.bf16.mxu0 0
    %4898 = vmatpush2.bf16.msra.mxu0 0
    %4899 = vmatprep.subr.bf16.mxu0 0
    %4900 = vmatpush2.bf16.msra.mxu0 0
    %4901 = vmatprep.subr.bf16.mxu0 0
    %4902 = vmatpush2.bf16.msra.mxu0 0
    %4903 = vmatprep.subr.bf16.mxu0 0
    %4904 = vmatpush2.bf16.msra.mxu0 0
    %4905 = vmatprep.mubr.bf16.mxu0 0
    %4906 = vmatmul.mubr.bf16.gmra.mxu0 %v4871
    %v4907 = vpop.f32.mrf.mxu0
    %v4908 = vadd.f32 0.0, %v4907
    %v4909 = vpop.f32.mrf.mxu0
    %v4910 = vadd.f32 0.0, %v4909
    %v4911 = vpop.f32.mrf.mxu0
    %v4912 = vpop.f32.mrf.mxu0
    %4913 = vdwg.mxu0
    %v4914 = vpack.c.bf16 %v4908, %v4908
    %v4915 = vpack.c.bf16 %v4910, %v4910
    %s4916 = scalar_lea.vmem [#allocation9], 256
    %v4917 = vld [vmem:[%s4916] sm:$0xff]
    %v4918 = vld [vmem:[%s4916 + $0x8] sm:$0xff]
    %v4919 = vld [vmem:[%s4916 + $0x10] sm:$0xff]
    %v4920 = vld [vmem:[%s4916 + $0x18] sm:$0xff]
    %v4921 = vld [vmem:[%s4916 + $0x20] sm:$0xff]
    %v4922 = vld [vmem:[%s4916 + $0x28] sm:$0xff]
    %v4923 = vld [vmem:[%s4916 + $0x30] sm:$0xff]
    %v4924 = vld [vmem:[%s4916 + $0x38] sm:$0xff]
    %v4925 = vld [vmem:[%s4916 + $0x40] sm:$0xff]
    %v4926 = vld [vmem:[%s4916 + $0x48] sm:$0xff]
    %v4927 = vld [vmem:[%s4916 + $0x50] sm:$0xff]
    %v4928 = vld [vmem:[%s4916 + $0x58] sm:$0xff]
    %v4929 = vld [vmem:[%s4916 + $0x60] sm:$0xff]
    %v4930 = vld [vmem:[%s4916 + $0x68] sm:$0xff]
    %v4931 = vld [vmem:[%s4916 + $0x70] sm:$0xff]
    %v4932 = vld [vmem:[%s4916 + $0x78] sm:$0xff]
    %v4933 = vld [vmem:[%s4916 + $0x80] sm:$0xff]
    %v4934 = vld [vmem:[%s4916 + $0x88] sm:$0xff]
    %v4935 = vld [vmem:[%s4916 + $0x90] sm:$0xff]
    %v4936 = vld [vmem:[%s4916 + $0x98] sm:$0xff]
    %v4937 = vld [vmem:[%s4916 + $0xa0] sm:$0xff]
    %v4938 = vld [vmem:[%s4916 + $0xa8] sm:$0xff]
    %v4939 = vld [vmem:[%s4916 + $0xb0] sm:$0xff]
    %v4940 = vld [vmem:[%s4916 + $0xb8] sm:$0xff]
    %v4941 = vld [vmem:[%s4916 + $0xc0] sm:$0xff]
    %v4942 = vld [vmem:[%s4916 + $0xc8] sm:$0xff]
    %v4943 = vld [vmem:[%s4916 + $0xd0] sm:$0xff]
    %v4944 = vld [vmem:[%s4916 + $0xd8] sm:$0xff]
    %v4945 = vld [vmem:[%s4916 + $0xe0] sm:$0xff]
    %v4946 = vld [vmem:[%s4916 + $0xe8] sm:$0xff]
    %v4947 = vld [vmem:[%s4916 + $0xf0] sm:$0xff]
    %v4948 = vld [vmem:[%s4916 + $0xf8] sm:$0xff]
    %v4981 = vunpack.c.l.b16 %v4917
    %v4982 = vunpack.c.h.b16 %v4917
    %v4983 = vunpack.c.l.b16 %v4918
    %v4984 = vunpack.c.h.b16 %v4918
    %v4985 = vunpack.c.l.b16 %v4919
    %v4986 = vunpack.c.h.b16 %v4919
    %v4987 = vunpack.c.l.b16 %v4920
    %v4988 = vunpack.c.h.b16 %v4920
    %v4989 = vunpack.c.l.b16 %v4921
    %v4990 = vunpack.c.h.b16 %v4921
    %v4991 = vunpack.c.l.b16 %v4922
    %v4992 = vunpack.c.h.b16 %v4922
    %v4993 = vunpack.c.l.b16 %v4923
    %v4994 = vunpack.c.h.b16 %v4923
    %v4995 = vunpack.c.l.b16 %v4924
    %v4996 = vunpack.c.h.b16 %v4924
    %v4997 = vunpack.c.l.b16 %v4925
    %v4998 = vunpack.c.h.b16 %v4925
    %v4999 = vunpack.c.l.b16 %v4926
    %v5000 = vunpack.c.h.b16 %v4926
    %v5001 = vunpack.c.l.b16 %v4927
    %v5002 = vunpack.c.h.b16 %v4927
    %v5003 = vunpack.c.l.b16 %v4928
    %v5004 = vunpack.c.h.b16 %v4928
    %v5005 = vunpack.c.l.b16 %v4929
    %v5006 = vunpack.c.h.b16 %v4929
    %v5007 = vunpack.c.l.b16 %v4930
    %v5008 = vunpack.c.h.b16 %v4930
    %v5009 = vunpack.c.l.b16 %v4931
    %v5010 = vunpack.c.h.b16 %v4931
    %v5011 = vunpack.c.l.b16 %v4932
    %v5012 = vunpack.c.h.b16 %v4932
    %v5013 = vunpack.c.l.b16 %v4933
    %v5014 = vunpack.c.h.b16 %v4933
    %v5015 = vunpack.c.l.b16 %v4934
    %v5016 = vunpack.c.h.b16 %v4934
    %v5017 = vunpack.c.l.b16 %v4935
    %v5018 = vunpack.c.h.b16 %v4935
    %v5019 = vunpack.c.l.b16 %v4936
    %v5020 = vunpack.c.h.b16 %v4936
    %v5021 = vunpack.c.l.b16 %v4937
    %v5022 = vunpack.c.h.b16 %v4937
    %v5023 = vunpack.c.l.b16 %v4938
    %v5024 = vunpack.c.h.b16 %v4938
    %v5025 = vunpack.c.l.b16 %v4939
    %v5026 = vunpack.c.h.b16 %v4939
    %v5027 = vunpack.c.l.b16 %v4940
    %v5028 = vunpack.c.h.b16 %v4940
    %v5029 = vunpack.c.l.b16 %v4941
    %v5030 = vunpack.c.h.b16 %v4941
    %v5031 = vunpack.c.l.b16 %v4942
    %v5032 = vunpack.c.h.b16 %v4942
    %v5033 = vunpack.c.l.b16 %v4943
    %v5034 = vunpack.c.h.b16 %v4943
    %v5035 = vunpack.c.l.b16 %v4944
    %v5036 = vunpack.c.h.b16 %v4944
    %v5037 = vunpack.c.l.b16 %v4945
    %v5038 = vunpack.c.h.b16 %v4945
    %v5039 = vunpack.c.l.b16 %v4946
    %v5040 = vunpack.c.h.b16 %v4946
    %v5041 = vunpack.c.l.b16 %v4947
    %v5042 = vunpack.c.h.b16 %v4947
    %v5043 = vunpack.c.l.b16 %v4948
    %v5044 = vunpack.c.h.b16 %v4948
    %v5045 = vpack.c.b16 %v4983, %v4981
    %v5046 = vpack.c.b16 %v4984, %v4982
    %v5047 = vpack.c.b16 %v4987, %v4985
    %v5048 = vpack.c.b16 %v4988, %v4986
    %v5049 = vpack.c.b16 %v4991, %v4989
    %v5050 = vpack.c.b16 %v4992, %v4990
    %v5051 = vpack.c.b16 %v4995, %v4993
    %v5052 = vpack.c.b16 %v4996, %v4994
    %v5053 = vpack.c.b16 %v4999, %v4997
    %v5054 = vpack.c.b16 %v5000, %v4998
    %v5055 = vpack.c.b16 %v5003, %v5001
    %v5056 = vpack.c.b16 %v5004, %v5002
    %v5057 = vpack.c.b16 %v5007, %v5005
    %v5058 = vpack.c.b16 %v5008, %v5006
    %v5059 = vpack.c.b16 %v5011, %v5009
    %v5060 = vpack.c.b16 %v5012, %v5010
    %v5061 = vpack.c.b16 %v5015, %v5013
    %v5062 = vpack.c.b16 %v5016, %v5014
    %v5063 = vpack.c.b16 %v5019, %v5017
    %v5064 = vpack.c.b16 %v5020, %v5018
    %v5065 = vpack.c.b16 %v5023, %v5021
    %v5066 = vpack.c.b16 %v5024, %v5022
    %v5067 = vpack.c.b16 %v5027, %v5025
    %v5068 = vpack.c.b16 %v5028, %v5026
    %v5069 = vpack.c.b16 %v5031, %v5029
    %v5070 = vpack.c.b16 %v5032, %v5030
    %v5071 = vpack.c.b16 %v5035, %v5033
    %v5072 = vpack.c.b16 %v5036, %v5034
    %v5073 = vpack.c.b16 %v5039, %v5037
    %v5074 = vpack.c.b16 %v5040, %v5038
    %v5075 = vpack.c.b16 %v5043, %v5041
    %v5076 = vpack.c.b16 %v5044, %v5042
    %5109 = vmatprep.subr.bf16.mxu0 %v5060
    %5110 = vmatpush1.bf16.msra.mxu0 %v5059
    %5111 = vmatprep.subr.bf16.mxu0 %v5058
    %5112 = vmatpush1.bf16.msra.mxu0 %v5057
    %5113 = vmatprep.subr.bf16.mxu0 %v5056
    %5114 = vmatpush1.bf16.msra.mxu0 %v5055
    %5115 = vmatprep.subr.bf16.mxu0 %v5054
    %5116 = vmatpush1.bf16.msra.mxu0 %v5053
    %5117 = vmatprep.subr.bf16.mxu0 %v5052
    %5118 = vmatpush1.bf16.msra.mxu0 %v5051
    %5119 = vmatprep.subr.bf16.mxu0 %v5050
    %5120 = vmatpush1.bf16.msra.mxu0 %v5049
    %5121 = vmatprep.subr.bf16.mxu0 %v5048
    %5122 = vmatpush1.bf16.msra.mxu0 %v5047
    %5123 = vmatprep.subr.bf16.mxu0 %v5046
    %5124 = vmatpush1.bf16.msra.mxu0 %v5045
    %5125 = vmatprep.subr.bf16.mxu0 %v5076
    %5126 = vmatpush2.bf16.msra.mxu0 %v5075
    %5127 = vmatprep.subr.bf16.mxu0 %v5074
    %5128 = vmatpush2.bf16.msra.mxu0 %v5073
    %5129 = vmatprep.subr.bf16.mxu0 %v5072
    %5130 = vmatpush2.bf16.msra.mxu0 %v5071
    %5131 = vmatprep.subr.bf16.mxu0 %v5070
    %5132 = vmatpush2.bf16.msra.mxu0 %v5069
    %5133 = vmatprep.subr.bf16.mxu0 %v5068
    %5134 = vmatpush2.bf16.msra.mxu0 %v5067
    %5135 = vmatprep.subr.bf16.mxu0 %v5066
    %5136 = vmatpush2.bf16.msra.mxu0 %v5065
    %5137 = vmatprep.subr.bf16.mxu0 %v5064
    %5138 = vmatpush2.bf16.msra.mxu0 %v5063
    %5139 = vmatprep.subr.bf16.mxu0 %v5062
    %5140 = vmatpush2.bf16.msra.mxu0 %v5061
    %5141 = vmatprep.mubr.bf16.mxu0 %v4915
    %5142 = vmatmul.mubr.bf16.gmra.mxu0 %v4914
    %v5143 = vpop.f32.mrf.mxu0
    %v5144 = vadd.f32 0.0, %v5143
    %v5145 = vpop.f32.mrf.mxu0
    %v5146 = vadd.f32 0.0, %v5145
    %v5147 = vpop.f32.mrf.mxu0
    %v5148 = vpop.f32.mrf.mxu0
    %5149 = vdwg.mxu0
    %v5182 = vunpack.c.l.b16 %v4836
    %v5183 = vunpack.c.h.b16 %v4836
    %v5184 = vunpack.c.l.b16 %v4837
    %v5185 = vunpack.c.h.b16 %v4837
    %v5186 = vunpack.c.l.b16 %v4838
    %v5187 = vunpack.c.h.b16 %v4838
    %v5188 = vunpack.c.l.b16 %v4839
    %v5189 = vunpack.c.h.b16 %v4839
    %v5190 = vunpack.c.l.b16 %v4840
    %v5191 = vunpack.c.h.b16 %v4840
    %v5192 = vunpack.c.l.b16 %v4841
    %v5193 = vunpack.c.h.b16 %v4841
    %v5194 = vunpack.c.l.b16 %v4842
    %v5195 = vunpack.c.h.b16 %v4842
    %v5196 = vunpack.c.l.b16 %v4843
    %v5197 = vunpack.c.h.b16 %v4843
    %v5198 = vunpack.c.l.b16 %v4844
    %v5199 = vunpack.c.h.b16 %v4844
    %v5200 = vunpack.c.l.b16 %v4845
    %v5201 = vunpack.c.h.b16 %v4845
    %v5202 = vunpack.c.l.b16 %v4846
    %v5203 = vunpack.c.h.b16 %v4846
    %v5204 = vunpack.c.l.b16 %v4847
    %v5205 = vunpack.c.h.b16 %v4847
    %v5206 = vunpack.c.l.b16 %v4848
    %v5207 = vunpack.c.h.b16 %v4848
    %v5208 = vunpack.c.l.b16 %v4849
    %v5209 = vunpack.c.h.b16 %v4849
    %v5210 = vunpack.c.l.b16 %v4850
    %v5211 = vunpack.c.h.b16 %v4850
    %v5212 = vunpack.c.l.b16 %v4851
    %v5213 = vunpack.c.h.b16 %v4851
    %v5214 = vunpack.c.l.b16 %v4852
    %v5215 = vunpack.c.h.b16 %v4852
    %v5216 = vunpack.c.l.b16 %v4853
    %v5217 = vunpack.c.h.b16 %v4853
    %v5218 = vunpack.c.l.b16 %v4854
    %v5219 = vunpack.c.h.b16 %v4854
    %v5220 = vunpack.c.l.b16 %v4855
    %v5221 = vunpack.c.h.b16 %v4855
    %v5222 = vunpack.c.l.b16 %v4856
    %v5223 = vunpack.c.h.b16 %v4856
    %v5224 = vunpack.c.l.b16 %v4857
    %v5225 = vunpack.c.h.b16 %v4857
    %v5226 = vunpack.c.l.b16 %v4858
    %v5227 = vunpack.c.h.b16 %v4858
    %v5228 = vunpack.c.l.b16 %v4859
    %v5229 = vunpack.c.h.b16 %v4859
    %v5230 = vunpack.c.l.b16 %v4860
    %v5231 = vunpack.c.h.b16 %v4860
    %v5232 = vunpack.c.l.b16 %v4861
    %v5233 = vunpack.c.h.b16 %v4861
    %v5234 = vunpack.c.l.b16 %v4862
    %v5235 = vunpack.c.h.b16 %v4862
    %v5236 = vunpack.c.l.b16 %v4863
    %v5237 = vunpack.c.h.b16 %v4863
    %v5238 = vunpack.c.l.b16 %v4864
    %v5239 = vunpack.c.h.b16 %v4864
    %v5240 = vunpack.c.l.b16 %v4865
    %v5241 = vunpack.c.h.b16 %v4865
    %v5242 = vunpack.c.l.b16 %v4866
    %v5243 = vunpack.c.h.b16 %v4866
    %v5244 = vunpack.c.l.b16 %v4867
    %v5245 = vunpack.c.h.b16 %v4867
    %v5246 = vpack.c.b16 %v5184, %v5182
    %v5247 = vpack.c.b16 %v5185, %v5183
    %v5248 = vpack.c.b16 %v5188, %v5186
    %v5249 = vpack.c.b16 %v5189, %v5187
    %v5250 = vpack.c.b16 %v5192, %v5190
    %v5251 = vpack.c.b16 %v5193, %v5191
    %v5252 = vpack.c.b16 %v5196, %v5194
    %v5253 = vpack.c.b16 %v5197, %v5195
    %v5254 = vpack.c.b16 %v5200, %v5198
    %v5255 = vpack.c.b16 %v5201, %v5199
    %v5256 = vpack.c.b16 %v5204, %v5202
    %v5257 = vpack.c.b16 %v5205, %v5203
    %v5258 = vpack.c.b16 %v5208, %v5206
    %v5259 = vpack.c.b16 %v5209, %v5207
    %v5260 = vpack.c.b16 %v5212, %v5210
    %v5261 = vpack.c.b16 %v5213, %v5211
    %v5262 = vpack.c.b16 %v5216, %v5214
    %v5263 = vpack.c.b16 %v5217, %v5215
    %v5264 = vpack.c.b16 %v5220, %v5218
    %v5265 = vpack.c.b16 %v5221, %v5219
    %v5266 = vpack.c.b16 %v5224, %v5222
    %v5267 = vpack.c.b16 %v5225, %v5223
    %v5268 = vpack.c.b16 %v5228, %v5226
    %v5269 = vpack.c.b16 %v5229, %v5227
    %v5270 = vpack.c.b16 %v5232, %v5230
    %v5271 = vpack.c.b16 %v5233, %v5231
    %v5272 = vpack.c.b16 %v5236, %v5234
    %v5273 = vpack.c.b16 %v5237, %v5235
    %v5274 = vpack.c.b16 %v5240, %v5238
    %v5275 = vpack.c.b16 %v5241, %v5239
    %v5276 = vpack.c.b16 %v5244, %v5242
    %v5277 = vpack.c.b16 %v5245, %v5243
    %5310 = vmatprep.subr.bf16.mxu0 %v5261
    %5311 = vmatpush1.bf16.msra.mxu0 %v5260
    %5312 = vmatprep.subr.bf16.mxu0 %v5259
    %5313 = vmatpush1.bf16.msra.mxu0 %v5258
    %5314 = vmatprep.subr.bf16.mxu0 %v5257
    %5315 = vmatpush1.bf16.msra.mxu0 %v5256
    %5316 = vmatprep.subr.bf16.mxu0 %v5255
    %5317 = vmatpush1.bf16.msra.mxu0 %v5254
    %5318 = vmatprep.subr.bf16.mxu0 %v5253
    %5319 = vmatpush1.bf16.msra.mxu0 %v5252
    %5320 = vmatprep.subr.bf16.mxu0 %v5251
    %5321 = vmatpush1.bf16.msra.mxu0 %v5250
    %5322 = vmatprep.subr.bf16.mxu0 %v5249
    %5323 = vmatpush1.bf16.msra.mxu0 %v5248
    %5324 = vmatprep.subr.bf16.mxu0 %v5247
    %5325 = vmatpush1.bf16.msra.mxu0 %v5246
    %5326 = vmatprep.subr.bf16.mxu0 %v5277
    %5327 = vmatpush2.bf16.msra.mxu0 %v5276
    %5328 = vmatprep.subr.bf16.mxu0 %v5275
    %5329 = vmatpush2.bf16.msra.mxu0 %v5274
    %5330 = vmatprep.subr.bf16.mxu0 %v5273
    %5331 = vmatpush2.bf16.msra.mxu0 %v5272
    %5332 = vmatprep.subr.bf16.mxu0 %v5271
    %5333 = vmatpush2.bf16.msra.mxu0 %v5270
    %5334 = vmatprep.subr.bf16.mxu0 %v5269
    %5335 = vmatpush2.bf16.msra.mxu0 %v5268
    %5336 = vmatprep.subr.bf16.mxu0 %v5267
    %5337 = vmatpush2.bf16.msra.mxu0 %v5266
    %5338 = vmatprep.subr.bf16.mxu0 %v5265
    %5339 = vmatpush2.bf16.msra.mxu0 %v5264
    %5340 = vmatprep.subr.bf16.mxu0 %v5263
    %5341 = vmatpush2.bf16.msra.mxu0 %v5262
    %5342 = vmatprep.mubr.bf16.mxu0 %v4835
    %5343 = vmatmul.mubr.bf16.gmra.mxu0 %v4834
    %v5344 = vpop.f32.mrf.mxu0
    %v5345 = vadd.f32 %v5144, %v5344
    %v5346 = vpop.f32.mrf.mxu0
    %v5347 = vadd.f32 %v5146, %v5346
    %v5348 = vpop.f32.mrf.mxu0
    %v5349 = vpop.f32.mrf.mxu0
    %5350 = vdwg.mxu0
    %s5351 = scalar_lea.vmem %s9, 8
    %v5352 = vld [vmem:[%s5351] sm:$0xf]
    %v5354 = vsel %vm4789, %v5352, 0
    %5356 = vmatprep.subr.bf16.mxu0 0
    %5357 = vmatpush1.bf16.msra.mxu0 0
    %5358 = vmatprep.subr.bf16.mxu0 0
    %5359 = vmatpush1.bf16.msra.mxu0 0
    %5360 = vmatprep.subr.bf16.mxu0 0
    %5361 = vmatpush1.bf16.msra.mxu0 0
    %5362 = vmatprep.subr.bf16.mxu0 0
    %5363 = vmatpush1.bf16.msra.mxu0 0
    %5364 = vmatprep.subr.bf16.mxu0 0
    %5365 = vmatpush1.bf16.msra.mxu0 0
    %5366 = vmatprep.subr.bf16.mxu0 0
    %5367 = vmatpush1.bf16.msra.mxu0 0
    %5368 = vmatprep.subr.bf16.mxu0 0
    %5369 = vmatpush1.bf16.msra.mxu0 0
    %5370 = vmatprep.subr.bf16.mxu0 %v4787
    %5371 = vmatpush1.bf16.msra.mxu0 %v4786
    %5372 = vmatprep.subr.bf16.mxu0 0
    %5373 = vmatpush2.bf16.msra.mxu0 0
    %5374 = vmatprep.subr.bf16.mxu0 0
    %5375 = vmatpush2.bf16.msra.mxu0 0
    %5376 = vmatprep.subr.bf16.mxu0 0
    %5377 = vmatpush2.bf16.msra.mxu0 0
    %5378 = vmatprep.subr.bf16.mxu0 0
    %5379 = vmatpush2.bf16.msra.mxu0 0
    %5380 = vmatprep.subr.bf16.mxu0 0
    %5381 = vmatpush2.bf16.msra.mxu0 0
    %5382 = vmatprep.subr.bf16.mxu0 0
    %5383 = vmatpush2.bf16.msra.mxu0 0
    %5384 = vmatprep.subr.bf16.mxu0 0
    %5385 = vmatpush2.bf16.msra.mxu0 0
    %5386 = vmatprep.subr.bf16.mxu0 0
    %5387 = vmatpush2.bf16.msra.mxu0 0
    %5388 = vmatprep.mubr.bf16.mxu0 0
    %5389 = vmatmul.mubr.bf16.gmra.mxu0 %v5354
    %v5390 = vpop.f32.mrf.mxu0
    %v5391 = vadd.f32 0.0, %v5390
    %v5392 = vpop.f32.mrf.mxu0
    %v5393 = vadd.f32 0.0, %v5392
    %v5394 = vpop.f32.mrf.mxu0
    %v5395 = vpop.f32.mrf.mxu0
    %5396 = vdwg.mxu0
    %v5397 = vpack.c.bf16 %v5391, %v5391
    %v5398 = vpack.c.bf16 %v5393, %v5393
    %s5399 = scalar_lea.vmem [#allocation9], 512
    %v5400 = vld [vmem:[%s5399] sm:$0xff]
    %v5401 = vld [vmem:[%s5399 + $0x8] sm:$0xff]
    %v5402 = vld [vmem:[%s5399 + $0x10] sm:$0xff]
    %v5403 = vld [vmem:[%s5399 + $0x18] sm:$0xff]
    %v5404 = vld [vmem:[%s5399 + $0x20] sm:$0xff]
    %v5405 = vld [vmem:[%s5399 + $0x28] sm:$0xff]
    %v5406 = vld [vmem:[%s5399 + $0x30] sm:$0xff]
    %v5407 = vld [vmem:[%s5399 + $0x38] sm:$0xff]
    %v5408 = vld [vmem:[%s5399 + $0x40] sm:$0xff]
    %v5409 = vld [vmem:[%s5399 + $0x48] sm:$0xff]
    %v5410 = vld [vmem:[%s5399 + $0x50] sm:$0xff]
    %v5411 = vld [vmem:[%s5399 + $0x58] sm:$0xff]
    %v5412 = vld [vmem:[%s5399 + $0x60] sm:$0xff]
    %v5413 = vld [vmem:[%s5399 + $0x68] sm:$0xff]
    %v5414 = vld [vmem:[%s5399 + $0x70] sm:$0xff]
    %v5415 = vld [vmem:[%s5399 + $0x78] sm:$0xff]
    %v5416 = vld [vmem:[%s5399 + $0x80] sm:$0xff]
    %v5417 = vld [vmem:[%s5399 + $0x88] sm:$0xff]
    %v5418 = vld [vmem:[%s5399 + $0x90] sm:$0xff]
    %v5419 = vld [vmem:[%s5399 + $0x98] sm:$0xff]
    %v5420 = vld [vmem:[%s5399 + $0xa0] sm:$0xff]
    %v5421 = vld [vmem:[%s5399 + $0xa8] sm:$0xff]
    %v5422 = vld [vmem:[%s5399 + $0xb0] sm:$0xff]
    %v5423 = vld [vmem:[%s5399 + $0xb8] sm:$0xff]
    %v5424 = vld [vmem:[%s5399 + $0xc0] sm:$0xff]
    %v5425 = vld [vmem:[%s5399 + $0xc8] sm:$0xff]
    %v5426 = vld [vmem:[%s5399 + $0xd0] sm:$0xff]
    %v5427 = vld [vmem:[%s5399 + $0xd8] sm:$0xff]
    %v5428 = vld [vmem:[%s5399 + $0xe0] sm:$0xff]
    %v5429 = vld [vmem:[%s5399 + $0xe8] sm:$0xff]
    %v5430 = vld [vmem:[%s5399 + $0xf0] sm:$0xff]
    %v5431 = vld [vmem:[%s5399 + $0xf8] sm:$0xff]
    %v5464 = vunpack.c.l.b16 %v5400
    %v5465 = vunpack.c.h.b16 %v5400
    %v5466 = vunpack.c.l.b16 %v5401
    %v5467 = vunpack.c.h.b16 %v5401
    %v5468 = vunpack.c.l.b16 %v5402
    %v5469 = vunpack.c.h.b16 %v5402
    %v5470 = vunpack.c.l.b16 %v5403
    %v5471 = vunpack.c.h.b16 %v5403
    %v5472 = vunpack.c.l.b16 %v5404
    %v5473 = vunpack.c.h.b16 %v5404
    %v5474 = vunpack.c.l.b16 %v5405
    %v5475 = vunpack.c.h.b16 %v5405
    %v5476 = vunpack.c.l.b16 %v5406
    %v5477 = vunpack.c.h.b16 %v5406
    %v5478 = vunpack.c.l.b16 %v5407
    %v5479 = vunpack.c.h.b16 %v5407
    %v5480 = vunpack.c.l.b16 %v5408
    %v5481 = vunpack.c.h.b16 %v5408
    %v5482 = vunpack.c.l.b16 %v5409
    %v5483 = vunpack.c.h.b16 %v5409
    %v5484 = vunpack.c.l.b16 %v5410
    %v5485 = vunpack.c.h.b16 %v5410
    %v5486 = vunpack.c.l.b16 %v5411
    %v5487 = vunpack.c.h.b16 %v5411
    %v5488 = vunpack.c.l.b16 %v5412
    %v5489 = vunpack.c.h.b16 %v5412
    %v5490 = vunpack.c.l.b16 %v5413
    %v5491 = vunpack.c.h.b16 %v5413
    %v5492 = vunpack.c.l.b16 %v5414
    %v5493 = vunpack.c.h.b16 %v5414
    %v5494 = vunpack.c.l.b16 %v5415
    %v5495 = vunpack.c.h.b16 %v5415
    %v5496 = vunpack.c.l.b16 %v5416
    %v5497 = vunpack.c.h.b16 %v5416
    %v5498 = vunpack.c.l.b16 %v5417
    %v5499 = vunpack.c.h.b16 %v5417
    %v5500 = vunpack.c.l.b16 %v5418
    %v5501 = vunpack.c.h.b16 %v5418
    %v5502 = vunpack.c.l.b16 %v5419
    %v5503 = vunpack.c.h.b16 %v5419
    %v5504 = vunpack.c.l.b16 %v5420
    %v5505 = vunpack.c.h.b16 %v5420
    %v5506 = vunpack.c.l.b16 %v5421
    %v5507 = vunpack.c.h.b16 %v5421
    %v5508 = vunpack.c.l.b16 %v5422
    %v5509 = vunpack.c.h.b16 %v5422
    %v5510 = vunpack.c.l.b16 %v5423
    %v5511 = vunpack.c.h.b16 %v5423
    %v5512 = vunpack.c.l.b16 %v5424
    %v5513 = vunpack.c.h.b16 %v5424
    %v5514 = vunpack.c.l.b16 %v5425
    %v5515 = vunpack.c.h.b16 %v5425
    %v5516 = vunpack.c.l.b16 %v5426
    %v5517 = vunpack.c.h.b16 %v5426
    %v5518 = vunpack.c.l.b16 %v5427
    %v5519 = vunpack.c.h.b16 %v5427
    %v5520 = vunpack.c.l.b16 %v5428
    %v5521 = vunpack.c.h.b16 %v5428
    %v5522 = vunpack.c.l.b16 %v5429
    %v5523 = vunpack.c.h.b16 %v5429
    %v5524 = vunpack.c.l.b16 %v5430
    %v5525 = vunpack.c.h.b16 %v5430
    %v5526 = vunpack.c.l.b16 %v5431
    %v5527 = vunpack.c.h.b16 %v5431
    %v5528 = vpack.c.b16 %v5466, %v5464
    %v5529 = vpack.c.b16 %v5467, %v5465
    %v5530 = vpack.c.b16 %v5470, %v5468
    %v5531 = vpack.c.b16 %v5471, %v5469
    %v5532 = vpack.c.b16 %v5474, %v5472
    %v5533 = vpack.c.b16 %v5475, %v5473
    %v5534 = vpack.c.b16 %v5478, %v5476
    %v5535 = vpack.c.b16 %v5479, %v5477
    %v5536 = vpack.c.b16 %v5482, %v5480
    %v5537 = vpack.c.b16 %v5483, %v5481
    %v5538 = vpack.c.b16 %v5486, %v5484
    %v5539 = vpack.c.b16 %v5487, %v5485
    %v5540 = vpack.c.b16 %v5490, %v5488
    %v5541 = vpack.c.b16 %v5491, %v5489
    %v5542 = vpack.c.b16 %v5494, %v5492
    %v5543 = vpack.c.b16 %v5495, %v5493
    %v5544 = vpack.c.b16 %v5498, %v5496
    %v5545 = vpack.c.b16 %v5499, %v5497
    %v5546 = vpack.c.b16 %v5502, %v5500
    %v5547 = vpack.c.b16 %v5503, %v5501
    %v5548 = vpack.c.b16 %v5506, %v5504
    %v5549 = vpack.c.b16 %v5507, %v5505
    %v5550 = vpack.c.b16 %v5510, %v5508
    %v5551 = vpack.c.b16 %v5511, %v5509
    %v5552 = vpack.c.b16 %v5514, %v5512
    %v5553 = vpack.c.b16 %v5515, %v5513
    %v5554 = vpack.c.b16 %v5518, %v5516
    %v5555 = vpack.c.b16 %v5519, %v5517
    %v5556 = vpack.c.b16 %v5522, %v5520
    %v5557 = vpack.c.b16 %v5523, %v5521
    %v5558 = vpack.c.b16 %v5526, %v5524
    %v5559 = vpack.c.b16 %v5527, %v5525
    %5592 = vmatprep.subr.bf16.mxu0 %v5543
    %5593 = vmatpush1.bf16.msra.mxu0 %v5542
    %5594 = vmatprep.subr.bf16.mxu0 %v5541
    %5595 = vmatpush1.bf16.msra.mxu0 %v5540
    %5596 = vmatprep.subr.bf16.mxu0 %v5539
    %5597 = vmatpush1.bf16.msra.mxu0 %v5538
    %5598 = vmatprep.subr.bf16.mxu0 %v5537
    %5599 = vmatpush1.bf16.msra.mxu0 %v5536
    %5600 = vmatprep.subr.bf16.mxu0 %v5535
    %5601 = vmatpush1.bf16.msra.mxu0 %v5534
    %5602 = vmatprep.subr.bf16.mxu0 %v5533
    %5603 = vmatpush1.bf16.msra.mxu0 %v5532
    %5604 = vmatprep.subr.bf16.mxu0 %v5531
    %5605 = vmatpush1.bf16.msra.mxu0 %v5530
    %5606 = vmatprep.subr.bf16.mxu0 %v5529
    %5607 = vmatpush1.bf16.msra.mxu0 %v5528
    %5608 = vmatprep.subr.bf16.mxu0 %v5559
    %5609 = vmatpush2.bf16.msra.mxu0 %v5558
    %5610 = vmatprep.subr.bf16.mxu0 %v5557
    %5611 = vmatpush2.bf16.msra.mxu0 %v5556
    %5612 = vmatprep.subr.bf16.mxu0 %v5555
    %5613 = vmatpush2.bf16.msra.mxu0 %v5554
    %5614 = vmatprep.subr.bf16.mxu0 %v5553
    %5615 = vmatpush2.bf16.msra.mxu0 %v5552
    %5616 = vmatprep.subr.bf16.mxu0 %v5551
    %5617 = vmatpush2.bf16.msra.mxu0 %v5550
    %5618 = vmatprep.subr.bf16.mxu0 %v5549
    %5619 = vmatpush2.bf16.msra.mxu0 %v5548
    %5620 = vmatprep.subr.bf16.mxu0 %v5547
    %5621 = vmatpush2.bf16.msra.mxu0 %v5546
    %5622 = vmatprep.subr.bf16.mxu0 %v5545
    %5623 = vmatpush2.bf16.msra.mxu0 %v5544
    %5624 = vmatprep.mubr.bf16.mxu0 %v5398
    %5625 = vmatmul.mubr.bf16.gmra.mxu0 %v5397
    %v5626 = vpop.f32.mrf.mxu0
    %v5627 = vadd.f32 0.0, %v5626
    %v5628 = vpop.f32.mrf.mxu0
    %v5629 = vadd.f32 0.0, %v5628
    %v5630 = vpop.f32.mrf.mxu0
    %v5631 = vpop.f32.mrf.mxu0
    %5632 = vdwg.mxu0
    %v5633 = vadd.f32 %v5345, %v5627
    %v5634 = vadd.f32 %v5347, %v5629
    %s5635 = scalar_lea.vmem %s9, 12
    %v5636 = vld [vmem:[%s5635] sm:$0xf]
    %v5638 = vsel %vm4789, %v5636, 0
    %5640 = vmatprep.subr.bf16.mxu0 0
    %5641 = vmatpush1.bf16.msra.mxu0 0
    %5642 = vmatprep.subr.bf16.mxu0 0
    %5643 = vmatpush1.bf16.msra.mxu0 0
    %5644 = vmatprep.subr.bf16.mxu0 0
    %5645 = vmatpush1.bf16.msra.mxu0 0
    %5646 = vmatprep.subr.bf16.mxu0 0
    %5647 = vmatpush1.bf16.msra.mxu0 0
    %5648 = vmatprep.subr.bf16.mxu0 0
    %5649 = vmatpush1.bf16.msra.mxu0 0
    %5650 = vmatprep.subr.bf16.mxu0 0
    %5651 = vmatpush1.bf16.msra.mxu0 0
    %5652 = vmatprep.subr.bf16.mxu0 0
    %5653 = vmatpush1.bf16.msra.mxu0 0
    %5654 = vmatprep.subr.bf16.mxu0 %v4787
    %5655 = vmatpush1.bf16.msra.mxu0 %v4786
    %5656 = vmatprep.subr.bf16.mxu0 0
    %5657 = vmatpush2.bf16.msra.mxu0 0
    %5658 = vmatprep.subr.bf16.mxu0 0
    %5659 = vmatpush2.bf16.msra.mxu0 0
    %5660 = vmatprep.subr.bf16.mxu0 0
    %5661 = vmatpush2.bf16.msra.mxu0 0
    %5662 = vmatprep.subr.bf16.mxu0 0
    %5663 = vmatpush2.bf16.msra.mxu0 0
    %5664 = vmatprep.subr.bf16.mxu0 0
    %5665 = vmatpush2.bf16.msra.mxu0 0
    %5666 = vmatprep.subr.bf16.mxu0 0
    %5667 = vmatpush2.bf16.msra.mxu0 0
    %5668 = vmatprep.subr.bf16.mxu0 0
    %5669 = vmatpush2.bf16.msra.mxu0 0
    %5670 = vmatprep.subr.bf16.mxu0 0
    %5671 = vmatpush2.bf16.msra.mxu0 0
    %5672 = vmatprep.mubr.bf16.mxu0 0
    %5673 = vmatmul.mubr.bf16.gmra.mxu0 %v5638
    %v5674 = vpop.f32.mrf.mxu0
    %v5675 = vadd.f32 0.0, %v5674
    %v5676 = vpop.f32.mrf.mxu0
    %v5677 = vadd.f32 0.0, %v5676
    %v5678 = vpop.f32.mrf.mxu0
    %v5679 = vpop.f32.mrf.mxu0
    %5680 = vdwg.mxu0
    %v5681 = vpack.c.bf16 %v5675, %v5675
    %v5682 = vpack.c.bf16 %v5677, %v5677
    %s5683 = scalar_lea.vmem [#allocation9], 768
    %v5684 = vld [vmem:[%s5683] sm:$0xff]
    %v5685 = vld [vmem:[%s5683 + $0x8] sm:$0xff]
    %v5686 = vld [vmem:[%s5683 + $0x10] sm:$0xff]
    %v5687 = vld [vmem:[%s5683 + $0x18] sm:$0xff]
    %v5688 = vld [vmem:[%s5683 + $0x20] sm:$0xff]
    %v5689 = vld [vmem:[%s5683 + $0x28] sm:$0xff]
    %v5690 = vld [vmem:[%s5683 + $0x30] sm:$0xff]
    %v5691 = vld [vmem:[%s5683 + $0x38] sm:$0xff]
    %v5692 = vld [vmem:[%s5683 + $0x40] sm:$0xff]
    %v5693 = vld [vmem:[%s5683 + $0x48] sm:$0xff]
    %v5694 = vld [vmem:[%s5683 + $0x50] sm:$0xff]
    %v5695 = vld [vmem:[%s5683 + $0x58] sm:$0xff]
    %v5696 = vld [vmem:[%s5683 + $0x60] sm:$0xff]
    %v5697 = vld [vmem:[%s5683 + $0x68] sm:$0xff]
    %v5698 = vld [vmem:[%s5683 + $0x70] sm:$0xff]
    %v5699 = vld [vmem:[%s5683 + $0x78] sm:$0xff]
    %v5700 = vld [vmem:[%s5683 + $0x80] sm:$0xff]
    %v5701 = vld [vmem:[%s5683 + $0x88] sm:$0xff]
    %v5702 = vld [vmem:[%s5683 + $0x90] sm:$0xff]
    %v5703 = vld [vmem:[%s5683 + $0x98] sm:$0xff]
    %v5704 = vld [vmem:[%s5683 + $0xa0] sm:$0xff]
    %v5705 = vld [vmem:[%s5683 + $0xa8] sm:$0xff]
    %v5706 = vld [vmem:[%s5683 + $0xb0] sm:$0xff]
    %v5707 = vld [vmem:[%s5683 + $0xb8] sm:$0xff]
    %v5708 = vld [vmem:[%s5683 + $0xc0] sm:$0xff]
    %v5709 = vld [vmem:[%s5683 + $0xc8] sm:$0xff]
    %v5710 = vld [vmem:[%s5683 + $0xd0] sm:$0xff]
    %v5711 = vld [vmem:[%s5683 + $0xd8] sm:$0xff]
    %v5712 = vld [vmem:[%s5683 + $0xe0] sm:$0xff]
    %v5713 = vld [vmem:[%s5683 + $0xe8] sm:$0xff]
    %v5714 = vld [vmem:[%s5683 + $0xf0] sm:$0xff]
    %v5715 = vld [vmem:[%s5683 + $0xf8] sm:$0xff]
    %v5748 = vunpack.c.l.b16 %v5684
    %v5749 = vunpack.c.h.b16 %v5684
    %v5750 = vunpack.c.l.b16 %v5685
    %v5751 = vunpack.c.h.b16 %v5685
    %v5752 = vunpack.c.l.b16 %v5686
    %v5753 = vunpack.c.h.b16 %v5686
    %v5754 = vunpack.c.l.b16 %v5687
    %v5755 = vunpack.c.h.b16 %v5687
    %v5756 = vunpack.c.l.b16 %v5688
    %v5757 = vunpack.c.h.b16 %v5688
    %v5758 = vunpack.c.l.b16 %v5689
    %v5759 = vunpack.c.h.b16 %v5689
    %v5760 = vunpack.c.l.b16 %v5690
    %v5761 = vunpack.c.h.b16 %v5690
    %v5762 = vunpack.c.l.b16 %v5691
    %v5763 = vunpack.c.h.b16 %v5691
    %v5764 = vunpack.c.l.b16 %v5692
    %v5765 = vunpack.c.h.b16 %v5692
    %v5766 = vunpack.c.l.b16 %v5693
    %v5767 = vunpack.c.h.b16 %v5693
    %v5768 = vunpack.c.l.b16 %v5694
    %v5769 = vunpack.c.h.b16 %v5694
    %v5770 = vunpack.c.l.b16 %v5695
    %v5771 = vunpack.c.h.b16 %v5695
    %v5772 = vunpack.c.l.b16 %v5696
    %v5773 = vunpack.c.h.b16 %v5696
    %v5774 = vunpack.c.l.b16 %v5697
    %v5775 = vunpack.c.h.b16 %v5697
    %v5776 = vunpack.c.l.b16 %v5698
    %v5777 = vunpack.c.h.b16 %v5698
    %v5778 = vunpack.c.l.b16 %v5699
    %v5779 = vunpack.c.h.b16 %v5699
    %v5780 = vunpack.c.l.b16 %v5700
    %v5781 = vunpack.c.h.b16 %v5700
    %v5782 = vunpack.c.l.b16 %v5701
    %v5783 = vunpack.c.h.b16 %v5701
    %v5784 = vunpack.c.l.b16 %v5702
    %v5785 = vunpack.c.h.b16 %v5702
    %v5786 = vunpack.c.l.b16 %v5703
    %v5787 = vunpack.c.h.b16 %v5703
    %v5788 = vunpack.c.l.b16 %v5704
    %v5789 = vunpack.c.h.b16 %v5704
    %v5790 = vunpack.c.l.b16 %v5705
    %v5791 = vunpack.c.h.b16 %v5705
    %v5792 = vunpack.c.l.b16 %v5706
    %v5793 = vunpack.c.h.b16 %v5706
    %v5794 = vunpack.c.l.b16 %v5707
    %v5795 = vunpack.c.h.b16 %v5707
    %v5796 = vunpack.c.l.b16 %v5708
    %v5797 = vunpack.c.h.b16 %v5708
    %v5798 = vunpack.c.l.b16 %v5709
    %v5799 = vunpack.c.h.b16 %v5709
    %v5800 = vunpack.c.l.b16 %v5710
    %v5801 = vunpack.c.h.b16 %v5710
    %v5802 = vunpack.c.l.b16 %v5711
    %v5803 = vunpack.c.h.b16 %v5711
    %v5804 = vunpack.c.l.b16 %v5712
    %v5805 = vunpack.c.h.b16 %v5712
    %v5806 = vunpack.c.l.b16 %v5713
    %v5807 = vunpack.c.h.b16 %v5713
    %v5808 = vunpack.c.l.b16 %v5714
    %v5809 = vunpack.c.h.b16 %v5714
    %v5810 = vunpack.c.l.b16 %v5715
    %v5811 = vunpack.c.h.b16 %v5715
    %v5812 = vpack.c.b16 %v5750, %v5748
    %v5813 = vpack.c.b16 %v5751, %v5749
    %v5814 = vpack.c.b16 %v5754, %v5752
    %v5815 = vpack.c.b16 %v5755, %v5753
    %v5816 = vpack.c.b16 %v5758, %v5756
    %v5817 = vpack.c.b16 %v5759, %v5757
    %v5818 = vpack.c.b16 %v5762, %v5760
    %v5819 = vpack.c.b16 %v5763, %v5761
    %v5820 = vpack.c.b16 %v5766, %v5764
    %v5821 = vpack.c.b16 %v5767, %v5765
    %v5822 = vpack.c.b16 %v5770, %v5768
    %v5823 = vpack.c.b16 %v5771, %v5769
    %v5824 = vpack.c.b16 %v5774, %v5772
    %v5825 = vpack.c.b16 %v5775, %v5773
    %v5826 = vpack.c.b16 %v5778, %v5776
    %v5827 = vpack.c.b16 %v5779, %v5777
    %v5828 = vpack.c.b16 %v5782, %v5780
    %v5829 = vpack.c.b16 %v5783, %v5781
    %v5830 = vpack.c.b16 %v5786, %v5784
    %v5831 = vpack.c.b16 %v5787, %v5785
    %v5832 = vpack.c.b16 %v5790, %v5788
    %v5833 = vpack.c.b16 %v5791, %v5789
    %v5834 = vpack.c.b16 %v5794, %v5792
    %v5835 = vpack.c.b16 %v5795, %v5793
    %v5836 = vpack.c.b16 %v5798, %v5796
    %v5837 = vpack.c.b16 %v5799, %v5797
    %v5838 = vpack.c.b16 %v5802, %v5800
    %v5839 = vpack.c.b16 %v5803, %v5801
    %v5840 = vpack.c.b16 %v5806, %v5804
    %v5841 = vpack.c.b16 %v5807, %v5805
    %v5842 = vpack.c.b16 %v5810, %v5808
    %v5843 = vpack.c.b16 %v5811, %v5809
    %5876 = vmatprep.subr.bf16.mxu0 %v5827
    %5877 = vmatpush1.bf16.msra.mxu0 %v5826
    %5878 = vmatprep.subr.bf16.mxu0 %v5825
    %5879 = vmatpush1.bf16.msra.mxu0 %v5824
    %5880 = vmatprep.subr.bf16.mxu0 %v5823
    %5881 = vmatpush1.bf16.msra.mxu0 %v5822
    %5882 = vmatprep.subr.bf16.mxu0 %v5821
    %5883 = vmatpush1.bf16.msra.mxu0 %v5820
    %5884 = vmatprep.subr.bf16.mxu0 %v5819
    %5885 = vmatpush1.bf16.msra.mxu0 %v5818
    %5886 = vmatprep.subr.bf16.mxu0 %v5817
    %5887 = vmatpush1.bf16.msra.mxu0 %v5816
    %5888 = vmatprep.subr.bf16.mxu0 %v5815
    %5889 = vmatpush1.bf16.msra.mxu0 %v5814
    %5890 = vmatprep.subr.bf16.mxu0 %v5813
    %5891 = vmatpush1.bf16.msra.mxu0 %v5812
    %5892 = vmatprep.subr.bf16.mxu0 %v5843
    %5893 = vmatpush2.bf16.msra.mxu0 %v5842
    %5894 = vmatprep.subr.bf16.mxu0 %v5841
    %5895 = vmatpush2.bf16.msra.mxu0 %v5840
    %5896 = vmatprep.subr.bf16.mxu0 %v5839
    %5897 = vmatpush2.bf16.msra.mxu0 %v5838
    %5898 = vmatprep.subr.bf16.mxu0 %v5837
    %5899 = vmatpush2.bf16.msra.mxu0 %v5836
    %5900 = vmatprep.subr.bf16.mxu0 %v5835
    %5901 = vmatpush2.bf16.msra.mxu0 %v5834
    %5902 = vmatprep.subr.bf16.mxu0 %v5833
    %5903 = vmatpush2.bf16.msra.mxu0 %v5832
    %5904 = vmatprep.subr.bf16.mxu0 %v5831
    %5905 = vmatpush2.bf16.msra.mxu0 %v5830
    %5906 = vmatprep.subr.bf16.mxu0 %v5829
    %5907 = vmatpush2.bf16.msra.mxu0 %v5828
    %5908 = vmatprep.mubr.bf16.mxu0 %v5682
    %5909 = vmatmul.mubr.bf16.gmra.mxu0 %v5681
    %v5910 = vpop.f32.mrf.mxu0
    %v5911 = vadd.f32 0.0, %v5910
    %v5912 = vpop.f32.mrf.mxu0
    %v5913 = vadd.f32 0.0, %v5912
    %v5914 = vpop.f32.mrf.mxu0
    %v5915 = vpop.f32.mrf.mxu0
    %5916 = vdwg.mxu0
    %v5917 = vadd.f32 %v5633, %v5911
    %v5918 = vadd.f32 %v5634, %v5913
    %v5919 = vrot.slane %v5917, 4
    %v5920 = vadd.f32 %v5917, %v5919
    %v5921 = vrot.slane %v5920, 2
    %v5922 = vadd.f32 %v5920, %v5921
    %v5923 = vrot.slane %v5922, 1
    %v5924 = vadd.f32 %v5922, %v5923
    %v5925 = vrot.slane %v5918, 4
    %v5926 = vadd.f32 %v5918, %v5925
    %v5927 = vrot.slane %v5926, 2
    %v5928 = vadd.f32 %v5926, %v5927
    %v5929 = vrot.slane %v5928, 1
    %v5930 = vadd.f32 %v5928, %v5929
    %v5931 = vmul.f32 %v5917, %v5917
    %v5932 = vmul.f32 %v5918, %v5918
    %v5933 = vrot.slane %v5931, 4
    %v5934 = vadd.f32 %v5931, %v5933
    %v5935 = vrot.slane %v5934, 2
    %v5936 = vadd.f32 %v5934, %v5935
    %v5937 = vrot.slane %v5936, 1
    %v5938 = vadd.f32 %v5936, %v5937
    %v5939 = vrot.slane %v5932, 4
    %v5940 = vadd.f32 %v5932, %v5939
    %v5941 = vrot.slane %v5940, 2
    %v5942 = vadd.f32 %v5940, %v5941
    %v5943 = vrot.slane %v5942, 1
    %v5944 = vadd.f32 %v5942, %v5943
    %v5945 = vld [vmem:[#allocation10] sm:$0xff]
    %v5946 = vld [vmem:[#allocation10 + $0x8] sm:$0xff]
    %v5947 = vld [vmem:[#allocation10 + $0x10] sm:$0xff]
    %v5948 = vld [vmem:[#allocation10 + $0x18] sm:$0xff]
    %v5949 = vld [vmem:[#allocation10 + $0x20] sm:$0xff]
    %v5950 = vld [vmem:[#allocation10 + $0x28] sm:$0xff]
    %v5951 = vld [vmem:[#allocation10 + $0x30] sm:$0xff]
    %v5952 = vld [vmem:[#allocation10 + $0x38] sm:$0xff]
    %v5953 = vld [vmem:[#allocation10 + $0x40] sm:$0xff]
    %v5954 = vld [vmem:[#allocation10 + $0x48] sm:$0xff]
    %v5955 = vld [vmem:[#allocation10 + $0x50] sm:$0xff]
    %v5956 = vld [vmem:[#allocation10 + $0x58] sm:$0xff]
    %v5957 = vld [vmem:[#allocation10 + $0x60] sm:$0xff]
    %v5958 = vld [vmem:[#allocation10 + $0x68] sm:$0xff]
    %v5959 = vld [vmem:[#allocation10 + $0x70] sm:$0xff]
    %v5960 = vld [vmem:[#allocation10 + $0x78] sm:$0xff]
    %v5961 = vld [vmem:[#allocation10 + $0x80] sm:$0xff]
    %v5962 = vld [vmem:[#allocation10 + $0x88] sm:$0xff]
    %v5963 = vld [vmem:[#allocation10 + $0x90] sm:$0xff]
    %v5964 = vld [vmem:[#allocation10 + $0x98] sm:$0xff]
    %v5965 = vld [vmem:[#allocation10 + $0xa0] sm:$0xff]
    %v5966 = vld [vmem:[#allocation10 + $0xa8] sm:$0xff]
    %v5967 = vld [vmem:[#allocation10 + $0xb0] sm:$0xff]
    %v5968 = vld [vmem:[#allocation10 + $0xb8] sm:$0xff]
    %v5969 = vld [vmem:[#allocation10 + $0xc0] sm:$0xff]
    %v5970 = vld [vmem:[#allocation10 + $0xc8] sm:$0xff]
    %v5971 = vld [vmem:[#allocation10 + $0xd0] sm:$0xff]
    %v5972 = vld [vmem:[#allocation10 + $0xd8] sm:$0xff]
    %v5973 = vld [vmem:[#allocation10 + $0xe0] sm:$0xff]
    %v5974 = vld [vmem:[#allocation10 + $0xe8] sm:$0xff]
    %v5975 = vld [vmem:[#allocation10 + $0xf0] sm:$0xff]
    %v5976 = vld [vmem:[#allocation10 + $0xf8] sm:$0xff]
    %v5977 = vld [vmem:[#allocation10 + $0x100] sm:$0xff]
    %v5978 = vld [vmem:[#allocation10 + $0x108] sm:$0xff]
    %v5979 = vld [vmem:[#allocation10 + $0x110] sm:$0xff]
    %v5980 = vld [vmem:[#allocation10 + $0x118] sm:$0xff]
    %v5981 = vld [vmem:[#allocation10 + $0x120] sm:$0xff]
    %v5982 = vld [vmem:[#allocation10 + $0x128] sm:$0xff]
    %v5983 = vld [vmem:[#allocation10 + $0x130] sm:$0xff]
    %v5984 = vld [vmem:[#allocation10 + $0x138] sm:$0xff]
    %v5985 = vld [vmem:[#allocation10 + $0x140] sm:$0xff]
    %v5986 = vld [vmem:[#allocation10 + $0x148] sm:$0xff]
    %v5987 = vld [vmem:[#allocation10 + $0x150] sm:$0xff]
    %v5988 = vld [vmem:[#allocation10 + $0x158] sm:$0xff]
    %v5989 = vld [vmem:[#allocation10 + $0x160] sm:$0xff]
    %v5990 = vld [vmem:[#allocation10 + $0x168] sm:$0xff]
    %v5991 = vld [vmem:[#allocation10 + $0x170] sm:$0xff]
    %v5992 = vld [vmem:[#allocation10 + $0x178] sm:$0xff]
    %v5993 = vld [vmem:[#allocation10 + $0x180] sm:$0xff]
    %v5994 = vld [vmem:[#allocation10 + $0x188] sm:$0xff]
    %v5995 = vld [vmem:[#allocation10 + $0x190] sm:$0xff]
    %v5996 = vld [vmem:[#allocation10 + $0x198] sm:$0xff]
    %v5997 = vld [vmem:[#allocation10 + $0x1a0] sm:$0xff]
    %v5998 = vld [vmem:[#allocation10 + $0x1a8] sm:$0xff]
    %v5999 = vld [vmem:[#allocation10 + $0x1b0] sm:$0xff]
    %v6000 = vld [vmem:[#allocation10 + $0x1b8] sm:$0xff]
    %v6001 = vld [vmem:[#allocation10 + $0x1c0] sm:$0xff]
    %v6002 = vld [vmem:[#allocation10 + $0x1c8] sm:$0xff]
    %v6003 = vld [vmem:[#allocation10 + $0x1d0] sm:$0xff]
    %v6004 = vld [vmem:[#allocation10 + $0x1d8] sm:$0xff]
    %v6005 = vld [vmem:[#allocation10 + $0x1e0] sm:$0xff]
    %v6006 = vld [vmem:[#allocation10 + $0x1e8] sm:$0xff]
    %v6007 = vld [vmem:[#allocation10 + $0x1f0] sm:$0xff]
    %v6008 = vld [vmem:[#allocation10 + $0x1f8] sm:$0xff]
    %6009 = vmatprep.subr.mxu0 %v5976
    %6010 = vmatpush1.msra.mxu0 %v5975
    %6011 = vmatprep.subr.mxu0 %v5974
    %6012 = vmatpush1.msra.mxu0 %v5973
    %6013 = vmatprep.subr.mxu0 %v5972
    %6014 = vmatpush1.msra.mxu0 %v5971
    %6015 = vmatprep.subr.mxu0 %v5970
    %6016 = vmatpush1.msra.mxu0 %v5969
    %6017 = vmatprep.subr.mxu0 %v5968
    %6018 = vmatpush1.msra.mxu0 %v5967
    %6019 = vmatprep.subr.mxu0 %v5966
    %6020 = vmatpush1.msra.mxu0 %v5965
    %6021 = vmatprep.subr.mxu0 %v5964
    %6022 = vmatpush1.msra.mxu0 %v5963
    %6023 = vmatprep.subr.mxu0 %v5962
    %6024 = vmatpush1.msra.mxu0 %v5961
    %6025 = vmatprep.subr.mxu0 %v5960
    %6026 = vmatpush1.msra.mxu0 %v5959
    %6027 = vmatprep.subr.mxu0 %v5958
    %6028 = vmatpush1.msra.mxu0 %v5957
    %6029 = vmatprep.subr.mxu0 %v5956
    %6030 = vmatpush1.msra.mxu0 %v5955
    %6031 = vmatprep.subr.mxu0 %v5954
    %6032 = vmatpush1.msra.mxu0 %v5953
    %6033 = vmatprep.subr.mxu0 %v5952
    %6034 = vmatpush1.msra.mxu0 %v5951
    %6035 = vmatprep.subr.mxu0 %v5950
    %6036 = vmatpush1.msra.mxu0 %v5949
    %6037 = vmatprep.subr.mxu0 %v5948
    %6038 = vmatpush1.msra.mxu0 %v5947
    %6039 = vmatprep.subr.mxu0 %v5946
    %6040 = vmatpush1.msra.mxu0 %v5945
    %6041 = vmatprep.subr.mxu0 %v6008
    %6042 = vmatpush2.msra.mxu0 %v6007
    %6043 = vmatprep.subr.mxu0 %v6006
    %6044 = vmatpush2.msra.mxu0 %v6005
    %6045 = vmatprep.subr.mxu0 %v6004
    %6046 = vmatpush2.msra.mxu0 %v6003
    %6047 = vmatprep.subr.mxu0 %v6002
    %6048 = vmatpush2.msra.mxu0 %v6001
    %6049 = vmatprep.subr.mxu0 %v6000
    %6050 = vmatpush2.msra.mxu0 %v5999
    %6051 = vmatprep.subr.mxu0 %v5998
    %6052 = vmatpush2.msra.mxu0 %v5997
    %6053 = vmatprep.subr.mxu0 %v5996
    %6054 = vmatpush2.msra.mxu0 %v5995
    %6055 = vmatprep.subr.mxu0 %v5994
    %6056 = vmatpush2.msra.mxu0 %v5993
    %6057 = vmatprep.subr.mxu0 %v5992
    %6058 = vmatpush2.msra.mxu0 %v5991
    %6059 = vmatprep.subr.mxu0 %v5990
    %6060 = vmatpush2.msra.mxu0 %v5989
    %6061 = vmatprep.subr.mxu0 %v5988
    %6062 = vmatpush2.msra.mxu0 %v5987
    %6063 = vmatprep.subr.mxu0 %v5986
    %6064 = vmatpush2.msra.mxu0 %v5985
    %6065 = vmatprep.subr.mxu0 %v5984
    %6066 = vmatpush2.msra.mxu0 %v5983
    %6067 = vmatprep.subr.mxu0 %v5982
    %6068 = vmatpush2.msra.mxu0 %v5981
    %6069 = vmatprep.subr.mxu0 %v5980
    %6070 = vmatpush2.msra.mxu0 %v5979
    %6071 = vmatprep.subr.mxu0 %v5978
    %6072 = vmatpush2.msra.mxu0 %v5977
    %6073 = vmatprep.mubr.f32.mxu0 %v5930
    %6074 = vmatmul.mubr.f32.gmra.mxu0 %v5924
    %v6075 = vpop.f32.mrf.mxu0
    %v6076 = vadd.f32 0.0, %v6075
    %v6077 = vpop.f32.mrf.mxu0
    %v6078 = vadd.f32 0.0, %v6077
    %6079 = vdwg.mxu0
    %v6080 = vmul.f32 %v6076, 0.03125
    %v6081 = vmul.f32 %v6078, 0.03125
    %6082 = vmatprep.subr.mxu0 %v5976
    %6083 = vmatpush1.msra.mxu0 %v5975
    %6084 = vmatprep.subr.mxu0 %v5974
    %6085 = vmatpush1.msra.mxu0 %v5973
    %6086 = vmatprep.subr.mxu0 %v5972
    %6087 = vmatpush1.msra.mxu0 %v5971
    %6088 = vmatprep.subr.mxu0 %v5970
    %6089 = vmatpush1.msra.mxu0 %v5969
    %6090 = vmatprep.subr.mxu0 %v5968
    %6091 = vmatpush1.msra.mxu0 %v5967
    %6092 = vmatprep.subr.mxu0 %v5966
    %6093 = vmatpush1.msra.mxu0 %v5965
    %6094 = vmatprep.subr.mxu0 %v5964
    %6095 = vmatpush1.msra.mxu0 %v5963
    %6096 = vmatprep.subr.mxu0 %v5962
    %6097 = vmatpush1.msra.mxu0 %v5961
    %6098 = vmatprep.subr.mxu0 %v5960
    %6099 = vmatpush1.msra.mxu0 %v5959
    %6100 = vmatprep.subr.mxu0 %v5958
    %6101 = vmatpush1.msra.mxu0 %v5957
    %6102 = vmatprep.subr.mxu0 %v5956
    %6103 = vmatpush1.msra.mxu0 %v5955
    %6104 = vmatprep.subr.mxu0 %v5954
    %6105 = vmatpush1.msra.mxu0 %v5953
    %6106 = vmatprep.subr.mxu0 %v5952
    %6107 = vmatpush1.msra.mxu0 %v5951
    %6108 = vmatprep.subr.mxu0 %v5950
    %6109 = vmatpush1.msra.mxu0 %v5949
    %6110 = vmatprep.subr.mxu0 %v5948
    %6111 = vmatpush1.msra.mxu0 %v5947
    %6112 = vmatprep.subr.mxu0 %v5946
    %6113 = vmatpush1.msra.mxu0 %v5945
    %6114 = vmatprep.subr.mxu0 %v6008
    %6115 = vmatpush2.msra.mxu0 %v6007
    %6116 = vmatprep.subr.mxu0 %v6006
    %6117 = vmatpush2.msra.mxu0 %v6005
    %6118 = vmatprep.subr.mxu0 %v6004
    %6119 = vmatpush2.msra.mxu0 %v6003
    %6120 = vmatprep.subr.mxu0 %v6002
    %6121 = vmatpush2.msra.mxu0 %v6001
    %6122 = vmatprep.subr.mxu0 %v6000
    %6123 = vmatpush2.msra.mxu0 %v5999
    %6124 = vmatprep.subr.mxu0 %v5998
    %6125 = vmatpush2.msra.mxu0 %v5997
    %6126 = vmatprep.subr.mxu0 %v5996
    %6127 = vmatpush2.msra.mxu0 %v5995
    %6128 = vmatprep.subr.mxu0 %v5994
    %6129 = vmatpush2.msra.mxu0 %v5993
    %6130 = vmatprep.subr.mxu0 %v5992
    %6131 = vmatpush2.msra.mxu0 %v5991
    %6132 = vmatprep.subr.mxu0 %v5990
    %6133 = vmatpush2.msra.mxu0 %v5989
    %6134 = vmatprep.subr.mxu0 %v5988
    %6135 = vmatpush2.msra.mxu0 %v5987
    %6136 = vmatprep.subr.mxu0 %v5986
    %6137 = vmatpush2.msra.mxu0 %v5985
    %6138 = vmatprep.subr.mxu0 %v5984
    %6139 = vmatpush2.msra.mxu0 %v5983
    %6140 = vmatprep.subr.mxu0 %v5982
    %6141 = vmatpush2.msra.mxu0 %v5981
    %6142 = vmatprep.subr.mxu0 %v5980
    %6143 = vmatpush2.msra.mxu0 %v5979
    %6144 = vmatprep.subr.mxu0 %v5978
    %6145 = vmatpush2.msra.mxu0 %v5977
    %6146 = vmatprep.mubr.f32.mxu0 %v5944
    %6147 = vmatmul.mubr.f32.gmra.mxu0 %v5938
    %v6148 = vpop.f32.mrf.mxu0
    %v6149 = vadd.f32 0.0, %v6148
    %v6150 = vpop.f32.mrf.mxu0
    %v6151 = vadd.f32 0.0, %v6150
    %6152 = vdwg.mxu0
    %v6153 = vmul.f32 %v6149, 0.03125
    %v6154 = vmul.f32 %v6151, 0.03125
    %v6155 = vmul.f32 %v6080, %v6080
    %v6156 = vmul.f32 %v6081, %v6081
    %v6157 = vsub.f32 %v6153, %v6155
    %v6158 = vsub.f32 %v6154, %v6156
    %v6159 = vmax.f32 %v6157, 0.0
    %v6160 = vmax.f32 %v6158, 0.0
    %v6161 = vlaneseq
    %v6162 = vshrl.u32 %v6161, 7
    %v6163 = vsub.s32 0, %v6162
    %v6164 = vrot.slane %v6080, %v6163
    %v6165 = vlaneseq
    %v6166 = vshrl.u32 %v6165, 7
    %v6167 = vsub.s32 0, %v6166
    %v6168 = vrot.slane %v6081, %v6167
    %v6169 = vsub.f32 %v5917, %v6164
    %v6170 = vsub.f32 %v5918, %v6168
    %v6171 = vadd.f32 %v6159, 1e-05
    %v6172 = vadd.f32 %v6160, 1e-05
    %v6173 = vrsqrt.pop %v6171
    %v6174 = vrsqrt.pop %v6172
    %v6175 = vlaneseq
    %v6176 = vshrl.u32 %v6175, 7
    %v6177 = vsub.s32 0, %v6176
    %v6178 = vrot.slane %v6173, %v6177
    %v6179 = vlaneseq
    %v6180 = vshrl.u32 %v6179, 7
    %v6181 = vsub.s32 0, %v6180
    %v6182 = vrot.slane %v6174, %v6181
    %v6183 = vmul.f32 %v6169, %v6178
    %v6184 = vmul.f32 %v6170, %v6182
    %vm6185 = vcmp.ge.f32.partialorder %v6183, 0.0
    %vm6186 = vcmp.ge.f32.partialorder %v6184, 0.0
    %v6187 = vmul.f32 %v6183, 0.2
    %v6188 = vmul.f32 %v6184, 0.2
    %v6189 = vsel %vm6185, %v6183, %v6187
    %v6190 = vsel %vm6186, %v6184, %v6188
    %v6191 = vld [vmem:[%s12] sm:$0xff]
    %v6192 = vld [vmem:[%s12 + $0x8] sm:$0xff]
    %v6193 = vmul.f32 %v6189, %v6191
    %v6194 = vmul.f32 %v6190, %v6192
    %v6195 = vadd.f32 %v6193, %v6194
    %6196 = vadd.xlane.f32.xlu0 %v6195
    %v6197 = vpop.xlane.xlu0 %6196
    %v6198 = vld [vmem:[%s13] sm:$0x3]
    %vm6199 = vcmask 64512
    %v6201 = vsel %vm6199, %v6198, 0
    %6203 = vmatprep.subr.mxu0 0.0
    %6204 = vmatpush1.msra.mxu0 0.0
    %6205 = vmatprep.subr.mxu0 0.0
    %6206 = vmatpush1.msra.mxu0 0.0
    %6207 = vmatprep.subr.mxu0 0.0
    %6208 = vmatpush1.msra.mxu0 0.0
    %6209 = vmatprep.subr.mxu0 0.0
    %6210 = vmatpush1.msra.mxu0 0.0
    %6211 = vmatprep.subr.mxu0 0.0
    %6212 = vmatpush1.msra.mxu0 0.0
    %6213 = vmatprep.subr.mxu0 0.0
    %6214 = vmatpush1.msra.mxu0 0.0
    %6215 = vmatprep.subr.mxu0 0.0
    %6216 = vmatpush1.msra.mxu0 0.0
    %6217 = vmatprep.subr.mxu0 0.0
    %6218 = vmatpush1.msra.mxu0 0.0
    %6219 = vmatprep.subr.mxu0 0.0
    %6220 = vmatpush1.msra.mxu0 0.0
    %6221 = vmatprep.subr.mxu0 0.0
    %6222 = vmatpush1.msra.mxu0 0.0
    %6223 = vmatprep.subr.mxu0 0.0
    %6224 = vmatpush1.msra.mxu0 0.0
    %6225 = vmatprep.subr.mxu0 0.0
    %6226 = vmatpush1.msra.mxu0 0.0
    %6227 = vmatprep.subr.mxu0 0.0
    %6228 = vmatpush1.msra.mxu0 0.0
    %6229 = vmatprep.subr.mxu0 0.0
    %6230 = vmatpush1.msra.mxu0 0.0
    %6231 = vmatprep.subr.mxu0 0.0
    %6232 = vmatpush1.msra.mxu0 0.0
    %6233 = vmatprep.subr.mxu0 0.0
    %6234 = vmatpush1.msra.mxu0 %v6197
    %6235 = vmatprep.subr.mxu0 0.0
    %6236 = vmatpush2.msra.mxu0 0.0
    %6237 = vmatprep.subr.mxu0 0.0
    %6238 = vmatpush2.msra.mxu0 0.0
    %6239 = vmatprep.subr.mxu0 0.0
    %6240 = vmatpush2.msra.mxu0 0.0
    %6241 = vmatprep.subr.mxu0 0.0
    %6242 = vmatpush2.msra.mxu0 0.0
    %6243 = vmatprep.subr.mxu0 0.0
    %6244 = vmatpush2.msra.mxu0 0.0
    %6245 = vmatprep.subr.mxu0 0.0
    %6246 = vmatpush2.msra.mxu0 0.0
    %6247 = vmatprep.subr.mxu0 0.0
    %6248 = vmatpush2.msra.mxu0 0.0
    %6249 = vmatprep.subr.mxu0 0.0
    %6250 = vmatpush2.msra.mxu0 0.0
    %6251 = vmatprep.subr.mxu0 0.0
    %6252 = vmatpush2.msra.mxu0 0.0
    %6253 = vmatprep.subr.mxu0 0.0
    %6254 = vmatpush2.msra.mxu0 0.0
    %6255 = vmatprep.subr.mxu0 0.0
    %6256 = vmatpush2.msra.mxu0 0.0
    %6257 = vmatprep.subr.mxu0 0.0
    %6258 = vmatpush2.msra.mxu0 0.0
    %6259 = vmatprep.subr.mxu0 0.0
    %6260 = vmatpush2.msra.mxu0 0.0
    %6261 = vmatprep.subr.mxu0 0.0
    %6262 = vmatpush2.msra.mxu0 0.0
    %6263 = vmatprep.subr.mxu0 0.0
    %6264 = vmatpush2.msra.mxu0 0.0
    %6265 = vmatprep.subr.mxu0 0.0
    %6266 = vmatpush2.msra.mxu0 0.0
    %6267 = vmatprep.mubr.f32.mxu0 0.0
    %6268 = vmatmul.mubr.f32.gmra.mxu0 %v6201
    %v6269 = vpop.f32.mrf.mxu0
    %v6270 = vadd.f32 0.0, %v6269
    %v6271 = vpop.f32.mrf.mxu0
    %6272 = vdwg.mxu0
    %v6273 = vsub.f32 0.0, %v6270
    %v6274 = vmul.f32 %v6273, 1.442695
    %v6275 = vpow.pop %v6274
    %v6276 = vadd.f32 %v6275, 1.0
    %v6277 = vrcp.pop %v6276
    %v6278 = vmul.f32 1.0, %v6277
    %vm6279 = vcmask 1024
    %6280 = vst.msk [vmem:[%s14] sm:$0x3] %vm6279, %v6278
    // Predicated region
    $region82: #{discriminator_face_forward.1} parent=1 // pred_check
      _
    $region83: #{discriminator_face_forward.1} parent=1 // pred_check_branch
      %6282 = sbr.rel (0) target = $region85
    $region84: #{discriminator_face_forward.1} parent=1 // pred_region
      _
    $region85: #{discriminator_face_forward.1} parent=1 // pred_fallthru
      _
    // Predicated region
    $region86: #{discriminator_face_forward.1} parent=1 // pred_check
      _
    $region87: #{discriminator_face_forward.1} parent=1 // pred_check_branch
      %6284 = sbr.rel (0) target = $region89
    $region88: #{discriminator_face_forward.1} parent=1 // pred_region
      _
    $region89: #{discriminator_face_forward.1} parent=1 // pred_fallthru
      _
    %6285 = vsyncpa [#allocation3], 1
    %6286 = vsyncpa [#allocation5], 1
    %6287 = vsyncpa [#allocation8], 1
    %6288 = vsyncpa [#allocation11], 1

</llo_original>
